<compile_context>
chip_gen: v7x
topology: tpu7x:2x2x1
jax: 0.10.0
libtpu: 0.0.40
codegen_flags: <defaults>
</compile_context>

<pallas_src>
import functools

import jax
import jax.numpy as jnp
from jax import lax
from jax.experimental import pallas as pl
from jax.experimental.pallas import tpu as pltpu


def _downsample_unit_kernel(xs_ref, s1_ref, b1_ref, w1_ref, s2_ref, b2_ref,
                            w2_ref, wd_ref, out_ref, padph_ref, padh1_ref,
                            *, bb, H2, W2, Cin_p, Cout_p):
    f32 = jnp.float32
    bf16 = jnp.bfloat16
    M = bb * H2 * W2

    # ---- zero only the pad borders; interiors are fully rewritten below ----
    padph_ref[:, :, :, pl.ds(0, 1), :, :] = jnp.zeros(
        (2, 2, bb, 1, W2 + 1, Cin_p), f32)
    padph_ref[:, :, :, :, pl.ds(0, 1), :] = jnp.zeros(
        (2, 2, bb, H2 + 1, 1, Cin_p), f32)
    padh1_ref[:, pl.ds(0, 1), :, :] = jnp.zeros((bb, 1, W2 + 2, Cout_p), f32)
    padh1_ref[:, pl.ds(H2 + 1, 1), :, :] = jnp.zeros((bb, 1, W2 + 2, Cout_p), f32)
    padh1_ref[:, :, pl.ds(0, 1), :] = jnp.zeros((bb, H2 + 2, 1, Cout_p), f32)
    padh1_ref[:, :, pl.ds(W2 + 1, 1), :] = jnp.zeros((bb, H2 + 2, 1, Cout_p), f32)

    # ---- norm_act: folded BatchNorm + ReLU, per stride-2 spatial phase ----
    s1 = s1_ref[...]
    b1 = b1_ref[...]
    for pr in range(2):
        for pc in range(2):
            x = xs_ref[pr, pc]                                  # (bb, H2, W2, Cin_p)
            a = jnp.maximum(x * s1 + b1, 0.0)
            padph_ref[pr, pc, :, pl.ds(1, H2), pl.ds(1, W2), :] = a

    def phase_patch(pr, pc, r0, c0):
        p = padph_ref[pr, pc, :, pl.ds(r0, H2), pl.ds(c0, W2), :]
        return p.reshape(M, Cin_p).astype(bf16)

    # tap offset (0,1,2) -> (phase index, slice start) in the left/top padded buffer
    TAP = ((1, 0), (0, 1), (1, 1))

    # ---- block.0: 3x3 conv, stride 2, pad 1 -> 9 bf16 MXU matmuls ----
    acc = None
    for kh in range(3):
        pr, r0 = TAP[kh]
        for kw in range(3):
            pc, c0 = TAP[kw]
            t = jnp.dot(phase_patch(pr, pc, r0, c0), w1_ref[kh * 3 + kw],
                        preferred_element_type=f32)
            acc = t if acc is None else acc + t

    # ---- block.1-3: BatchNorm + ReLU (Dropout == identity at inference) ----
    h1 = jnp.maximum(acc * s2_ref[...] + b2_ref[...], 0.0)
    padh1_ref[:, pl.ds(1, H2), pl.ds(1, W2), :] = h1.reshape(bb, H2, W2, Cout_p)

    # ---- downsample: 1x1 conv, stride 2 == phase (0,0) matmul (residual init) ----
    acc2 = jnp.dot(phase_patch(0, 0, 1, 1), wd_ref[...], preferred_element_type=f32)

    # ---- block.4: 3x3 conv, stride 1, pad 1 -> 9 bf16 MXU matmuls ----
    for kh in range(3):
        for kw in range(3):
            p = padh1_ref[:, pl.ds(kh, H2), pl.ds(kw, W2), :]
            p = p.reshape(M, Cout_p).astype(bf16)
            acc2 = acc2 + jnp.dot(p, w2_ref[kh * 3 + kw],
                                  preferred_element_type=f32)

    out_ref[...] = acc2


def _round_up(n, m):
    return ((n + m - 1) // m) * m


def _pick_batch_block(B, H2, W2, target_m=128):
    """Images folded into the matmul M dim per grid step (must divide B)."""
    bb = max(1, min(B, max(1, target_m // (H2 * W2))))
    while B % bb:
        bb -= 1
    return bb


def downsample_unit_forward(x_nchw, params):
    """Forward pass of DownsampleUnit with stride=2 (inference mode)."""
    B, Cin, H, W = x_nchw.shape
    stride = 2
    assert H % stride == 0 and W % stride == 0
    H2, W2 = H // stride, W // stride

    w1, w2, wd = params["w1"], params["w2"], params["wd"]  # HWIO, HWIO, (Cin,Cout)
    Cout = w1.shape[-1]
    eps = params["eps"]

    LANE = 128
    Cin_p, Cout_p = _round_up(Cin, LANE), _round_up(Cout, LANE)
    bb = _pick_batch_block(B, H2, W2)

    # Fold BatchNorm (eval mode) into per-channel scale/bias; pad to lane width.
    s1 = params["gamma1"] / jnp.sqrt(params["var1"] + eps)
    b1 = params["beta1"] - params["mean1"] * s1
    s2 = params["gamma2"] / jnp.sqrt(params["var2"] + eps)
    b2 = params["beta2"] - params["mean2"] * s2
    s1p = jnp.pad(s1, (0, Cin_p - Cin))[None, :].astype(jnp.float32)
    b1p = jnp.pad(b1, (0, Cin_p - Cin))[None, :].astype(jnp.float32)
    s2p = jnp.pad(s2, (0, Cout_p - Cout))[None, :].astype(jnp.float32)
    b2p = jnp.pad(b2, (0, Cout_p - Cout))[None, :].astype(jnp.float32)

    # Per-tap conv weights, channel-padded, bf16 for the MXU (no block-diag).
    w1p = jnp.pad(w1, ((0, 0), (0, 0), (0, Cin_p - Cin), (0, Cout_p - Cout)))
    w1p = w1p.reshape(9, Cin_p, Cout_p).astype(jnp.bfloat16)
    w2p = jnp.pad(w2, ((0, 0), (0, 0), (0, Cout_p - Cout), (0, Cout_p - Cout)))
    w2p = w2p.reshape(9, Cout_p, Cout_p).astype(jnp.bfloat16)
    wdp = jnp.pad(wd, ((0, Cin_p - Cin), (0, Cout_p - Cout))).astype(jnp.bfloat16)

    # NCHW -> NHWC, channel-pad, space-to-depth phase split (layout glue).
    # xs[pr, pc, b, i, j, c] == x[b, 2i+pr, 2j+pc, c]
    # TODO(synk): this split could move into the kernel DMA/index_map layer to
    # avoid the wrapper-side HBM round trip (keep NHWC end-to-end if possible).
    x_nhwc = jnp.transpose(x_nchw, (0, 2, 3, 1)).astype(jnp.float32)
    x_pad = jnp.pad(x_nhwc, ((0, 0), (0, 0), (0, 0), (0, Cin_p - Cin)))
    xs = x_pad.reshape(B, H2, 2, W2, 2, Cin_p).transpose(2, 4, 0, 1, 3, 5)

    kernel = functools.partial(_downsample_unit_kernel, bb=bb, H2=H2, W2=W2,
                               Cin_p=Cin_p, Cout_p=Cout_p)

    M = bb * H2 * W2
    out_flat = pl.pallas_call(
        kernel,
        out_shape=jax.ShapeDtypeStruct((B * H2 * W2, Cout_p), jnp.float32),
        grid=(B // bb,),
        in_specs=[
            pl.BlockSpec((2, 2, bb, H2, W2, Cin_p), lambda i: (0, 0, i, 0, 0, 0)),
            pl.BlockSpec((1, Cin_p), lambda i: (0, 0)),
            pl.BlockSpec((1, Cin_p), lambda i: (0, 0)),
            pl.BlockSpec((9, Cin_p, Cout_p), lambda i: (0, 0, 0)),
            pl.BlockSpec((1, Cout_p), lambda i: (0, 0)),
            pl.BlockSpec((1, Cout_p), lambda i: (0, 0)),
            pl.BlockSpec((9, Cout_p, Cout_p), lambda i: (0, 0, 0)),
            pl.BlockSpec((Cin_p, Cout_p), lambda i: (0, 0)),
        ],
        out_specs=pl.BlockSpec((M, Cout_p), lambda i: (i, 0)),
        scratch_shapes=[
            pltpu.VMEM((2, 2, bb, H2 + 1, W2 + 1, Cin_p), jnp.float32),  # padded phases
            pltpu.VMEM((bb, H2 + 2, W2 + 2, Cout_p), jnp.float32),       # padded conv1 out
        ],
        compiler_params=pltpu.CompilerParams(
            dimension_semantics=("parallel",),
            vmem_limit_bytes=32 * 1024 * 1024,
        ),
    )(xs, s1p, b1p, w1p, s2p, b2p, w2p, wdp)

    # Un-pad channels and return NCHW.
    out = out_flat.reshape(B, H2, W2, Cout_p)[..., :Cout]
    return jnp.transpose(out, (0, 3, 1, 2))


def reference_forward(x, params):
    """Pure-JAX reference (NCHW, eval-mode BN, dropout identity, f32)."""
    eps = params["eps"]

    def bn(y, gamma, beta, mean, var):
        s = gamma / jnp.sqrt(var + eps)
        return y * s[None, :, None, None] + (beta - mean * s)[None, :, None, None]

    dn = ("NCHW", "OIHW", "NCHW")
    a = jax.nn.relu(bn(x, params["gamma1"], params["beta1"],
                       params["mean1"], params["var1"]))
    w1_oihw = jnp.transpose(params["w1"], (3, 2, 0, 1))
    w2_oihw = jnp.transpose(params["w2"], (3, 2, 0, 1))
    wd_oihw = params["wd"].T[:, :, None, None]
    y = lax.conv_general_dilated(a, w1_oihw, (2, 2), ((1, 1), (1, 1)),
                                 dimension_numbers=dn)
    y = jax.nn.relu(bn(y, params["gamma2"], params["beta2"],
                       params["mean2"], params["var2"]))
    y = lax.conv_general_dilated(y, w2_oihw, (1, 1), ((1, 1), (1, 1)),
                                 dimension_numbers=dn)
    d = lax.conv_general_dilated(a, wd_oihw, (2, 2), ((0, 0), (0, 0)),
                                 dimension_numbers=dn)
    return y + d


if __name__ == "__main__":
    B, Cin, Cout, H, W = 2, 4, 8, 16, 16
    key = jax.random.PRNGKey(0)
    kx, k1, k2, kd = jax.random.split(key, 4)

    x = jax.random.normal(kx, (B, Cin, H, W), dtype=jnp.float32)
    params = dict(
        w1=0.1 * jax.random.normal(k1, (3, 3, Cin, Cout), dtype=jnp.float32),
        w2=0.1 * jax.random.normal(k2, (3, 3, Cout, Cout), dtype=jnp.float32),
        wd=0.1 * jax.random.normal(kd, (Cin, Cout), dtype=jnp.float32),
        gamma1=jnp.linspace(0.8, 1.2, Cin, dtype=jnp.float32),
        beta1=jnp.linspace(-0.2, 0.2, Cin, dtype=jnp.float32),
        mean1=jnp.linspace(-0.1, 0.1, Cin, dtype=jnp.float32),
        var1=jnp.linspace(0.5, 1.5, Cin, dtype=jnp.float32),
        gamma2=jnp.linspace(0.9, 1.1, Cout, dtype=jnp.float32),
        beta2=jnp.linspace(-0.1, 0.1, Cout, dtype=jnp.float32),
        mean2=jnp.linspace(-0.05, 0.05, Cout, dtype=jnp.float32),
        var2=jnp.linspace(0.8, 1.2, Cout, dtype=jnp.float32),
        eps=1e-5,
    )

    out = jax.block_until_ready(downsample_unit_forward(x, params))
    ref = jax.block_until_ready(reference_forward(x, params))

    assert out.shape == (B, Cout, H // 2, W // 2)
    # bf16 MXU matmuls (f32 accumulation) vs pure-f32 reference -> looser tolerance.
    if not jnp.allclose(out, ref, atol=5e-2, rtol=5e-2):
        raise ValueError("mismatch vs reference, max abs diff = "
                         f"{float(jnp.max(jnp.abs(out - ref)))}")
    print("KERNEL_OK")
</pallas_src>

<mosaic_0001>
module attributes {stable_mosaic.version = 11 : i64} {
  func.func @_downsample_unit_kernel(%arg0: i32, %arg1: memref<2x2x2x8x8x128xf32, #tpu.memory_space<vmem>>, %arg2: memref<1x128xf32, #tpu.memory_space<vmem>>, %arg3: memref<1x128xf32, #tpu.memory_space<vmem>>, %arg4: memref<9x128x128xbf16, #tpu.memory_space<vmem>>, %arg5: memref<1x128xf32, #tpu.memory_space<vmem>>, %arg6: memref<1x128xf32, #tpu.memory_space<vmem>>, %arg7: memref<9x128x128xbf16, #tpu.memory_space<vmem>>, %arg8: memref<128x128xbf16, #tpu.memory_space<vmem>>, %arg9: memref<128x128xf32, #tpu.memory_space<vmem>>, %arg10: memref<2x2x2x9x9x128xf32, #tpu.memory_space<vmem>>, %arg11: memref<2x10x10x128xf32, #tpu.memory_space<vmem>>) attributes {dimension_semantics = [#tpu.dimension_semantics<parallel>], iteration_bounds = array<i64: 1>, scalar_prefetch = 0 : i64, scratch_operands = 2 : i64, tpu.core_type = #tpu.core_type<tc>, window_params = [{transform_indices = @transform_0, window_bounds = array<i64: 2, 2, 2, 8, 8, 128>}, {pipeline_mode = #tpu.pipeline_mode<synchronous>, transform_indices = @transform_1, window_bounds = array<i64: 1, 128>}, {pipeline_mode = #tpu.pipeline_mode<synchronous>, transform_indices = @transform_2, window_bounds = array<i64: 1, 128>}, {pipeline_mode = #tpu.pipeline_mode<synchronous>, transform_indices = @transform_3, window_bounds = array<i64: 9, 128, 128>}, {pipeline_mode = #tpu.pipeline_mode<synchronous>, transform_indices = @transform_4, window_bounds = array<i64: 1, 128>}, {pipeline_mode = #tpu.pipeline_mode<synchronous>, transform_indices = @transform_5, window_bounds = array<i64: 1, 128>}, {pipeline_mode = #tpu.pipeline_mode<synchronous>, transform_indices = @transform_6, window_bounds = array<i64: 9, 128, 128>}, {pipeline_mode = #tpu.pipeline_mode<synchronous>, transform_indices = @transform_7, window_bounds = array<i64: 128, 128>}, {transform_indices = @transform_8, window_bounds = array<i64: 128, 128>}]} {
    %cst = arith.constant 0.000000e+00 : f32
    %0 = vector.broadcast %cst : f32 to vector<2x2x2x1x9x128xf32>
    %c0 = arith.constant 0 : index
    %c0_0 = arith.constant 0 : index
    %c0_1 = arith.constant 0 : index
    %c0_2 = arith.constant 0 : index
    %c0_3 = arith.constant 0 : index
    %c0_4 = arith.constant 0 : index
    %1 = vector.load %arg10[%c0, %c0_0, %c0_1, %c0_2, %c0_3, %c0_4] : memref<2x2x2x9x9x128xf32, #tpu.memory_space<vmem>>, vector<2x2x2x1x9x128xf32>
    tpu.vector_store %arg10[%c0, %c0_0, %c0_1, %c0_2, %c0_3, %c0_4], %0 {strides = array<i32>} : memref<2x2x2x9x9x128xf32, #tpu.memory_space<vmem>>, vector<2x2x2x1x9x128xf32>,
    %cst_5 = arith.constant 0.000000e+00 : f32
    %2 = vector.broadcast %cst_5 : f32 to vector<2x2x2x9x1x128xf32>
    %c0_6 = arith.constant 0 : index
    %c0_7 = arith.constant 0 : index
    %c0_8 = arith.constant 0 : index
    %c0_9 = arith.constant 0 : index
    %c0_10 = arith.constant 0 : index
    %c0_11 = arith.constant 0 : index
    %3 = vector.load %arg10[%c0_6, %c0_7, %c0_8, %c0_9, %c0_10, %c0_11] : memref<2x2x2x9x9x128xf32, #tpu.memory_space<vmem>>, vector<2x2x2x9x1x128xf32>
    tpu.vector_store %arg10[%c0_6, %c0_7, %c0_8, %c0_9, %c0_10, %c0_11], %2 {strides = array<i32>} : memref<2x2x2x9x9x128xf32, #tpu.memory_space<vmem>>, vector<2x2x2x9x1x128xf32>,
    %cst_12 = arith.constant 0.000000e+00 : f32
    %4 = vector.broadcast %cst_12 : f32 to vector<2x1x10x128xf32>
    %c0_13 = arith.constant 0 : index
    %c0_14 = arith.constant 0 : index
    %c0_15 = arith.constant 0 : index
    %c0_16 = arith.constant 0 : index
    %5 = vector.load %arg11[%c0_13, %c0_14, %c0_15, %c0_16] : memref<2x10x10x128xf32, #tpu.memory_space<vmem>>, vector<2x1x10x128xf32>
    tpu.vector_store %arg11[%c0_13, %c0_14, %c0_15, %c0_16], %4 {strides = array<i32>} : memref<2x10x10x128xf32, #tpu.memory_space<vmem>>, vector<2x1x10x128xf32>,
    %cst_17 = arith.constant 0.000000e+00 : f32
    %6 = vector.broadcast %cst_17 : f32 to vector<2x1x10x128xf32>
    %c0_18 = arith.constant 0 : index
    %c9 = arith.constant 9 : index
    %c0_19 = arith.constant 0 : index
    %c0_20 = arith.constant 0 : index
    %7 = vector.load %arg11[%c0_18, %c9, %c0_19, %c0_20] : memref<2x10x10x128xf32, #tpu.memory_space<vmem>>, vector<2x1x10x128xf32>
    tpu.vector_store %arg11[%c0_18, %c9, %c0_19, %c0_20], %6 {strides = array<i32>} : memref<2x10x10x128xf32, #tpu.memory_space<vmem>>, vector<2x1x10x128xf32>,
    %cst_21 = arith.constant 0.000000e+00 : f32
    %8 = vector.broadcast %cst_21 : f32 to vector<2x10x1x128xf32>
    %c0_22 = arith.constant 0 : index
    %c0_23 = arith.constant 0 : index
    %c0_24 = arith.constant 0 : index
    %c0_25 = arith.constant 0 : index
    %9 = vector.load %arg11[%c0_22, %c0_23, %c0_24, %c0_25] : memref<2x10x10x128xf32, #tpu.memory_space<vmem>>, vector<2x10x1x128xf32>
    tpu.vector_store %arg11[%c0_22, %c0_23, %c0_24, %c0_25], %8 {strides = array<i32>} : memref<2x10x10x128xf32, #tpu.memory_space<vmem>>, vector<2x10x1x128xf32>,
    %cst_26 = arith.constant 0.000000e+00 : f32
    %10 = vector.broadcast %cst_26 : f32 to vector<2x10x1x128xf32>
    %c0_27 = arith.constant 0 : index
    %c0_28 = arith.constant 0 : index
    %c9_29 = arith.constant 9 : index
    %c0_30 = arith.constant 0 : index
    %11 = vector.load %arg11[%c0_27, %c0_28, %c9_29, %c0_30] : memref<2x10x10x128xf32, #tpu.memory_space<vmem>>, vector<2x10x1x128xf32>
    tpu.vector_store %arg11[%c0_27, %c0_28, %c9_29, %c0_30], %10 {strides = array<i32>} : memref<2x10x10x128xf32, #tpu.memory_space<vmem>>, vector<2x10x1x128xf32>,
    %c0_31 = arith.constant 0 : index
    %c0_32 = arith.constant 0 : index
    %12 = vector.load %arg2[%c0_31, %c0_32] : memref<1x128xf32, #tpu.memory_space<vmem>>, vector<1x128xf32>
    %c0_33 = arith.constant 0 : index
    %c0_34 = arith.constant 0 : index
    %13 = vector.load %arg3[%c0_33, %c0_34] : memref<1x128xf32, #tpu.memory_space<vmem>>, vector<1x128xf32>
    %c0_35 = arith.constant 0 : index
    %c0_36 = arith.constant 0 : index
    %c0_37 = arith.constant 0 : index
    %c0_38 = arith.constant 0 : index
    %c0_39 = arith.constant 0 : index
    %c0_40 = arith.constant 0 : index
    %14 = vector.load %arg1[%c0_35, %c0_36, %c0_37, %c0_38, %c0_39, %c0_40] : memref<2x2x2x8x8x128xf32, #tpu.memory_space<vmem>>, vector<1x1x2x8x8x128xf32>
    %15 = vector.shape_cast %14 : vector<1x1x2x8x8x128xf32> to vector<2x8x8x128xf32>
    %16 = vector.shape_cast %12 : vector<1x128xf32> to vector<1x1x1x128xf32>
    %17 = vector.broadcast %16 : vector<1x1x1x128xf32> to vector<2x8x8x128xf32>
    %18 = arith.mulf %15, %17 : vector<2x8x8x128xf32>
    %19 = vector.shape_cast %13 : vector<1x128xf32> to vector<1x1x1x128xf32>
    %20 = vector.broadcast %19 : vector<1x1x1x128xf32> to vector<2x8x8x128xf32>
    %21 = arith.addf %18, %20 : vector<2x8x8x128xf32>
    %cst_41 = arith.constant 0.000000e+00 : f32
    %22 = vector.broadcast %cst_41 : f32 to vector<2x8x8x128xf32>
    %23 = arith.maximumf %21, %22 : vector<2x8x8x128xf32>
    %c0_42 = arith.constant 0 : index
    %c0_43 = arith.constant 0 : index
    %c0_44 = arith.constant 0 : index
    %c1 = arith.constant 1 : index
    %c1_45 = arith.constant 1 : index
    %c0_46 = arith.constant 0 : index
    %24 = vector.load %arg10[%c0_42, %c0_43, %c0_44, %c1, %c1_45, %c0_46] : memref<2x2x2x9x9x128xf32, #tpu.memory_space<vmem>>, vector<1x1x2x8x8x128xf32>
    %25 = vector.shape_cast %24 : vector<1x1x2x8x8x128xf32> to vector<2x8x8x128xf32>
    %26 = vector.shape_cast %23 : vector<2x8x8x128xf32> to vector<1x1x2x8x8x128xf32>
    tpu.vector_store %arg10[%c0_42, %c0_43, %c0_44, %c1, %c1_45, %c0_46], %26 {strides = array<i32>} : memref<2x2x2x9x9x128xf32, #tpu.memory_space<vmem>>, vector<1x1x2x8x8x128xf32>,
    %c0_47 = arith.constant 0 : index
    %c1_48 = arith.constant 1 : index
    %c0_49 = arith.constant 0 : index
    %c0_50 = arith.constant 0 : index
    %c0_51 = arith.constant 0 : index
    %c0_52 = arith.constant 0 : index
    %27 = vector.load %arg1[%c0_47, %c1_48, %c0_49, %c0_50, %c0_51, %c0_52] : memref<2x2x2x8x8x128xf32, #tpu.memory_space<vmem>>, vector<1x1x2x8x8x128xf32>
    %28 = vector.shape_cast %27 : vector<1x1x2x8x8x128xf32> to vector<2x8x8x128xf32>
    %29 = vector.shape_cast %12 : vector<1x128xf32> to vector<1x1x1x128xf32>
    %30 = vector.broadcast %29 : vector<1x1x1x128xf32> to vector<2x8x8x128xf32>
    %31 = arith.mulf %28, %30 : vector<2x8x8x128xf32>
    %32 = vector.shape_cast %13 : vector<1x128xf32> to vector<1x1x1x128xf32>
    %33 = vector.broadcast %32 : vector<1x1x1x128xf32> to vector<2x8x8x128xf32>
    %34 = arith.addf %31, %33 : vector<2x8x8x128xf32>
    %cst_53 = arith.constant 0.000000e+00 : f32
    %35 = vector.broadcast %cst_53 : f32 to vector<2x8x8x128xf32>
    %36 = arith.maximumf %34, %35 : vector<2x8x8x128xf32>
    %c0_54 = arith.constant 0 : index
    %c1_55 = arith.constant 1 : index
    %c0_56 = arith.constant 0 : index
    %c1_57 = arith.constant 1 : index
    %c1_58 = arith.constant 1 : index
    %c0_59 = arith.constant 0 : index
    %37 = vector.load %arg10[%c0_54, %c1_55, %c0_56, %c1_57, %c1_58, %c0_59] : memref<2x2x2x9x9x128xf32, #tpu.memory_space<vmem>>, vector<1x1x2x8x8x128xf32>
    %38 = vector.shape_cast %37 : vector<1x1x2x8x8x128xf32> to vector<2x8x8x128xf32>
    %39 = vector.shape_cast %36 : vector<2x8x8x128xf32> to vector<1x1x2x8x8x128xf32>
    tpu.vector_store %arg10[%c0_54, %c1_55, %c0_56, %c1_57, %c1_58, %c0_59], %39 {strides = array<i32>} : memref<2x2x2x9x9x128xf32, #tpu.memory_space<vmem>>, vector<1x1x2x8x8x128xf32>,
    %c1_60 = arith.constant 1 : index
    %c0_61 = arith.constant 0 : index
    %c0_62 = arith.constant 0 : index
    %c0_63 = arith.constant 0 : index
    %c0_64 = arith.constant 0 : index
    %c0_65 = arith.constant 0 : index
    %40 = vector.load %arg1[%c1_60, %c0_61, %c0_62, %c0_63, %c0_64, %c0_65] : memref<2x2x2x8x8x128xf32, #tpu.memory_space<vmem>>, vector<1x1x2x8x8x128xf32>
    %41 = vector.shape_cast %40 : vector<1x1x2x8x8x128xf32> to vector<2x8x8x128xf32>
    %42 = vector.shape_cast %12 : vector<1x128xf32> to vector<1x1x1x128xf32>
    %43 = vector.broadcast %42 : vector<1x1x1x128xf32> to vector<2x8x8x128xf32>
    %44 = arith.mulf %41, %43 : vector<2x8x8x128xf32>
    %45 = vector.shape_cast %13 : vector<1x128xf32> to vector<1x1x1x128xf32>
    %46 = vector.broadcast %45 : vector<1x1x1x128xf32> to vector<2x8x8x128xf32>
    %47 = arith.addf %44, %46 : vector<2x8x8x128xf32>
    %cst_66 = arith.constant 0.000000e+00 : f32
    %48 = vector.broadcast %cst_66 : f32 to vector<2x8x8x128xf32>
    %49 = arith.maximumf %47, %48 : vector<2x8x8x128xf32>
    %c1_67 = arith.constant 1 : index
    %c0_68 = arith.constant 0 : index
    %c0_69 = arith.constant 0 : index
    %c1_70 = arith.constant 1 : index
    %c1_71 = arith.constant 1 : index
    %c0_72 = arith.constant 0 : index
    %50 = vector.load %arg10[%c1_67, %c0_68, %c0_69, %c1_70, %c1_71, %c0_72] : memref<2x2x2x9x9x128xf32, #tpu.memory_space<vmem>>, vector<1x1x2x8x8x128xf32>
    %51 = vector.shape_cast %50 : vector<1x1x2x8x8x128xf32> to vector<2x8x8x128xf32>
    %52 = vector.shape_cast %49 : vector<2x8x8x128xf32> to vector<1x1x2x8x8x128xf32>
    tpu.vector_store %arg10[%c1_67, %c0_68, %c0_69, %c1_70, %c1_71, %c0_72], %52 {strides = array<i32>} : memref<2x2x2x9x9x128xf32, #tpu.memory_space<vmem>>, vector<1x1x2x8x8x128xf32>,
    %c1_73 = arith.constant 1 : index
    %c1_74 = arith.constant 1 : index
    %c0_75 = arith.constant 0 : index
    %c0_76 = arith.constant 0 : index
    %c0_77 = arith.constant 0 : index
    %c0_78 = arith.constant 0 : index
    %53 = vector.load %arg1[%c1_73, %c1_74, %c0_75, %c0_76, %c0_77, %c0_78] : memref<2x2x2x8x8x128xf32, #tpu.memory_space<vmem>>, vector<1x1x2x8x8x128xf32>
    %54 = vector.shape_cast %53 : vector<1x1x2x8x8x128xf32> to vector<2x8x8x128xf32>
    %55 = vector.shape_cast %12 : vector<1x128xf32> to vector<1x1x1x128xf32>
    %56 = vector.broadcast %55 : vector<1x1x1x128xf32> to vector<2x8x8x128xf32>
    %57 = arith.mulf %54, %56 : vector<2x8x8x128xf32>
    %58 = vector.shape_cast %13 : vector<1x128xf32> to vector<1x1x1x128xf32>
    %59 = vector.broadcast %58 : vector<1x1x1x128xf32> to vector<2x8x8x128xf32>
    %60 = arith.addf %57, %59 : vector<2x8x8x128xf32>
    %cst_79 = arith.constant 0.000000e+00 : f32
    %61 = vector.broadcast %cst_79 : f32 to vector<2x8x8x128xf32>
    %62 = arith.maximumf %60, %61 : vector<2x8x8x128xf32>
    %c1_80 = arith.constant 1 : index
    %c1_81 = arith.constant 1 : index
    %c0_82 = arith.constant 0 : index
    %c1_83 = arith.constant 1 : index
    %c1_84 = arith.constant 1 : index
    %c0_85 = arith.constant 0 : index
    %63 = vector.load %arg10[%c1_80, %c1_81, %c0_82, %c1_83, %c1_84, %c0_85] : memref<2x2x2x9x9x128xf32, #tpu.memory_space<vmem>>, vector<1x1x2x8x8x128xf32>
    %64 = vector.shape_cast %63 : vector<1x1x2x8x8x128xf32> to vector<2x8x8x128xf32>
    %65 = vector.shape_cast %62 : vector<2x8x8x128xf32> to vector<1x1x2x8x8x128xf32>
    tpu.vector_store %arg10[%c1_80, %c1_81, %c0_82, %c1_83, %c1_84, %c0_85], %65 {strides = array<i32>} : memref<2x2x2x9x9x128xf32, #tpu.memory_space<vmem>>, vector<1x1x2x8x8x128xf32>,
    %c1_86 = arith.constant 1 : index
    %c1_87 = arith.constant 1 : index
    %c0_88 = arith.constant 0 : index
    %c0_89 = arith.constant 0 : index
    %c0_90 = arith.constant 0 : index
    %c0_91 = arith.constant 0 : index
    %66 = vector.load %arg10[%c1_86, %c1_87, %c0_88, %c0_89, %c0_90, %c0_91] : memref<2x2x2x9x9x128xf32, #tpu.memory_space<vmem>>, vector<1x1x2x8x8x128xf32>
    %67 = vector.shape_cast %66 : vector<1x1x2x8x8x128xf32> to vector<2x8x8x128xf32>
    %68 = vector.shape_cast %67 : vector<2x8x8x128xf32> to vector<128x128xf32>
    %69 = arith.truncf %68 : vector<128x128xf32> to vector<128x128xbf16>
    %c0_92 = arith.constant 0 : index
    %c0_93 = arith.constant 0 : index
    %c0_94 = arith.constant 0 : index
    %70 = vector.load %arg4[%c0_92, %c0_93, %c0_94] : memref<9x128x128xbf16, #tpu.memory_space<vmem>>, vector<1x128x128xbf16>
    %71 = vector.shape_cast %70 : vector<1x128x128xbf16> to vector<128x128xbf16>
    %cst_95 = arith.constant dense<0.000000e+00> : vector<128x128xf32>
    %72 = tpu.matmul %69, %71, %cst_95 {dimension_numbers = #tpu.dot_dimension_numbers<[1], [0], [0], [1], [0, 0, 1, 1], [], []>} : vector<128x128xbf16>, vector<128x128xbf16>, vector<128x128xf32> -> vector<128x128xf32>
    %c1_96 = arith.constant 1 : index
    %c0_97 = arith.constant 0 : index
    %c0_98 = arith.constant 0 : index
    %c0_99 = arith.constant 0 : index
    %c1_100 = arith.constant 1 : index
    %c0_101 = arith.constant 0 : index
    %73 = vector.load %arg10[%c1_96, %c0_97, %c0_98, %c0_99, %c1_100, %c0_101] : memref<2x2x2x9x9x128xf32, #tpu.memory_space<vmem>>, vector<1x1x2x8x8x128xf32>
    %74 = vector.shape_cast %73 : vector<1x1x2x8x8x128xf32> to vector<2x8x8x128xf32>
    %75 = vector.shape_cast %74 : vector<2x8x8x128xf32> to vector<128x128xf32>
    %76 = arith.truncf %75 : vector<128x128xf32> to vector<128x128xbf16>
    %c1_102 = arith.constant 1 : index
    %c0_103 = arith.constant 0 : index
    %c0_104 = arith.constant 0 : index
    %77 = vector.load %arg4[%c1_102, %c0_103, %c0_104] : memref<9x128x128xbf16, #tpu.memory_space<vmem>>, vector<1x128x128xbf16>
    %78 = vector.shape_cast %77 : vector<1x128x128xbf16> to vector<128x128xbf16>
    %cst_105 = arith.constant dense<0.000000e+00> : vector<128x128xf32>
    %79 = tpu.matmul %76, %78, %cst_105 {dimension_numbers = #tpu.dot_dimension_numbers<[1], [0], [0], [1], [0, 0, 1, 1], [], []>} : vector<128x128xbf16>, vector<128x128xbf16>, vector<128x128xf32> -> vector<128x128xf32>
    %80 = arith.addf %72, %79 : vector<128x128xf32>
    %c1_106 = arith.constant 1 : index
    %c1_107 = arith.constant 1 : index
    %c0_108 = arith.constant 0 : index
    %c0_109 = arith.constant 0 : index
    %c1_110 = arith.constant 1 : index
    %c0_111 = arith.constant 0 : index
    %81 = vector.load %arg10[%c1_106, %c1_107, %c0_108, %c0_109, %c1_110, %c0_111] : memref<2x2x2x9x9x128xf32, #tpu.memory_space<vmem>>, vector<1x1x2x8x8x128xf32>
    %82 = vector.shape_cast %81 : vector<1x1x2x8x8x128xf32> to vector<2x8x8x128xf32>
    %83 = vector.shape_cast %82 : vector<2x8x8x128xf32> to vector<128x128xf32>
    %84 = arith.truncf %83 : vector<128x128xf32> to vector<128x128xbf16>
    %c2 = arith.constant 2 : index
    %c0_112 = arith.constant 0 : index
    %c0_113 = arith.constant 0 : index
    %85 = vector.load %arg4[%c2, %c0_112, %c0_113] : memref<9x128x128xbf16, #tpu.memory_space<vmem>>, vector<1x128x128xbf16>
    %86 = vector.shape_cast %85 : vector<1x128x128xbf16> to vector<128x128xbf16>
    %cst_114 = arith.constant dense<0.000000e+00> : vector<128x128xf32>
    %87 = tpu.matmul %84, %86, %cst_114 {dimension_numbers = #tpu.dot_dimension_numbers<[1], [0], [0], [1], [0, 0, 1, 1], [], []>} : vector<128x128xbf16>, vector<128x128xbf16>, vector<128x128xf32> -> vector<128x128xf32>
    %88 = arith.addf %80, %87 : vector<128x128xf32>
    %c0_115 = arith.constant 0 : index
    %c1_116 = arith.constant 1 : index
    %c0_117 = arith.constant 0 : index
    %c1_118 = arith.constant 1 : index
    %c0_119 = arith.constant 0 : index
    %c0_120 = arith.constant 0 : index
    %89 = vector.load %arg10[%c0_115, %c1_116, %c0_117, %c1_118, %c0_119, %c0_120] : memref<2x2x2x9x9x128xf32, #tpu.memory_space<vmem>>, vector<1x1x2x8x8x128xf32>
    %90 = vector.shape_cast %89 : vector<1x1x2x8x8x128xf32> to vector<2x8x8x128xf32>
    %91 = vector.shape_cast %90 : vector<2x8x8x128xf32> to vector<128x128xf32>
    %92 = arith.truncf %91 : vector<128x128xf32> to vector<128x128xbf16>
    %c3 = arith.constant 3 : index
    %c0_121 = arith.constant 0 : index
    %c0_122 = arith.constant 0 : index
    %93 = vector.load %arg4[%c3, %c0_121, %c0_122] : memref<9x128x128xbf16, #tpu.memory_space<vmem>>, vector<1x128x128xbf16>
    %94 = vector.shape_cast %93 : vector<1x128x128xbf16> to vector<128x128xbf16>
    %cst_123 = arith.constant dense<0.000000e+00> : vector<128x128xf32>
    %95 = tpu.matmul %92, %94, %cst_123 {dimension_numbers = #tpu.dot_dimension_numbers<[1], [0], [0], [1], [0, 0, 1, 1], [], []>} : vector<128x128xbf16>, vector<128x128xbf16>, vector<128x128xf32> -> vector<128x128xf32>
    %96 = arith.addf %88, %95 : vector<128x128xf32>
    %c0_124 = arith.constant 0 : index
    %c0_125 = arith.constant 0 : index
    %c0_126 = arith.constant 0 : index
    %c1_127 = arith.constant 1 : index
    %c1_128 = arith.constant 1 : index
    %c0_129 = arith.constant 0 : index
    %97 = vector.load %arg10[%c0_124, %c0_125, %c0_126, %c1_127, %c1_128, %c0_129] : memref<2x2x2x9x9x128xf32, #tpu.memory_space<vmem>>, vector<1x1x2x8x8x128xf32>
    %98 = vector.shape_cast %97 : vector<1x1x2x8x8x128xf32> to vector<2x8x8x128xf32>
    %99 = vector.shape_cast %98 : vector<2x8x8x128xf32> to vector<128x128xf32>
    %100 = arith.truncf %99 : vector<128x128xf32> to vector<128x128xbf16>
    %c4 = arith.constant 4 : index
    %c0_130 = arith.constant 0 : index
    %c0_131 = arith.constant 0 : index
    %101 = vector.load %arg4[%c4, %c0_130, %c0_131] : memref<9x128x128xbf16, #tpu.memory_space<vmem>>, vector<1x128x128xbf16>
    %102 = vector.shape_cast %101 : vector<1x128x128xbf16> to vector<128x128xbf16>
    %cst_132 = arith.constant dense<0.000000e+00> : vector<128x128xf32>
    %103 = tpu.matmul %100, %102, %cst_132 {dimension_numbers = #tpu.dot_dimension_numbers<[1], [0], [0], [1], [0, 0, 1, 1], [], []>} : vector<128x128xbf16>, vector<128x128xbf16>, vector<128x128xf32> -> vector<128x128xf32>
    %104 = arith.addf %96, %103 : vector<128x128xf32>
    %c0_133 = arith.constant 0 : index
    %c1_134 = arith.constant 1 : index
    %c0_135 = arith.constant 0 : index
    %c1_136 = arith.constant 1 : index
    %c1_137 = arith.constant 1 : index
    %c0_138 = arith.constant 0 : index
    %105 = vector.load %arg10[%c0_133, %c1_134, %c0_135, %c1_136, %c1_137, %c0_138] : memref<2x2x2x9x9x128xf32, #tpu.memory_space<vmem>>, vector<1x1x2x8x8x128xf32>
    %106 = vector.shape_cast %105 : vector<1x1x2x8x8x128xf32> to vector<2x8x8x128xf32>
    %107 = vector.shape_cast %106 : vector<2x8x8x128xf32> to vector<128x128xf32>
    %108 = arith.truncf %107 : vector<128x128xf32> to vector<128x128xbf16>
    %c5 = arith.constant 5 : index
    %c0_139 = arith.constant 0 : index
    %c0_140 = arith.constant 0 : index
    %109 = vector.load %arg4[%c5, %c0_139, %c0_140] : memref<9x128x128xbf16, #tpu.memory_space<vmem>>, vector<1x128x128xbf16>
    %110 = vector.shape_cast %109 : vector<1x128x128xbf16> to vector<128x128xbf16>
    %cst_141 = arith.constant dense<0.000000e+00> : vector<128x128xf32>
    %111 = tpu.matmul %108, %110, %cst_141 {dimension_numbers = #tpu.dot_dimension_numbers<[1], [0], [0], [1], [0, 0, 1, 1], [], []>} : vector<128x128xbf16>, vector<128x128xbf16>, vector<128x128xf32> -> vector<128x128xf32>
    %112 = arith.addf %104, %111 : vector<128x128xf32>
    %c1_142 = arith.constant 1 : index
    %c1_143 = arith.constant 1 : index
    %c0_144 = arith.constant 0 : index
    %c1_145 = arith.constant 1 : index
    %c0_146 = arith.constant 0 : index
    %c0_147 = arith.constant 0 : index
    %113 = vector.load %arg10[%c1_142, %c1_143, %c0_144, %c1_145, %c0_146, %c0_147] : memref<2x2x2x9x9x128xf32, #tpu.memory_space<vmem>>, vector<1x1x2x8x8x128xf32>
    %114 = vector.shape_cast %113 : vector<1x1x2x8x8x128xf32> to vector<2x8x8x128xf32>
    %115 = vector.shape_cast %114 : vector<2x8x8x128xf32> to vector<128x128xf32>
    %116 = arith.truncf %115 : vector<128x128xf32> to vector<128x128xbf16>
    %c6 = arith.constant 6 : index
    %c0_148 = arith.constant 0 : index
    %c0_149 = arith.constant 0 : index
    %117 = vector.load %arg4[%c6, %c0_148, %c0_149] : memref<9x128x128xbf16, #tpu.memory_space<vmem>>, vector<1x128x128xbf16>
    %118 = vector.shape_cast %117 : vector<1x128x128xbf16> to vector<128x128xbf16>
    %cst_150 = arith.constant dense<0.000000e+00> : vector<128x128xf32>
    %119 = tpu.matmul %116, %118, %cst_150 {dimension_numbers = #tpu.dot_dimension_numbers<[1], [0], [0], [1], [0, 0, 1, 1], [], []>} : vector<128x128xbf16>, vector<128x128xbf16>, vector<128x128xf32> -> vector<128x128xf32>
    %120 = arith.addf %112, %119 : vector<128x128xf32>
    %c1_151 = arith.constant 1 : index
    %c0_152 = arith.constant 0 : index
    %c0_153 = arith.constant 0 : index
    %c1_154 = arith.constant 1 : index
    %c1_155 = arith.constant 1 : index
    %c0_156 = arith.constant 0 : index
    %121 = vector.load %arg10[%c1_151, %c0_152, %c0_153, %c1_154, %c1_155, %c0_156] : memref<2x2x2x9x9x128xf32, #tpu.memory_space<vmem>>, vector<1x1x2x8x8x128xf32>
    %122 = vector.shape_cast %121 : vector<1x1x2x8x8x128xf32> to vector<2x8x8x128xf32>
    %123 = vector.shape_cast %122 : vector<2x8x8x128xf32> to vector<128x128xf32>
    %124 = arith.truncf %123 : vector<128x128xf32> to vector<128x128xbf16>
    %c7 = arith.constant 7 : index
    %c0_157 = arith.constant 0 : index
    %c0_158 = arith.constant 0 : index
    %125 = vector.load %arg4[%c7, %c0_157, %c0_158] : memref<9x128x128xbf16, #tpu.memory_space<vmem>>, vector<1x128x128xbf16>
    %126 = vector.shape_cast %125 : vector<1x128x128xbf16> to vector<128x128xbf16>
    %cst_159 = arith.constant dense<0.000000e+00> : vector<128x128xf32>
    %127 = tpu.matmul %124, %126, %cst_159 {dimension_numbers = #tpu.dot_dimension_numbers<[1], [0], [0], [1], [0, 0, 1, 1], [], []>} : vector<128x128xbf16>, vector<128x128xbf16>, vector<128x128xf32> -> vector<128x128xf32>
    %128 = arith.addf %120, %127 : vector<128x128xf32>
    %c1_160 = arith.constant 1 : index
    %c1_161 = arith.constant 1 : index
    %c0_162 = arith.constant 0 : index
    %c1_163 = arith.constant 1 : index
    %c1_164 = arith.constant 1 : index
    %c0_165 = arith.constant 0 : index
    %129 = vector.load %arg10[%c1_160, %c1_161, %c0_162, %c1_163, %c1_164, %c0_165] : memref<2x2x2x9x9x128xf32, #tpu.memory_space<vmem>>, vector<1x1x2x8x8x128xf32>
    %130 = vector.shape_cast %129 : vector<1x1x2x8x8x128xf32> to vector<2x8x8x128xf32>
    %131 = vector.shape_cast %130 : vector<2x8x8x128xf32> to vector<128x128xf32>
    %132 = arith.truncf %131 : vector<128x128xf32> to vector<128x128xbf16>
    %c8 = arith.constant 8 : index
    %c0_166 = arith.constant 0 : index
    %c0_167 = arith.constant 0 : index
    %133 = vector.load %arg4[%c8, %c0_166, %c0_167] : memref<9x128x128xbf16, #tpu.memory_space<vmem>>, vector<1x128x128xbf16>
    %134 = vector.shape_cast %133 : vector<1x128x128xbf16> to vector<128x128xbf16>
    %cst_168 = arith.constant dense<0.000000e+00> : vector<128x128xf32>
    %135 = tpu.matmul %132, %134, %cst_168 {dimension_numbers = #tpu.dot_dimension_numbers<[1], [0], [0], [1], [0, 0, 1, 1], [], []>} : vector<128x128xbf16>, vector<128x128xbf16>, vector<128x128xf32> -> vector<128x128xf32>
    %136 = arith.addf %128, %135 : vector<128x128xf32>
    %c0_169 = arith.constant 0 : index
    %c0_170 = arith.constant 0 : index
    %137 = vector.load %arg5[%c0_169, %c0_170] : memref<1x128xf32, #tpu.memory_space<vmem>>, vector<1x128xf32>
    %138 = vector.broadcast %137 : vector<1x128xf32> to vector<128x128xf32>
    %139 = arith.mulf %136, %138 : vector<128x128xf32>
    %c0_171 = arith.constant 0 : index
    %c0_172 = arith.constant 0 : index
    %140 = vector.load %arg6[%c0_171, %c0_172] : memref<1x128xf32, #tpu.memory_space<vmem>>, vector<1x128xf32>
    %141 = vector.broadcast %140 : vector<1x128xf32> to vector<128x128xf32>
    %142 = arith.addf %139, %141 : vector<128x128xf32>
    %cst_173 = arith.constant 0.000000e+00 : f32
    %143 = vector.broadcast %cst_173 : f32 to vector<128x128xf32>
    %144 = arith.maximumf %142, %143 : vector<128x128xf32>
    %145 = vector.shape_cast %144 : vector<128x128xf32> to vector<2x8x8x128xf32>
    %c0_174 = arith.constant 0 : index
    %c1_175 = arith.constant 1 : index
    %c1_176 = arith.constant 1 : index
    %c0_177 = arith.constant 0 : index
    %146 = vector.load %arg11[%c0_174, %c1_175, %c1_176, %c0_177] : memref<2x10x10x128xf32, #tpu.memory_space<vmem>>, vector<2x8x8x128xf32>
    tpu.vector_store %arg11[%c0_174, %c1_175, %c1_176, %c0_177], %145 {strides = array<i32>} : memref<2x10x10x128xf32, #tpu.memory_space<vmem>>, vector<2x8x8x128xf32>,
    %c0_178 = arith.constant 0 : index
    %c0_179 = arith.constant 0 : index
    %c0_180 = arith.constant 0 : index
    %c1_181 = arith.constant 1 : index
    %c1_182 = arith.constant 1 : index
    %c0_183 = arith.constant 0 : index
    %147 = vector.load %arg10[%c0_178, %c0_179, %c0_180, %c1_181, %c1_182, %c0_183] : memref<2x2x2x9x9x128xf32, #tpu.memory_space<vmem>>, vector<1x1x2x8x8x128xf32>
    %148 = vector.shape_cast %147 : vector<1x1x2x8x8x128xf32> to vector<2x8x8x128xf32>
    %149 = vector.shape_cast %148 : vector<2x8x8x128xf32> to vector<128x128xf32>
    %150 = arith.truncf %149 : vector<128x128xf32> to vector<128x128xbf16>
    %c0_184 = arith.constant 0 : index
    %c0_185 = arith.constant 0 : index
    %151 = vector.load %arg8[%c0_184, %c0_185] : memref<128x128xbf16, #tpu.memory_space<vmem>>, vector<128x128xbf16>
    %cst_186 = arith.constant dense<0.000000e+00> : vector<128x128xf32>
    %152 = tpu.matmul %150, %151, %cst_186 {dimension_numbers = #tpu.dot_dimension_numbers<[1], [0], [0], [1], [0, 0, 1, 1], [], []>} : vector<128x128xbf16>, vector<128x128xbf16>, vector<128x128xf32> -> vector<128x128xf32>
    %c0_187 = arith.constant 0 : index
    %c0_188 = arith.constant 0 : index
    %c0_189 = arith.constant 0 : index
    %c0_190 = arith.constant 0 : index
    %153 = vector.load %arg11[%c0_187, %c0_188, %c0_189, %c0_190] : memref<2x10x10x128xf32, #tpu.memory_space<vmem>>, vector<2x8x8x128xf32>
    %154 = vector.shape_cast %153 : vector<2x8x8x128xf32> to vector<128x128xf32>
    %155 = arith.truncf %154 : vector<128x128xf32> to vector<128x128xbf16>
    %c0_191 = arith.constant 0 : index
    %c0_192 = arith.constant 0 : index
    %c0_193 = arith.constant 0 : index
    %156 = vector.load %arg7[%c0_191, %c0_192, %c0_193] : memref<9x128x128xbf16, #tpu.memory_space<vmem>>, vector<1x128x128xbf16>
    %157 = vector.shape_cast %156 : vector<1x128x128xbf16> to vector<128x128xbf16>
    %cst_194 = arith.constant dense<0.000000e+00> : vector<128x128xf32>
    %158 = tpu.matmul %155, %157, %cst_194 {dimension_numbers = #tpu.dot_dimension_numbers<[1], [0], [0], [1], [0, 0, 1, 1], [], []>} : vector<128x128xbf16>, vector<128x128xbf16>, vector<128x128xf32> -> vector<128x128xf32>
    %159 = arith.addf %152, %158 : vector<128x128xf32>
    %c0_195 = arith.constant 0 : index
    %c0_196 = arith.constant 0 : index
    %c1_197 = arith.constant 1 : index
    %c0_198 = arith.constant 0 : index
    %160 = vector.load %arg11[%c0_195, %c0_196, %c1_197, %c0_198] : memref<2x10x10x128xf32, #tpu.memory_space<vmem>>, vector<2x8x8x128xf32>
    %161 = vector.shape_cast %160 : vector<2x8x8x128xf32> to vector<128x128xf32>
    %162 = arith.truncf %161 : vector<128x128xf32> to vector<128x128xbf16>
    %c1_199 = arith.constant 1 : index
    %c0_200 = arith.constant 0 : index
    %c0_201 = arith.constant 0 : index
    %163 = vector.load %arg7[%c1_199, %c0_200, %c0_201] : memref<9x128x128xbf16, #tpu.memory_space<vmem>>, vector<1x128x128xbf16>
    %164 = vector.shape_cast %163 : vector<1x128x128xbf16> to vector<128x128xbf16>
    %cst_202 = arith.constant dense<0.000000e+00> : vector<128x128xf32>
    %165 = tpu.matmul %162, %164, %cst_202 {dimension_numbers = #tpu.dot_dimension_numbers<[1], [0], [0], [1], [0, 0, 1, 1], [], []>} : vector<128x128xbf16>, vector<128x128xbf16>, vector<128x128xf32> -> vector<128x128xf32>
    %166 = arith.addf %159, %165 : vector<128x128xf32>
    %c0_203 = arith.constant 0 : index
    %c0_204 = arith.constant 0 : index
    %c2_205 = arith.constant 2 : index
    %c0_206 = arith.constant 0 : index
    %167 = vector.load %arg11[%c0_203, %c0_204, %c2_205, %c0_206] : memref<2x10x10x128xf32, #tpu.memory_space<vmem>>, vector<2x8x8x128xf32>
    %168 = vector.shape_cast %167 : vector<2x8x8x128xf32> to vector<128x128xf32>
    %169 = arith.truncf %168 : vector<128x128xf32> to vector<128x128xbf16>
    %c2_207 = arith.constant 2 : index
    %c0_208 = arith.constant 0 : index
    %c0_209 = arith.constant 0 : index
    %170 = vector.load %arg7[%c2_207, %c0_208, %c0_209] : memref<9x128x128xbf16, #tpu.memory_space<vmem>>, vector<1x128x128xbf16>
    %171 = vector.shape_cast %170 : vector<1x128x128xbf16> to vector<128x128xbf16>
    %cst_210 = arith.constant dense<0.000000e+00> : vector<128x128xf32>
    %172 = tpu.matmul %169, %171, %cst_210 {dimension_numbers = #tpu.dot_dimension_numbers<[1], [0], [0], [1], [0, 0, 1, 1], [], []>} : vector<128x128xbf16>, vector<128x128xbf16>, vector<128x128xf32> -> vector<128x128xf32>
    %173 = arith.addf %166, %172 : vector<128x128xf32>
    %c0_211 = arith.constant 0 : index
    %c1_212 = arith.constant 1 : index
    %c0_213 = arith.constant 0 : index
    %c0_214 = arith.constant 0 : index
    %174 = vector.load %arg11[%c0_211, %c1_212, %c0_213, %c0_214] : memref<2x10x10x128xf32, #tpu.memory_space<vmem>>, vector<2x8x8x128xf32>
    %175 = vector.shape_cast %174 : vector<2x8x8x128xf32> to vector<128x128xf32>
    %176 = arith.truncf %175 : vector<128x128xf32> to vector<128x128xbf16>
    %c3_215 = arith.constant 3 : index
    %c0_216 = arith.constant 0 : index
    %c0_217 = arith.constant 0 : index
    %177 = vector.load %arg7[%c3_215, %c0_216, %c0_217] : memref<9x128x128xbf16, #tpu.memory_space<vmem>>, vector<1x128x128xbf16>
    %178 = vector.shape_cast %177 : vector<1x128x128xbf16> to vector<128x128xbf16>
    %cst_218 = arith.constant dense<0.000000e+00> : vector<128x128xf32>
    %179 = tpu.matmul %176, %178, %cst_218 {dimension_numbers = #tpu.dot_dimension_numbers<[1], [0], [0], [1], [0, 0, 1, 1], [], []>} : vector<128x128xbf16>, vector<128x128xbf16>, vector<128x128xf32> -> vector<128x128xf32>
    %180 = arith.addf %173, %179 : vector<128x128xf32>
    %c0_219 = arith.constant 0 : index
    %c1_220 = arith.constant 1 : index
    %c1_221 = arith.constant 1 : index
    %c0_222 = arith.constant 0 : index
    %181 = vector.load %arg11[%c0_219, %c1_220, %c1_221, %c0_222] : memref<2x10x10x128xf32, #tpu.memory_space<vmem>>, vector<2x8x8x128xf32>
    %182 = vector.shape_cast %181 : vector<2x8x8x128xf32> to vector<128x128xf32>
    %183 = arith.truncf %182 : vector<128x128xf32> to vector<128x128xbf16>
    %c4_223 = arith.constant 4 : index
    %c0_224 = arith.constant 0 : index
    %c0_225 = arith.constant 0 : index
    %184 = vector.load %arg7[%c4_223, %c0_224, %c0_225] : memref<9x128x128xbf16, #tpu.memory_space<vmem>>, vector<1x128x128xbf16>
    %185 = vector.shape_cast %184 : vector<1x128x128xbf16> to vector<128x128xbf16>
    %cst_226 = arith.constant dense<0.000000e+00> : vector<128x128xf32>
    %186 = tpu.matmul %183, %185, %cst_226 {dimension_numbers = #tpu.dot_dimension_numbers<[1], [0], [0], [1], [0, 0, 1, 1], [], []>} : vector<128x128xbf16>, vector<128x128xbf16>, vector<128x128xf32> -> vector<128x128xf32>
    %187 = arith.addf %180, %186 : vector<128x128xf32>
    %c0_227 = arith.constant 0 : index
    %c1_228 = arith.constant 1 : index
    %c2_229 = arith.constant 2 : index
    %c0_230 = arith.constant 0 : index
    %188 = vector.load %arg11[%c0_227, %c1_228, %c2_229, %c0_230] : memref<2x10x10x128xf32, #tpu.memory_space<vmem>>, vector<2x8x8x128xf32>
    %189 = vector.shape_cast %188 : vector<2x8x8x128xf32> to vector<128x128xf32>
    %190 = arith.truncf %189 : vector<128x128xf32> to vector<128x128xbf16>
    %c5_231 = arith.constant 5 : index
    %c0_232 = arith.constant 0 : index
    %c0_233 = arith.constant 0 : index
    %191 = vector.load %arg7[%c5_231, %c0_232, %c0_233] : memref<9x128x128xbf16, #tpu.memory_space<vmem>>, vector<1x128x128xbf16>
    %192 = vector.shape_cast %191 : vector<1x128x128xbf16> to vector<128x128xbf16>
    %cst_234 = arith.constant dense<0.000000e+00> : vector<128x128xf32>
    %193 = tpu.matmul %190, %192, %cst_234 {dimension_numbers = #tpu.dot_dimension_numbers<[1], [0], [0], [1], [0, 0, 1, 1], [], []>} : vector<128x128xbf16>, vector<128x128xbf16>, vector<128x128xf32> -> vector<128x128xf32>
    %194 = arith.addf %187, %193 : vector<128x128xf32>
    %c0_235 = arith.constant 0 : index
    %c2_236 = arith.constant 2 : index
    %c0_237 = arith.constant 0 : index
    %c0_238 = arith.constant 0 : index
    %195 = vector.load %arg11[%c0_235, %c2_236, %c0_237, %c0_238] : memref<2x10x10x128xf32, #tpu.memory_space<vmem>>, vector<2x8x8x128xf32>
    %196 = vector.shape_cast %195 : vector<2x8x8x128xf32> to vector<128x128xf32>
    %197 = arith.truncf %196 : vector<128x128xf32> to vector<128x128xbf16>
    %c6_239 = arith.constant 6 : index
    %c0_240 = arith.constant 0 : index
    %c0_241 = arith.constant 0 : index
    %198 = vector.load %arg7[%c6_239, %c0_240, %c0_241] : memref<9x128x128xbf16, #tpu.memory_space<vmem>>, vector<1x128x128xbf16>
    %199 = vector.shape_cast %198 : vector<1x128x128xbf16> to vector<128x128xbf16>
    %cst_242 = arith.constant dense<0.000000e+00> : vector<128x128xf32>
    %200 = tpu.matmul %197, %199, %cst_242 {dimension_numbers = #tpu.dot_dimension_numbers<[1], [0], [0], [1], [0, 0, 1, 1], [], []>} : vector<128x128xbf16>, vector<128x128xbf16>, vector<128x128xf32> -> vector<128x128xf32>
    %201 = arith.addf %194, %200 : vector<128x128xf32>
    %c0_243 = arith.constant 0 : index
    %c2_244 = arith.constant 2 : index
    %c1_245 = arith.constant 1 : index
    %c0_246 = arith.constant 0 : index
    %202 = vector.load %arg11[%c0_243, %c2_244, %c1_245, %c0_246] : memref<2x10x10x128xf32, #tpu.memory_space<vmem>>, vector<2x8x8x128xf32>
    %203 = vector.shape_cast %202 : vector<2x8x8x128xf32> to vector<128x128xf32>
    %204 = arith.truncf %203 : vector<128x128xf32> to vector<128x128xbf16>
    %c7_247 = arith.constant 7 : index
    %c0_248 = arith.constant 0 : index
    %c0_249 = arith.constant 0 : index
    %205 = vector.load %arg7[%c7_247, %c0_248, %c0_249] : memref<9x128x128xbf16, #tpu.memory_space<vmem>>, vector<1x128x128xbf16>
    %206 = vector.shape_cast %205 : vector<1x128x128xbf16> to vector<128x128xbf16>
    %cst_250 = arith.constant dense<0.000000e+00> : vector<128x128xf32>
    %207 = tpu.matmul %204, %206, %cst_250 {dimension_numbers = #tpu.dot_dimension_numbers<[1], [0], [0], [1], [0, 0, 1, 1], [], []>} : vector<128x128xbf16>, vector<128x128xbf16>, vector<128x128xf32> -> vector<128x128xf32>
    %208 = arith.addf %201, %207 : vector<128x128xf32>
    %c0_251 = arith.constant 0 : index
    %c2_252 = arith.constant 2 : index
    %c2_253 = arith.constant 2 : index
    %c0_254 = arith.constant 0 : index
    %209 = vector.load %arg11[%c0_251, %c2_252, %c2_253, %c0_254] : memref<2x10x10x128xf32, #tpu.memory_space<vmem>>, vector<2x8x8x128xf32>
    %210 = vector.shape_cast %209 : vector<2x8x8x128xf32> to vector<128x128xf32>
    %211 = arith.truncf %210 : vector<128x128xf32> to vector<128x128xbf16>
    %c8_255 = arith.constant 8 : index
    %c0_256 = arith.constant 0 : index
    %c0_257 = arith.constant 0 : index
    %212 = vector.load %arg7[%c8_255, %c0_256, %c0_257] : memref<9x128x128xbf16, #tpu.memory_space<vmem>>, vector<1x128x128xbf16>
    %213 = vector.shape_cast %212 : vector<1x128x128xbf16> to vector<128x128xbf16>
    %cst_258 = arith.constant dense<0.000000e+00> : vector<128x128xf32>
    %214 = tpu.matmul %211, %213, %cst_258 {dimension_numbers = #tpu.dot_dimension_numbers<[1], [0], [0], [1], [0, 0, 1, 1], [], []>} : vector<128x128xbf16>, vector<128x128xbf16>, vector<128x128xf32> -> vector<128x128xf32>
    %215 = arith.addf %208, %214 : vector<128x128xf32>
    %c0_259 = arith.constant 0 : index
    %c0_260 = arith.constant 0 : index
    %216 = vector.load %arg9[%c0_259, %c0_260] : memref<128x128xf32, #tpu.memory_space<vmem>>, vector<128x128xf32>
    tpu.vector_store %arg9[%c0_259, %c0_260], %215 {strides = array<i32>} : memref<128x128xf32, #tpu.memory_space<vmem>>, vector<128x128xf32>,
    return
  }
  func.func @transform_0(%arg0: i32) -> (i32, i32, i32, i32, i32, i32) {
    %c0_i32 = arith.constant 0 : i32
    %c0_i32_0 = arith.constant 0 : i32
    %c0_i32_1 = arith.constant 0 : i32
    %c0_i32_2 = arith.constant 0 : i32
    %c0_i32_3 = arith.constant 0 : i32
    %c0_i32_4 = arith.constant 0 : i32
    return %c0_i32, %c0_i32_0, %arg0, %c0_i32_1, %c0_i32_2, %c0_i32_3 : i32, i32, i32, i32, i32, i32
  }
  func.func @transform_1(%arg0: i32) -> (i32, i32) {
    %c0_i32 = arith.constant 0 : i32
    %c0_i32_0 = arith.constant 0 : i32
    %c0_i32_1 = arith.constant 0 : i32
    return %c0_i32, %c0_i32_0 : i32, i32
  }
  func.func @transform_2(%arg0: i32) -> (i32, i32) {
    %c0_i32 = arith.constant 0 : i32
    %c0_i32_0 = arith.constant 0 : i32
    %c0_i32_1 = arith.constant 0 : i32
    return %c0_i32, %c0_i32_0 : i32, i32
  }
  func.func @transform_3(%arg0: i32) -> (i32, i32, i32) {
    %c0_i32 = arith.constant 0 : i32
    %c0_i32_0 = arith.constant 0 : i32
    %c0_i32_1 = arith.constant 0 : i32
    %c0_i32_2 = arith.constant 0 : i32
    return %c0_i32, %c0_i32_0, %c0_i32_1 : i32, i32, i32
  }
  func.func @transform_4(%arg0: i32) -> (i32, i32) {
    %c0_i32 = arith.constant 0 : i32
    %c0_i32_0 = arith.constant 0 : i32
    %c0_i32_1 = arith.constant 0 : i32
    return %c0_i32, %c0_i32_0 : i32, i32
  }
  func.func @transform_5(%arg0: i32) -> (i32, i32) {
    %c0_i32 = arith.constant 0 : i32
    %c0_i32_0 = arith.constant 0 : i32
    %c0_i32_1 = arith.constant 0 : i32
    return %c0_i32, %c0_i32_0 : i32, i32
  }
  func.func @transform_6(%arg0: i32) -> (i32, i32, i32) {
    %c0_i32 = arith.constant 0 : i32
    %c0_i32_0 = arith.constant 0 : i32
    %c0_i32_1 = arith.constant 0 : i32
    %c0_i32_2 = arith.constant 0 : i32
    return %c0_i32, %c0_i32_0, %c0_i32_1 : i32, i32, i32
  }
  func.func @transform_7(%arg0: i32) -> (i32, i32) {
    %c0_i32 = arith.constant 0 : i32
    %c0_i32_0 = arith.constant 0 : i32
    %c0_i32_1 = arith.constant 0 : i32
    return %c0_i32, %c0_i32_0 : i32, i32
  }
  func.func @transform_8(%arg0: i32) -> (i32, i32) {
    %c0_i32 = arith.constant 0 : i32
    %c0_i32_0 = arith.constant 0 : i32
    return %arg0, %c0_i32 : i32, i32
  }
}

</mosaic_0001>

<llo_original>
// kernel: tpu_custom_call.1
$region0: #{tpu_custom_call.1}
  #allocation0 [shape = 'u32[]', space=smem, size = 0x4, offset = 0x4, fixed_abs, tag = 'smem constant byte address 0x4 - core index']
  #allocation1 [shape = 'u32[144,128]{1,0:T(1,128)}', space=vmem, size = 0x12000, scoped, tag = 'internal scratch']
  #allocation2 [shape = 'f32[2,2,2,9,9,128]{5,4,3,2,1,0:T(8,128)}', space=vmem, size = 0x90000, scoped, tag = 'scratch operand']
  #allocation3 [shape = 'f32[2,10,10,128]{3,2,1,0:T(8,128)}', space=vmem, size = 0x28000, scoped, tag = 'scratch operand']
  %s0 = inlined_call_operand.hbm [shape: f32[2,2,2,8,8,128], index: 0, kind: input, shape index: {}]
  %s1 = inlined_call_operand.vmem [shape: f32[1,128], index: 1, kind: input, shape index: {}]
  %s2 = inlined_call_operand.vmem [shape: f32[1,128], index: 2, kind: input, shape index: {}]
  %s3 = inlined_call_operand.hbm [shape: bf16[9,128,128], index: 3, kind: input, shape index: {}]
  %s4 = inlined_call_operand.vmem [shape: f32[1,128], index: 4, kind: input, shape index: {}]
  %s5 = inlined_call_operand.vmem [shape: f32[1,128], index: 5, kind: input, shape index: {}]
  %s6 = inlined_call_operand.hbm [shape: bf16[9,128,128], index: 6, kind: input, shape index: {}]
  %s7 = inlined_call_operand.hbm [shape: bf16[128,128], index: 7, kind: input, shape index: {}]
  %s8 = inlined_call_operand.hbm [shape: f32[128,128], index: 8, kind: output, shape index: {}]
  %s9 = sld [smem:[#allocation0]]
  $region58: #{tpu_custom_call.1} parent=0
    _
  %s11 = ssub.s32 1, %s9
  %s12 = scalar_select 0, %s11, %s9
  $region1: #{tpu_custom_call.1} parent=0
    #allocation4 [shape = 'u8[262144]{0}', space=vmem, size = 0x40000, scoped, tag = 'input window, operand 0, single buffered']
    #allocation5 [shape = 's32[1]{0}', space=sflag, size = 0x4, scoped, tag = 'scoped memory for tpu_custom_call.1']
    #allocation6 [shape = 's32[1]{0}', space=sflag, size = 0x4, scoped, tag = 'scoped memory for tpu_custom_call.1']
    #allocation7 [shape = 'u8[294912]{0}', space=vmem, size = 0x48000, scoped, tag = 'input window, operand 3, single buffered']
    #allocation8 [shape = 's32[1]{0}', space=sflag, size = 0x4, scoped, tag = 'scoped memory for tpu_custom_call.1']
    #allocation9 [shape = 'u8[294912]{0}', space=vmem, size = 0x48000, scoped, tag = 'input window, operand 6, single buffered']
    #allocation10 [shape = 'u8[32768]{0}', space=vmem, size = 0x8000, scoped, tag = 'input window, operand 7, single buffered']
    #allocation11 [shape = 's32[1]{0}', space=sflag, size = 0x4, scoped, tag = 'scoped memory for tpu_custom_call.1']
    #allocation12 [shape = 'u8[65536]{0}', space=vmem, size = 0x10000, scoped, tag = 'output window, operand 0, single buffered']
    %13 = vsyncpa [#allocation5], 0
    %14 = vsyncpa [#allocation8], 0
    %15 = vsyncpa [#allocation11], 0
    %16 = vsyncpa [#allocation6], 0
    // Predicated region
    $region2: #{tpu_custom_call.1} parent=1 // pred_check
      _
    $region3: #{tpu_custom_call.1} parent=1 // pred_check_branch
      %18 = sbr.rel (0) target = $region5
    $region4: #{tpu_custom_call.1} parent=1 // pred_region
      %s20 = ssub.s32 8192, 8192
      %21 = vsyncadd [#allocation5], %s20
      %s22 = sshll.u32 [#allocation4], 4
      %s23 = int_to_ptr.vmem [resolvable:$true] %s22
      %28 = dma.hbm_to_vmem [thread:$0]  %s0, 8192, %s23, [#allocation5], 128, 128, 8
    $region5: #{tpu_custom_call.1} parent=1 // pred_fallthru
      _
    // Predicated region
    $region6: #{tpu_custom_call.1} parent=1 // pred_check
      _
    $region7: #{tpu_custom_call.1} parent=1 // pred_check_branch
      %30 = sbr.rel (0) target = $region9
    $region8: #{tpu_custom_call.1} parent=1 // pred_region
      _
    $region9: #{tpu_custom_call.1} parent=1 // pred_fallthru
      _
    // Predicated region
    $region10: #{tpu_custom_call.1} parent=1 // pred_check
      _
    $region11: #{tpu_custom_call.1} parent=1 // pred_check_branch
      %32 = sbr.rel (0) target = $region13
    $region12: #{tpu_custom_call.1} parent=1 // pred_region
      _
    $region13: #{tpu_custom_call.1} parent=1 // pred_fallthru
      _
    // Predicated region
    $region14: #{tpu_custom_call.1} parent=1 // pred_check
      _
    $region15: #{tpu_custom_call.1} parent=1 // pred_check_branch
      %34 = sbr.rel (0) target = $region17
    $region16: #{tpu_custom_call.1} parent=1 // pred_region
      %s36 = ssub.s32 9216, 9216
      %37 = vsyncadd [#allocation8], %s36
      %s38 = sshll.u32 [#allocation7], 4
      %s39 = int_to_ptr.vmem [resolvable:$true] %s38
      %44 = dma.hbm_to_vmem [thread:$0]  %s3, 9216, %s39, [#allocation8], 64, 64, 4
    $region17: #{tpu_custom_call.1} parent=1 // pred_fallthru
      _
    // Predicated region
    $region18: #{tpu_custom_call.1} parent=1 // pred_check
      _
    $region19: #{tpu_custom_call.1} parent=1 // pred_check_branch
      %46 = sbr.rel (0) target = $region21
    $region20: #{tpu_custom_call.1} parent=1 // pred_region
      _
    $region21: #{tpu_custom_call.1} parent=1 // pred_fallthru
      _
    // Predicated region
    $region22: #{tpu_custom_call.1} parent=1 // pred_check
      _
    $region23: #{tpu_custom_call.1} parent=1 // pred_check_branch
      %48 = sbr.rel (0) target = $region25
    $region24: #{tpu_custom_call.1} parent=1 // pred_region
      _
    $region25: #{tpu_custom_call.1} parent=1 // pred_fallthru
      _
    // Predicated region
    $region26: #{tpu_custom_call.1} parent=1 // pred_check
      _
    $region27: #{tpu_custom_call.1} parent=1 // pred_check_branch
      %50 = sbr.rel (0) target = $region29
    $region28: #{tpu_custom_call.1} parent=1 // pred_region
      %s52 = ssub.s32 9216, 9216
      %53 = vsyncadd [#allocation8], %s52
      %s54 = sshll.u32 [#allocation9], 4
      %s55 = int_to_ptr.vmem [resolvable:$true] %s54
      %60 = dma.hbm_to_vmem [thread:$0]  %s6, 9216, %s55, [#allocation8], 64, 64, 4
    $region29: #{tpu_custom_call.1} parent=1 // pred_fallthru
      _
    // Predicated region
    $region30: #{tpu_custom_call.1} parent=1 // pred_check
      _
    $region31: #{tpu_custom_call.1} parent=1 // pred_check_branch
      %62 = sbr.rel (0) target = $region33
    $region32: #{tpu_custom_call.1} parent=1 // pred_region
      %s64 = ssub.s32 1024, 1024
      %65 = vsyncadd [#allocation11], %s64
      %s66 = sshll.u32 [#allocation10], 4
      %s67 = int_to_ptr.vmem [resolvable:$true] %s66
      %72 = dma.hbm_to_vmem [thread:$0]  %s7, 1024, %s67, [#allocation11], 64, 64, 4
    $region33: #{tpu_custom_call.1} parent=1 // pred_fallthru
      _
    // Predicated region
    $region34: #{tpu_custom_call.1} parent=1 // pred_check
      _
    $region35: #{tpu_custom_call.1} parent=1 // pred_check_branch
      %74 = sbr.rel (0) target = $region37
    $region36: #{tpu_custom_call.1} parent=1 // pred_region
      %75 = dma.done [#allocation5], 8192
    $region37: #{tpu_custom_call.1} parent=1 // pred_fallthru
      _
    // Predicated region
    $region38: #{tpu_custom_call.1} parent=1 // pred_check
      _
    $region39: #{tpu_custom_call.1} parent=1 // pred_check_branch
      %77 = sbr.rel (0) target = $region41
    $region40: #{tpu_custom_call.1} parent=1 // pred_region
      %78 = dma.done [#allocation8], 9216
    $region41: #{tpu_custom_call.1} parent=1 // pred_fallthru
      _
    // Predicated region
    $region42: #{tpu_custom_call.1} parent=1 // pred_check
      _
    $region43: #{tpu_custom_call.1} parent=1 // pred_check_branch
      %80 = sbr.rel (0) target = $region45
    $region44: #{tpu_custom_call.1} parent=1 // pred_region
      %81 = dma.done [#allocation8], 9216
    $region45: #{tpu_custom_call.1} parent=1 // pred_fallthru
      _
    // Predicated region
    $region46: #{tpu_custom_call.1} parent=1 // pred_check
      _
    $region47: #{tpu_custom_call.1} parent=1 // pred_check_branch
      %83 = sbr.rel (0) target = $region49
    $region48: #{tpu_custom_call.1} parent=1 // pred_region
      %84 = dma.done [#allocation11], 1024
    $region49: #{tpu_custom_call.1} parent=1 // pred_fallthru
      _
    %86 = vst [vmem:[#allocation2] sm:$0xff] 0.0
    %87 = vst [vmem:[#allocation2 + $0x8] sm:$0x1] 0.0
    %88 = vst [vmem:[#allocation2 + $0x90] sm:$0xff] 0.0
    %89 = vst [vmem:[#allocation2 + $0x98] sm:$0x1] 0.0
    %90 = vst [vmem:[#allocation2 + $0x120] sm:$0xff] 0.0
    %91 = vst [vmem:[#allocation2 + $0x128] sm:$0x1] 0.0
    %92 = vst [vmem:[#allocation2 + $0x1b0] sm:$0xff] 0.0
    %93 = vst [vmem:[#allocation2 + $0x1b8] sm:$0x1] 0.0
    %94 = vst [vmem:[#allocation2 + $0x240] sm:$0xff] 0.0
    %95 = vst [vmem:[#allocation2 + $0x248] sm:$0x1] 0.0
    %96 = vst [vmem:[#allocation2 + $0x2d0] sm:$0xff] 0.0
    %97 = vst [vmem:[#allocation2 + $0x2d8] sm:$0x1] 0.0
    %98 = vst [vmem:[#allocation2 + $0x360] sm:$0xff] 0.0
    %99 = vst [vmem:[#allocation2 + $0x368] sm:$0x1] 0.0
    %100 = vst [vmem:[#allocation2 + $0x3f0] sm:$0xff] 0.0
    %101 = vst [vmem:[#allocation2 + $0x3f8] sm:$0x1] 0.0
    %102 = vst [vmem:[#allocation2] sm:$0x1] 0.0
    %103 = vst [vmem:[#allocation2 + $0x10] sm:$0x1] 0.0
    %104 = vst [vmem:[#allocation2 + $0x20] sm:$0x1] 0.0
    %105 = vst [vmem:[#allocation2 + $0x30] sm:$0x1] 0.0
    %106 = vst [vmem:[#allocation2 + $0x40] sm:$0x1] 0.0
    %107 = vst [vmem:[#allocation2 + $0x50] sm:$0x1] 0.0
    %108 = vst [vmem:[#allocation2 + $0x60] sm:$0x1] 0.0
    %109 = vst [vmem:[#allocation2 + $0x70] sm:$0x1] 0.0
    %110 = vst [vmem:[#allocation2 + $0x80] sm:$0x1] 0.0
    %111 = vst [vmem:[#allocation2 + $0x90] sm:$0x1] 0.0
    %112 = vst [vmem:[#allocation2 + $0xa0] sm:$0x1] 0.0
    %113 = vst [vmem:[#allocation2 + $0xb0] sm:$0x1] 0.0
    %114 = vst [vmem:[#allocation2 + $0xc0] sm:$0x1] 0.0
    %115 = vst [vmem:[#allocation2 + $0xd0] sm:$0x1] 0.0
    %116 = vst [vmem:[#allocation2 + $0xe0] sm:$0x1] 0.0
    %117 = vst [vmem:[#allocation2 + $0xf0] sm:$0x1] 0.0
    %118 = vst [vmem:[#allocation2 + $0x100] sm:$0x1] 0.0
    %119 = vst [vmem:[#allocation2 + $0x110] sm:$0x1] 0.0
    %120 = vst [vmem:[#allocation2 + $0x120] sm:$0x1] 0.0
    %121 = vst [vmem:[#allocation2 + $0x130] sm:$0x1] 0.0
    %122 = vst [vmem:[#allocation2 + $0x140] sm:$0x1] 0.0
    %123 = vst [vmem:[#allocation2 + $0x150] sm:$0x1] 0.0
    %124 = vst [vmem:[#allocation2 + $0x160] sm:$0x1] 0.0
    %125 = vst [vmem:[#allocation2 + $0x170] sm:$0x1] 0.0
    %126 = vst [vmem:[#allocation2 + $0x180] sm:$0x1] 0.0
    %127 = vst [vmem:[#allocation2 + $0x190] sm:$0x1] 0.0
    %128 = vst [vmem:[#allocation2 + $0x1a0] sm:$0x1] 0.0
    %129 = vst [vmem:[#allocation2 + $0x1b0] sm:$0x1] 0.0
    %130 = vst [vmem:[#allocation2 + $0x1c0] sm:$0x1] 0.0
    %131 = vst [vmem:[#allocation2 + $0x1d0] sm:$0x1] 0.0
    %132 = vst [vmem:[#allocation2 + $0x1e0] sm:$0x1] 0.0
    %133 = vst [vmem:[#allocation2 + $0x1f0] sm:$0x1] 0.0
    %134 = vst [vmem:[#allocation2 + $0x200] sm:$0x1] 0.0
    %135 = vst [vmem:[#allocation2 + $0x210] sm:$0x1] 0.0
    %136 = vst [vmem:[#allocation2 + $0x220] sm:$0x1] 0.0
    %137 = vst [vmem:[#allocation2 + $0x230] sm:$0x1] 0.0
    %138 = vst [vmem:[#allocation2 + $0x240] sm:$0x1] 0.0
    %139 = vst [vmem:[#allocation2 + $0x250] sm:$0x1] 0.0
    %140 = vst [vmem:[#allocation2 + $0x260] sm:$0x1] 0.0
    %141 = vst [vmem:[#allocation2 + $0x270] sm:$0x1] 0.0
    %142 = vst [vmem:[#allocation2 + $0x280] sm:$0x1] 0.0
    %143 = vst [vmem:[#allocation2 + $0x290] sm:$0x1] 0.0
    %144 = vst [vmem:[#allocation2 + $0x2a0] sm:$0x1] 0.0
    %145 = vst [vmem:[#allocation2 + $0x2b0] sm:$0x1] 0.0
    %146 = vst [vmem:[#allocation2 + $0x2c0] sm:$0x1] 0.0
    %147 = vst [vmem:[#allocation2 + $0x2d0] sm:$0x1] 0.0
    %148 = vst [vmem:[#allocation2 + $0x2e0] sm:$0x1] 0.0
    %149 = vst [vmem:[#allocation2 + $0x2f0] sm:$0x1] 0.0
    %150 = vst [vmem:[#allocation2 + $0x300] sm:$0x1] 0.0
    %151 = vst [vmem:[#allocation2 + $0x310] sm:$0x1] 0.0
    %152 = vst [vmem:[#allocation2 + $0x320] sm:$0x1] 0.0
    %153 = vst [vmem:[#allocation2 + $0x330] sm:$0x1] 0.0
    %154 = vst [vmem:[#allocation2 + $0x340] sm:$0x1] 0.0
    %155 = vst [vmem:[#allocation2 + $0x350] sm:$0x1] 0.0
    %156 = vst [vmem:[#allocation2 + $0x360] sm:$0x1] 0.0
    %157 = vst [vmem:[#allocation2 + $0x370] sm:$0x1] 0.0
    %158 = vst [vmem:[#allocation2 + $0x380] sm:$0x1] 0.0
    %159 = vst [vmem:[#allocation2 + $0x390] sm:$0x1] 0.0
    %160 = vst [vmem:[#allocation2 + $0x3a0] sm:$0x1] 0.0
    %161 = vst [vmem:[#allocation2 + $0x3b0] sm:$0x1] 0.0
    %162 = vst [vmem:[#allocation2 + $0x3c0] sm:$0x1] 0.0
    %163 = vst [vmem:[#allocation2 + $0x3d0] sm:$0x1] 0.0
    %164 = vst [vmem:[#allocation2 + $0x3e0] sm:$0x1] 0.0
    %165 = vst [vmem:[#allocation2 + $0x3f0] sm:$0x1] 0.0
    %166 = vst [vmem:[#allocation2 + $0x400] sm:$0x1] 0.0
    %167 = vst [vmem:[#allocation2 + $0x410] sm:$0x1] 0.0
    %168 = vst [vmem:[#allocation2 + $0x420] sm:$0x1] 0.0
    %169 = vst [vmem:[#allocation2 + $0x430] sm:$0x1] 0.0
    %170 = vst [vmem:[#allocation2 + $0x440] sm:$0x1] 0.0
    %171 = vst [vmem:[#allocation2 + $0x450] sm:$0x1] 0.0
    %172 = vst [vmem:[#allocation2 + $0x460] sm:$0x1] 0.0
    %173 = vst [vmem:[#allocation2 + $0x470] sm:$0x1] 0.0
    %174 = vst [vmem:[#allocation3] sm:$0xff] 0.0
    %175 = vst [vmem:[#allocation3 + $0x8] sm:$0x3] 0.0
    %176 = vst [vmem:[#allocation3 + $0xa0] sm:$0xff] 0.0
    %177 = vst [vmem:[#allocation3 + $0xa8] sm:$0x3] 0.0
    %s178 = scalar_lea.vmem [#allocation3], 144
    %179 = vst [vmem:[%s178] sm:$0xff] 0.0
    %180 = vst [vmem:[%s178 + $0x8] sm:$0x3] 0.0
    %181 = vst [vmem:[%s178 + $0xa0] sm:$0xff] 0.0
    %182 = vst [vmem:[%s178 + $0xa8] sm:$0x3] 0.0
    %183 = vst [vmem:[#allocation3] sm:$0x1] 0.0
    %184 = vst [vmem:[#allocation3 + $0x10] sm:$0x1] 0.0
    %185 = vst [vmem:[#allocation3 + $0x20] sm:$0x1] 0.0
    %186 = vst [vmem:[#allocation3 + $0x30] sm:$0x1] 0.0
    %187 = vst [vmem:[#allocation3 + $0x40] sm:$0x1] 0.0
    %188 = vst [vmem:[#allocation3 + $0x50] sm:$0x1] 0.0
    %189 = vst [vmem:[#allocation3 + $0x60] sm:$0x1] 0.0
    %190 = vst [vmem:[#allocation3 + $0x70] sm:$0x1] 0.0
    %191 = vst [vmem:[#allocation3 + $0x80] sm:$0x1] 0.0
    %192 = vst [vmem:[#allocation3 + $0x90] sm:$0x1] 0.0
    %193 = vst [vmem:[#allocation3 + $0xa0] sm:$0x1] 0.0
    %194 = vst [vmem:[#allocation3 + $0xb0] sm:$0x1] 0.0
    %195 = vst [vmem:[#allocation3 + $0xc0] sm:$0x1] 0.0
    %196 = vst [vmem:[#allocation3 + $0xd0] sm:$0x1] 0.0
    %197 = vst [vmem:[#allocation3 + $0xe0] sm:$0x1] 0.0
    %198 = vst [vmem:[#allocation3 + $0xf0] sm:$0x1] 0.0
    %199 = vst [vmem:[#allocation3 + $0x100] sm:$0x1] 0.0
    %200 = vst [vmem:[#allocation3 + $0x110] sm:$0x1] 0.0
    %201 = vst [vmem:[#allocation3 + $0x120] sm:$0x1] 0.0
    %202 = vst [vmem:[#allocation3 + $0x130] sm:$0x1] 0.0
    %203 = vst [vmem:[#allocation3 + $0x9] sm:$0x1] 0.0
    %204 = vst [vmem:[#allocation3 + $0x19] sm:$0x1] 0.0
    %205 = vst [vmem:[#allocation3 + $0x29] sm:$0x1] 0.0
    %206 = vst [vmem:[#allocation3 + $0x39] sm:$0x1] 0.0
    %207 = vst [vmem:[#allocation3 + $0x49] sm:$0x1] 0.0
    %208 = vst [vmem:[#allocation3 + $0x59] sm:$0x1] 0.0
    %209 = vst [vmem:[#allocation3 + $0x69] sm:$0x1] 0.0
    %210 = vst [vmem:[#allocation3 + $0x79] sm:$0x1] 0.0
    %211 = vst [vmem:[#allocation3 + $0x89] sm:$0x1] 0.0
    %212 = vst [vmem:[#allocation3 + $0x99] sm:$0x1] 0.0
    %213 = vst [vmem:[#allocation3 + $0xa9] sm:$0x1] 0.0
    %214 = vst [vmem:[#allocation3 + $0xb9] sm:$0x1] 0.0
    %215 = vst [vmem:[#allocation3 + $0xc9] sm:$0x1] 0.0
    %216 = vst [vmem:[#allocation3 + $0xd9] sm:$0x1] 0.0
    %217 = vst [vmem:[#allocation3 + $0xe9] sm:$0x1] 0.0
    %218 = vst [vmem:[#allocation3 + $0xf9] sm:$0x1] 0.0
    %219 = vst [vmem:[#allocation3 + $0x109] sm:$0x1] 0.0
    %220 = vst [vmem:[#allocation3 + $0x119] sm:$0x1] 0.0
    %221 = vst [vmem:[#allocation3 + $0x129] sm:$0x1] 0.0
    %222 = vst [vmem:[#allocation3 + $0x139] sm:$0x1] 0.0
    %v223 = vld [vmem:[%s1] sm:$0x1]
    %v224 = vld [vmem:[%s2] sm:$0x1]
    %v225 = vld [vmem:[#allocation4] sm:$0xff]
    %v226 = vld [vmem:[#allocation4 + $0x8] sm:$0xff]
    %v227 = vld [vmem:[#allocation4 + $0x10] sm:$0xff]
    %v228 = vld [vmem:[#allocation4 + $0x18] sm:$0xff]
    %v229 = vld [vmem:[#allocation4 + $0x20] sm:$0xff]
    %v230 = vld [vmem:[#allocation4 + $0x28] sm:$0xff]
    %v231 = vld [vmem:[#allocation4 + $0x30] sm:$0xff]
    %v232 = vld [vmem:[#allocation4 + $0x38] sm:$0xff]
    %v233 = vld [vmem:[#allocation4 + $0x40] sm:$0xff]
    %v234 = vld [vmem:[#allocation4 + $0x48] sm:$0xff]
    %v235 = vld [vmem:[#allocation4 + $0x50] sm:$0xff]
    %v236 = vld [vmem:[#allocation4 + $0x58] sm:$0xff]
    %v237 = vld [vmem:[#allocation4 + $0x60] sm:$0xff]
    %v238 = vld [vmem:[#allocation4 + $0x68] sm:$0xff]
    %v239 = vld [vmem:[#allocation4 + $0x70] sm:$0xff]
    %v240 = vld [vmem:[#allocation4 + $0x78] sm:$0xff]
    %v242 = vlaneseq
    %v243 = vshrl.u32 %v242, 7
    %v244 = vsub.s32 0, %v243
    %v245 = vrot.slane %v223, %v244
    %v247 = vmul.f32 %v225, %v245
    %v248 = vmul.f32 %v226, %v245
    %v249 = vmul.f32 %v227, %v245
    %v250 = vmul.f32 %v228, %v245
    %v251 = vmul.f32 %v229, %v245
    %v252 = vmul.f32 %v230, %v245
    %v253 = vmul.f32 %v231, %v245
    %v254 = vmul.f32 %v232, %v245
    %v255 = vmul.f32 %v233, %v245
    %v256 = vmul.f32 %v234, %v245
    %v257 = vmul.f32 %v235, %v245
    %v258 = vmul.f32 %v236, %v245
    %v259 = vmul.f32 %v237, %v245
    %v260 = vmul.f32 %v238, %v245
    %v261 = vmul.f32 %v239, %v245
    %v262 = vmul.f32 %v240, %v245
    %v264 = vlaneseq
    %v265 = vshrl.u32 %v264, 7
    %v266 = vsub.s32 0, %v265
    %v267 = vrot.slane %v224, %v266
    %v269 = vadd.f32 %v247, %v267
    %v270 = vadd.f32 %v248, %v267
    %v271 = vadd.f32 %v249, %v267
    %v272 = vadd.f32 %v250, %v267
    %v273 = vadd.f32 %v251, %v267
    %v274 = vadd.f32 %v252, %v267
    %v275 = vadd.f32 %v253, %v267
    %v276 = vadd.f32 %v254, %v267
    %v277 = vadd.f32 %v255, %v267
    %v278 = vadd.f32 %v256, %v267
    %v279 = vadd.f32 %v257, %v267
    %v280 = vadd.f32 %v258, %v267
    %v281 = vadd.f32 %v259, %v267
    %v282 = vadd.f32 %v260, %v267
    %v283 = vadd.f32 %v261, %v267
    %v284 = vadd.f32 %v262, %v267
    %v285 = vmax.f32 %v269, 0.0
    %v286 = vmax.f32 %v270, 0.0
    %v287 = vmax.f32 %v271, 0.0
    %v288 = vmax.f32 %v272, 0.0
    %v289 = vmax.f32 %v273, 0.0
    %v290 = vmax.f32 %v274, 0.0
    %v291 = vmax.f32 %v275, 0.0
    %v292 = vmax.f32 %v276, 0.0
    %v293 = vmax.f32 %v277, 0.0
    %v294 = vmax.f32 %v278, 0.0
    %v295 = vmax.f32 %v279, 0.0
    %v296 = vmax.f32 %v280, 0.0
    %v297 = vmax.f32 %v281, 0.0
    %v298 = vmax.f32 %v282, 0.0
    %v299 = vmax.f32 %v283, 0.0
    %v300 = vmax.f32 %v284, 0.0
    %s301 = scalar_lea.vmem [#allocation2], 16
    %302 = vst [vmem:[%s301 + $0x1] sm:$0xff] %v285
    %303 = vst [vmem:[%s301 + $0x11] sm:$0xff] %v286
    %304 = vst [vmem:[%s301 + $0x21] sm:$0xff] %v287
    %305 = vst [vmem:[%s301 + $0x31] sm:$0xff] %v288
    %306 = vst [vmem:[%s301 + $0x41] sm:$0xff] %v289
    %307 = vst [vmem:[%s301 + $0x51] sm:$0xff] %v290
    %308 = vst [vmem:[%s301 + $0x61] sm:$0xff] %v291
    %309 = vst [vmem:[%s301 + $0x71] sm:$0xff] %v292
    %310 = vst [vmem:[%s301 + $0x91] sm:$0xff] %v293
    %311 = vst [vmem:[%s301 + $0xa1] sm:$0xff] %v294
    %312 = vst [vmem:[%s301 + $0xb1] sm:$0xff] %v295
    %313 = vst [vmem:[%s301 + $0xc1] sm:$0xff] %v296
    %314 = vst [vmem:[%s301 + $0xd1] sm:$0xff] %v297
    %315 = vst [vmem:[%s301 + $0xe1] sm:$0xff] %v298
    %316 = vst [vmem:[%s301 + $0xf1] sm:$0xff] %v299
    %317 = vst [vmem:[%s301 + $0x101] sm:$0xff] %v300
    %s318 = scalar_lea.vmem [#allocation4], 128
    %v319 = vld [vmem:[%s318] sm:$0xff]
    %v320 = vld [vmem:[%s318 + $0x8] sm:$0xff]
    %v321 = vld [vmem:[%s318 + $0x10] sm:$0xff]
    %v322 = vld [vmem:[%s318 + $0x18] sm:$0xff]
    %v323 = vld [vmem:[%s318 + $0x20] sm:$0xff]
    %v324 = vld [vmem:[%s318 + $0x28] sm:$0xff]
    %v325 = vld [vmem:[%s318 + $0x30] sm:$0xff]
    %v326 = vld [vmem:[%s318 + $0x38] sm:$0xff]
    %v327 = vld [vmem:[%s318 + $0x40] sm:$0xff]
    %v328 = vld [vmem:[%s318 + $0x48] sm:$0xff]
    %v329 = vld [vmem:[%s318 + $0x50] sm:$0xff]
    %v330 = vld [vmem:[%s318 + $0x58] sm:$0xff]
    %v331 = vld [vmem:[%s318 + $0x60] sm:$0xff]
    %v332 = vld [vmem:[%s318 + $0x68] sm:$0xff]
    %v333 = vld [vmem:[%s318 + $0x70] sm:$0xff]
    %v334 = vld [vmem:[%s318 + $0x78] sm:$0xff]
    %v335 = vmul.f32 %v319, %v245
    %v336 = vmul.f32 %v320, %v245
    %v337 = vmul.f32 %v321, %v245
    %v338 = vmul.f32 %v322, %v245
    %v339 = vmul.f32 %v323, %v245
    %v340 = vmul.f32 %v324, %v245
    %v341 = vmul.f32 %v325, %v245
    %v342 = vmul.f32 %v326, %v245
    %v343 = vmul.f32 %v327, %v245
    %v344 = vmul.f32 %v328, %v245
    %v345 = vmul.f32 %v329, %v245
    %v346 = vmul.f32 %v330, %v245
    %v347 = vmul.f32 %v331, %v245
    %v348 = vmul.f32 %v332, %v245
    %v349 = vmul.f32 %v333, %v245
    %v350 = vmul.f32 %v334, %v245
    %v351 = vadd.f32 %v335, %v267
    %v352 = vadd.f32 %v336, %v267
    %v353 = vadd.f32 %v337, %v267
    %v354 = vadd.f32 %v338, %v267
    %v355 = vadd.f32 %v339, %v267
    %v356 = vadd.f32 %v340, %v267
    %v357 = vadd.f32 %v341, %v267
    %v358 = vadd.f32 %v342, %v267
    %v359 = vadd.f32 %v343, %v267
    %v360 = vadd.f32 %v344, %v267
    %v361 = vadd.f32 %v345, %v267
    %v362 = vadd.f32 %v346, %v267
    %v363 = vadd.f32 %v347, %v267
    %v364 = vadd.f32 %v348, %v267
    %v365 = vadd.f32 %v349, %v267
    %v366 = vadd.f32 %v350, %v267
    %v367 = vmax.f32 %v351, 0.0
    %v368 = vmax.f32 %v352, 0.0
    %v369 = vmax.f32 %v353, 0.0
    %v370 = vmax.f32 %v354, 0.0
    %v371 = vmax.f32 %v355, 0.0
    %v372 = vmax.f32 %v356, 0.0
    %v373 = vmax.f32 %v357, 0.0
    %v374 = vmax.f32 %v358, 0.0
    %v375 = vmax.f32 %v359, 0.0
    %v376 = vmax.f32 %v360, 0.0
    %v377 = vmax.f32 %v361, 0.0
    %v378 = vmax.f32 %v362, 0.0
    %v379 = vmax.f32 %v363, 0.0
    %v380 = vmax.f32 %v364, 0.0
    %v381 = vmax.f32 %v365, 0.0
    %v382 = vmax.f32 %v366, 0.0
    %s383 = scalar_lea.vmem [#allocation2], 304
    %384 = vst [vmem:[%s383 + $0x1] sm:$0xff] %v367
    %385 = vst [vmem:[%s383 + $0x11] sm:$0xff] %v368
    %386 = vst [vmem:[%s383 + $0x21] sm:$0xff] %v369
    %387 = vst [vmem:[%s383 + $0x31] sm:$0xff] %v370
    %388 = vst [vmem:[%s383 + $0x41] sm:$0xff] %v371
    %389 = vst [vmem:[%s383 + $0x51] sm:$0xff] %v372
    %390 = vst [vmem:[%s383 + $0x61] sm:$0xff] %v373
    %391 = vst [vmem:[%s383 + $0x71] sm:$0xff] %v374
    %392 = vst [vmem:[%s383 + $0x91] sm:$0xff] %v375
    %393 = vst [vmem:[%s383 + $0xa1] sm:$0xff] %v376
    %394 = vst [vmem:[%s383 + $0xb1] sm:$0xff] %v377
    %395 = vst [vmem:[%s383 + $0xc1] sm:$0xff] %v378
    %396 = vst [vmem:[%s383 + $0xd1] sm:$0xff] %v379
    %397 = vst [vmem:[%s383 + $0xe1] sm:$0xff] %v380
    %398 = vst [vmem:[%s383 + $0xf1] sm:$0xff] %v381
    %399 = vst [vmem:[%s383 + $0x101] sm:$0xff] %v382
    %s400 = scalar_lea.vmem [#allocation4], 256
    %v401 = vld [vmem:[%s400] sm:$0xff]
    %v402 = vld [vmem:[%s400 + $0x8] sm:$0xff]
    %v403 = vld [vmem:[%s400 + $0x10] sm:$0xff]
    %v404 = vld [vmem:[%s400 + $0x18] sm:$0xff]
    %v405 = vld [vmem:[%s400 + $0x20] sm:$0xff]
    %v406 = vld [vmem:[%s400 + $0x28] sm:$0xff]
    %v407 = vld [vmem:[%s400 + $0x30] sm:$0xff]
    %v408 = vld [vmem:[%s400 + $0x38] sm:$0xff]
    %v409 = vld [vmem:[%s400 + $0x40] sm:$0xff]
    %v410 = vld [vmem:[%s400 + $0x48] sm:$0xff]
    %v411 = vld [vmem:[%s400 + $0x50] sm:$0xff]
    %v412 = vld [vmem:[%s400 + $0x58] sm:$0xff]
    %v413 = vld [vmem:[%s400 + $0x60] sm:$0xff]
    %v414 = vld [vmem:[%s400 + $0x68] sm:$0xff]
    %v415 = vld [vmem:[%s400 + $0x70] sm:$0xff]
    %v416 = vld [vmem:[%s400 + $0x78] sm:$0xff]
    %v417 = vmul.f32 %v401, %v245
    %v418 = vmul.f32 %v402, %v245
    %v419 = vmul.f32 %v403, %v245
    %v420 = vmul.f32 %v404, %v245
    %v421 = vmul.f32 %v405, %v245
    %v422 = vmul.f32 %v406, %v245
    %v423 = vmul.f32 %v407, %v245
    %v424 = vmul.f32 %v408, %v245
    %v425 = vmul.f32 %v409, %v245
    %v426 = vmul.f32 %v410, %v245
    %v427 = vmul.f32 %v411, %v245
    %v428 = vmul.f32 %v412, %v245
    %v429 = vmul.f32 %v413, %v245
    %v430 = vmul.f32 %v414, %v245
    %v431 = vmul.f32 %v415, %v245
    %v432 = vmul.f32 %v416, %v245
    %v433 = vadd.f32 %v417, %v267
    %v434 = vadd.f32 %v418, %v267
    %v435 = vadd.f32 %v419, %v267
    %v436 = vadd.f32 %v420, %v267
    %v437 = vadd.f32 %v421, %v267
    %v438 = vadd.f32 %v422, %v267
    %v439 = vadd.f32 %v423, %v267
    %v440 = vadd.f32 %v424, %v267
    %v441 = vadd.f32 %v425, %v267
    %v442 = vadd.f32 %v426, %v267
    %v443 = vadd.f32 %v427, %v267
    %v444 = vadd.f32 %v428, %v267
    %v445 = vadd.f32 %v429, %v267
    %v446 = vadd.f32 %v430, %v267
    %v447 = vadd.f32 %v431, %v267
    %v448 = vadd.f32 %v432, %v267
    %v449 = vmax.f32 %v433, 0.0
    %v450 = vmax.f32 %v434, 0.0
    %v451 = vmax.f32 %v435, 0.0
    %v452 = vmax.f32 %v436, 0.0
    %v453 = vmax.f32 %v437, 0.0
    %v454 = vmax.f32 %v438, 0.0
    %v455 = vmax.f32 %v439, 0.0
    %v456 = vmax.f32 %v440, 0.0
    %v457 = vmax.f32 %v441, 0.0
    %v458 = vmax.f32 %v442, 0.0
    %v459 = vmax.f32 %v443, 0.0
    %v460 = vmax.f32 %v444, 0.0
    %v461 = vmax.f32 %v445, 0.0
    %v462 = vmax.f32 %v446, 0.0
    %v463 = vmax.f32 %v447, 0.0
    %v464 = vmax.f32 %v448, 0.0
    %s465 = scalar_lea.vmem [#allocation2], 592
    %466 = vst [vmem:[%s465 + $0x1] sm:$0xff] %v449
    %467 = vst [vmem:[%s465 + $0x11] sm:$0xff] %v450
    %468 = vst [vmem:[%s465 + $0x21] sm:$0xff] %v451
    %469 = vst [vmem:[%s465 + $0x31] sm:$0xff] %v452
    %470 = vst [vmem:[%s465 + $0x41] sm:$0xff] %v453
    %471 = vst [vmem:[%s465 + $0x51] sm:$0xff] %v454
    %472 = vst [vmem:[%s465 + $0x61] sm:$0xff] %v455
    %473 = vst [vmem:[%s465 + $0x71] sm:$0xff] %v456
    %474 = vst [vmem:[%s465 + $0x91] sm:$0xff] %v457
    %475 = vst [vmem:[%s465 + $0xa1] sm:$0xff] %v458
    %476 = vst [vmem:[%s465 + $0xb1] sm:$0xff] %v459
    %477 = vst [vmem:[%s465 + $0xc1] sm:$0xff] %v460
    %478 = vst [vmem:[%s465 + $0xd1] sm:$0xff] %v461
    %479 = vst [vmem:[%s465 + $0xe1] sm:$0xff] %v462
    %480 = vst [vmem:[%s465 + $0xf1] sm:$0xff] %v463
    %481 = vst [vmem:[%s465 + $0x101] sm:$0xff] %v464
    %s482 = scalar_lea.vmem [#allocation4], 384
    %v483 = vld [vmem:[%s482] sm:$0xff]
    %v484 = vld [vmem:[%s482 + $0x8] sm:$0xff]
    %v485 = vld [vmem:[%s482 + $0x10] sm:$0xff]
    %v486 = vld [vmem:[%s482 + $0x18] sm:$0xff]
    %v487 = vld [vmem:[%s482 + $0x20] sm:$0xff]
    %v488 = vld [vmem:[%s482 + $0x28] sm:$0xff]
    %v489 = vld [vmem:[%s482 + $0x30] sm:$0xff]
    %v490 = vld [vmem:[%s482 + $0x38] sm:$0xff]
    %v491 = vld [vmem:[%s482 + $0x40] sm:$0xff]
    %v492 = vld [vmem:[%s482 + $0x48] sm:$0xff]
    %v493 = vld [vmem:[%s482 + $0x50] sm:$0xff]
    %v494 = vld [vmem:[%s482 + $0x58] sm:$0xff]
    %v495 = vld [vmem:[%s482 + $0x60] sm:$0xff]
    %v496 = vld [vmem:[%s482 + $0x68] sm:$0xff]
    %v497 = vld [vmem:[%s482 + $0x70] sm:$0xff]
    %v498 = vld [vmem:[%s482 + $0x78] sm:$0xff]
    %v499 = vmul.f32 %v483, %v245
    %v500 = vmul.f32 %v484, %v245
    %v501 = vmul.f32 %v485, %v245
    %v502 = vmul.f32 %v486, %v245
    %v503 = vmul.f32 %v487, %v245
    %v504 = vmul.f32 %v488, %v245
    %v505 = vmul.f32 %v489, %v245
    %v506 = vmul.f32 %v490, %v245
    %v507 = vmul.f32 %v491, %v245
    %v508 = vmul.f32 %v492, %v245
    %v509 = vmul.f32 %v493, %v245
    %v510 = vmul.f32 %v494, %v245
    %v511 = vmul.f32 %v495, %v245
    %v512 = vmul.f32 %v496, %v245
    %v513 = vmul.f32 %v497, %v245
    %v514 = vmul.f32 %v498, %v245
    %v515 = vadd.f32 %v499, %v267
    %v516 = vadd.f32 %v500, %v267
    %v517 = vadd.f32 %v501, %v267
    %v518 = vadd.f32 %v502, %v267
    %v519 = vadd.f32 %v503, %v267
    %v520 = vadd.f32 %v504, %v267
    %v521 = vadd.f32 %v505, %v267
    %v522 = vadd.f32 %v506, %v267
    %v523 = vadd.f32 %v507, %v267
    %v524 = vadd.f32 %v508, %v267
    %v525 = vadd.f32 %v509, %v267
    %v526 = vadd.f32 %v510, %v267
    %v527 = vadd.f32 %v511, %v267
    %v528 = vadd.f32 %v512, %v267
    %v529 = vadd.f32 %v513, %v267
    %v530 = vadd.f32 %v514, %v267
    %v531 = vmax.f32 %v515, 0.0
    %v532 = vmax.f32 %v516, 0.0
    %v533 = vmax.f32 %v517, 0.0
    %v534 = vmax.f32 %v518, 0.0
    %v535 = vmax.f32 %v519, 0.0
    %v536 = vmax.f32 %v520, 0.0
    %v537 = vmax.f32 %v521, 0.0
    %v538 = vmax.f32 %v522, 0.0
    %v539 = vmax.f32 %v523, 0.0
    %v540 = vmax.f32 %v524, 0.0
    %v541 = vmax.f32 %v525, 0.0
    %v542 = vmax.f32 %v526, 0.0
    %v543 = vmax.f32 %v527, 0.0
    %v544 = vmax.f32 %v528, 0.0
    %v545 = vmax.f32 %v529, 0.0
    %v546 = vmax.f32 %v530, 0.0
    %s547 = scalar_lea.vmem [#allocation2], 880
    %548 = vst [vmem:[%s547 + $0x1] sm:$0xff] %v531
    %549 = vst [vmem:[%s547 + $0x11] sm:$0xff] %v532
    %550 = vst [vmem:[%s547 + $0x21] sm:$0xff] %v533
    %551 = vst [vmem:[%s547 + $0x31] sm:$0xff] %v534
    %552 = vst [vmem:[%s547 + $0x41] sm:$0xff] %v535
    %553 = vst [vmem:[%s547 + $0x51] sm:$0xff] %v536
    %554 = vst [vmem:[%s547 + $0x61] sm:$0xff] %v537
    %555 = vst [vmem:[%s547 + $0x71] sm:$0xff] %v538
    %556 = vst [vmem:[%s547 + $0x91] sm:$0xff] %v539
    %557 = vst [vmem:[%s547 + $0xa1] sm:$0xff] %v540
    %558 = vst [vmem:[%s547 + $0xb1] sm:$0xff] %v541
    %559 = vst [vmem:[%s547 + $0xc1] sm:$0xff] %v542
    %560 = vst [vmem:[%s547 + $0xd1] sm:$0xff] %v543
    %561 = vst [vmem:[%s547 + $0xe1] sm:$0xff] %v544
    %562 = vst [vmem:[%s547 + $0xf1] sm:$0xff] %v545
    %563 = vst [vmem:[%s547 + $0x101] sm:$0xff] %v546
    %s564 = scalar_lea.vmem [#allocation2], 864
    %v565 = vld [vmem:[%s564] sm:$0xff]
    %v566 = vld [vmem:[%s564 + $0x10] sm:$0xff]
    %v567 = vld [vmem:[%s564 + $0x20] sm:$0xff]
    %v568 = vld [vmem:[%s564 + $0x30] sm:$0xff]
    %v569 = vld [vmem:[%s564 + $0x40] sm:$0xff]
    %v570 = vld [vmem:[%s564 + $0x50] sm:$0xff]
    %v571 = vld [vmem:[%s564 + $0x60] sm:$0xff]
    %v572 = vld [vmem:[%s564 + $0x70] sm:$0xff]
    %v573 = vld [vmem:[%s564 + $0x90] sm:$0xff]
    %v574 = vld [vmem:[%s564 + $0xa0] sm:$0xff]
    %v575 = vld [vmem:[%s564 + $0xb0] sm:$0xff]
    %v576 = vld [vmem:[%s564 + $0xc0] sm:$0xff]
    %v577 = vld [vmem:[%s564 + $0xd0] sm:$0xff]
    %v578 = vld [vmem:[%s564 + $0xe0] sm:$0xff]
    %v579 = vld [vmem:[%s564 + $0xf0] sm:$0xff]
    %v580 = vld [vmem:[%s564 + $0x100] sm:$0xff]
    %v581 = vpack.c.bf16 %v566, %v565
    %v582 = vpack.c.bf16 %v568, %v567
    %v583 = vpack.c.bf16 %v570, %v569
    %v584 = vpack.c.bf16 %v572, %v571
    %v585 = vpack.c.bf16 %v574, %v573
    %v586 = vpack.c.bf16 %v576, %v575
    %v587 = vpack.c.bf16 %v578, %v577
    %v588 = vpack.c.bf16 %v580, %v579
    %v589 = vld [vmem:[#allocation7] sm:$0xf]
    %v590 = vld [vmem:[#allocation7 + $0x4] sm:$0xf]
    %v591 = vld [vmem:[#allocation7 + $0x8] sm:$0xf]
    %v592 = vld [vmem:[#allocation7 + $0xc] sm:$0xf]
    %v593 = vld [vmem:[#allocation7 + $0x10] sm:$0xf]
    %v594 = vld [vmem:[#allocation7 + $0x14] sm:$0xf]
    %v595 = vld [vmem:[#allocation7 + $0x18] sm:$0xf]
    %v596 = vld [vmem:[#allocation7 + $0x1c] sm:$0xf]
    %v597 = vld [vmem:[#allocation7 + $0x20] sm:$0xf]
    %v598 = vld [vmem:[#allocation7 + $0x24] sm:$0xf]
    %v599 = vld [vmem:[#allocation7 + $0x28] sm:$0xf]
    %v600 = vld [vmem:[#allocation7 + $0x2c] sm:$0xf]
    %v601 = vld [vmem:[#allocation7 + $0x30] sm:$0xf]
    %v602 = vld [vmem:[#allocation7 + $0x34] sm:$0xf]
    %v603 = vld [vmem:[#allocation7 + $0x38] sm:$0xf]
    %v604 = vld [vmem:[#allocation7 + $0x3c] sm:$0xf]
    %s605 = scalar_lea.vmem [#allocation2], 576
    %v606 = vld [vmem:[%s605 + $0x1] sm:$0xff]
    %v607 = vld [vmem:[%s605 + $0x11] sm:$0xff]
    %v608 = vld [vmem:[%s605 + $0x21] sm:$0xff]
    %v609 = vld [vmem:[%s605 + $0x31] sm:$0xff]
    %v610 = vld [vmem:[%s605 + $0x41] sm:$0xff]
    %v611 = vld [vmem:[%s605 + $0x51] sm:$0xff]
    %v612 = vld [vmem:[%s605 + $0x61] sm:$0xff]
    %v613 = vld [vmem:[%s605 + $0x71] sm:$0xff]
    %v614 = vld [vmem:[%s605 + $0x91] sm:$0xff]
    %v615 = vld [vmem:[%s605 + $0xa1] sm:$0xff]
    %v616 = vld [vmem:[%s605 + $0xb1] sm:$0xff]
    %v617 = vld [vmem:[%s605 + $0xc1] sm:$0xff]
    %v618 = vld [vmem:[%s605 + $0xd1] sm:$0xff]
    %v619 = vld [vmem:[%s605 + $0xe1] sm:$0xff]
    %v620 = vld [vmem:[%s605 + $0xf1] sm:$0xff]
    %v621 = vld [vmem:[%s605 + $0x101] sm:$0xff]
    %v622 = vpack.c.bf16 %v607, %v606
    %v623 = vpack.c.bf16 %v609, %v608
    %v624 = vpack.c.bf16 %v611, %v610
    %v625 = vpack.c.bf16 %v613, %v612
    %v626 = vpack.c.bf16 %v615, %v614
    %v627 = vpack.c.bf16 %v617, %v616
    %v628 = vpack.c.bf16 %v619, %v618
    %v629 = vpack.c.bf16 %v621, %v620
    %s630 = scalar_lea.vmem [#allocation7], 64
    %v631 = vld [vmem:[%s630] sm:$0xf]
    %v632 = vld [vmem:[%s630 + $0x4] sm:$0xf]
    %v633 = vld [vmem:[%s630 + $0x8] sm:$0xf]
    %v634 = vld [vmem:[%s630 + $0xc] sm:$0xf]
    %v635 = vld [vmem:[%s630 + $0x10] sm:$0xf]
    %v636 = vld [vmem:[%s630 + $0x14] sm:$0xf]
    %v637 = vld [vmem:[%s630 + $0x18] sm:$0xf]
    %v638 = vld [vmem:[%s630 + $0x1c] sm:$0xf]
    %v639 = vld [vmem:[%s630 + $0x20] sm:$0xf]
    %v640 = vld [vmem:[%s630 + $0x24] sm:$0xf]
    %v641 = vld [vmem:[%s630 + $0x28] sm:$0xf]
    %v642 = vld [vmem:[%s630 + $0x2c] sm:$0xf]
    %v643 = vld [vmem:[%s630 + $0x30] sm:$0xf]
    %v644 = vld [vmem:[%s630 + $0x34] sm:$0xf]
    %v645 = vld [vmem:[%s630 + $0x38] sm:$0xf]
    %v646 = vld [vmem:[%s630 + $0x3c] sm:$0xf]
    %v663 = vunpack.c.l.b16 %v631
    %v664 = vunpack.c.l.b16 %v632
    %v665 = vunpack.c.l.b16 %v633
    %v666 = vunpack.c.l.b16 %v634
    %v667 = vunpack.c.l.b16 %v635
    %v668 = vunpack.c.l.b16 %v636
    %v669 = vunpack.c.l.b16 %v637
    %v670 = vunpack.c.l.b16 %v638
    %v671 = vunpack.c.l.b16 %v639
    %v672 = vunpack.c.l.b16 %v640
    %v673 = vunpack.c.l.b16 %v641
    %v674 = vunpack.c.l.b16 %v642
    %v675 = vunpack.c.l.b16 %v643
    %v676 = vunpack.c.l.b16 %v644
    %v677 = vunpack.c.l.b16 %v645
    %v678 = vunpack.c.l.b16 %v646
    %v679 = vpack.c.b16 %v664, %v663
    %v680 = vpack.c.b16 %v666, %v665
    %v681 = vpack.c.b16 %v668, %v667
    %v682 = vpack.c.b16 %v670, %v669
    %v683 = vpack.c.b16 %v672, %v671
    %v684 = vpack.c.b16 %v674, %v673
    %v685 = vpack.c.b16 %v676, %v675
    %v686 = vpack.c.b16 %v678, %v677
    %695 = vmatprep.subr.bf16.mxu0 0
    %696 = vmatpush1.bf16.msra.mxu0 %v679
    %697 = vmatprep.subr.bf16.mxu0 0
    %698 = vmatpush1.bf16.msra.mxu0 %v680
    %699 = vmatprep.subr.bf16.mxu0 0
    %700 = vmatpush1.bf16.msra.mxu0 %v681
    %701 = vmatprep.subr.bf16.mxu0 0
    %702 = vmatpush1.bf16.msra.mxu0 %v682
    %703 = vmatprep.subr.bf16.mxu0 0
    %704 = vmatpush1.bf16.msra.mxu0 %v683
    %705 = vmatprep.subr.bf16.mxu0 0
    %706 = vmatpush1.bf16.msra.mxu0 %v684
    %707 = vmatprep.subr.bf16.mxu0 0
    %708 = vmatpush1.bf16.msra.mxu0 %v685
    %709 = vmatprep.subr.bf16.mxu0 0
    %710 = vmatpush1.bf16.msra.mxu0 %v686
    %711 = vmatprep.subr.bf16.mxu0 0
    %712 = vmatpush1.bf16.msra.mxu0 0
    %713 = vmatprep.subr.bf16.mxu0 0
    %714 = vmatpush1.bf16.msra.mxu0 0
    %715 = vmatprep.subr.bf16.mxu0 0
    %716 = vmatpush1.bf16.msra.mxu0 0
    %717 = vmatprep.subr.bf16.mxu0 0
    %718 = vmatpush1.bf16.msra.mxu0 0
    %719 = vmatprep.subr.bf16.mxu0 0
    %720 = vmatpush1.bf16.msra.mxu0 0
    %721 = vmatprep.subr.bf16.mxu0 0
    %722 = vmatpush1.bf16.msra.mxu0 0
    %723 = vmatprep.subr.bf16.mxu0 0
    %724 = vmatpush1.bf16.msra.mxu0 0
    %725 = vmatprep.subr.bf16.mxu0 0
    %726 = vmatpush1.bf16.msra.mxu0 0
    %727 = vmatprep.mubr.bf16.mxu0 0
    %728 = vmatmul.mubr.bf16.gmra.mrb[0].mxu0 %v622
    %v729 = vpop.f32.mrb[0].mxu0
    %v730 = vadd.f32 0.0, %v729
    %v731 = vpop.f32.mrb[0].mxu0
    %v732 = vpop.f32.mrb[0].mxu0
    %v733 = vadd.f32 0.0, %v732
    %v734 = vpop.f32.mrb[0].mxu0
    %735 = vmatprep.mubr.bf16.mxu0 0
    %736 = vmatmul.mubr.bf16.gmra.mrb[0].mxu0 %v623
    %v737 = vpop.f32.mrb[0].mxu0
    %v738 = vadd.f32 0.0, %v737
    %v739 = vpop.f32.mrb[0].mxu0
    %v740 = vpop.f32.mrb[0].mxu0
    %v741 = vadd.f32 0.0, %v740
    %v742 = vpop.f32.mrb[0].mxu0
    %743 = vmatprep.mubr.bf16.mxu0 0
    %744 = vmatmul.mubr.bf16.gmra.mrb[0].mxu0 %v624
    %v745 = vpop.f32.mrb[0].mxu0
    %v746 = vadd.f32 0.0, %v745
    %v747 = vpop.f32.mrb[0].mxu0
    %v748 = vpop.f32.mrb[0].mxu0
    %v749 = vadd.f32 0.0, %v748
    %v750 = vpop.f32.mrb[0].mxu0
    %751 = vmatprep.mubr.bf16.mxu0 0
    %752 = vmatmul.mubr.bf16.gmra.mrb[0].mxu0 %v625
    %v753 = vpop.f32.mrb[0].mxu0
    %v754 = vadd.f32 0.0, %v753
    %v755 = vpop.f32.mrb[0].mxu0
    %v756 = vpop.f32.mrb[0].mxu0
    %v757 = vadd.f32 0.0, %v756
    %v758 = vpop.f32.mrb[0].mxu0
    %759 = vmatprep.mubr.bf16.mxu0 0
    %760 = vmatmul.mubr.bf16.gmra.mrb[0].mxu0 %v626
    %v761 = vpop.f32.mrb[0].mxu0
    %v762 = vadd.f32 0.0, %v761
    %v763 = vpop.f32.mrb[0].mxu0
    %v764 = vpop.f32.mrb[0].mxu0
    %v765 = vadd.f32 0.0, %v764
    %v766 = vpop.f32.mrb[0].mxu0
    %767 = vmatprep.mubr.bf16.mxu0 0
    %768 = vmatmul.mubr.bf16.gmra.mrb[0].mxu0 %v627
    %v769 = vpop.f32.mrb[0].mxu0
    %v770 = vadd.f32 0.0, %v769
    %v771 = vpop.f32.mrb[0].mxu0
    %v772 = vpop.f32.mrb[0].mxu0
    %v773 = vadd.f32 0.0, %v772
    %v774 = vpop.f32.mrb[0].mxu0
    %775 = vmatprep.mubr.bf16.mxu0 0
    %776 = vmatmul.mubr.bf16.gmra.mrb[0].mxu0 %v628
    %v777 = vpop.f32.mrb[0].mxu0
    %v778 = vadd.f32 0.0, %v777
    %v779 = vpop.f32.mrb[0].mxu0
    %v780 = vpop.f32.mrb[0].mxu0
    %v781 = vadd.f32 0.0, %v780
    %v782 = vpop.f32.mrb[0].mxu0
    %783 = vmatprep.mubr.bf16.mxu0 0
    %784 = vmatmul.mubr.bf16.gmra.mrb[0].mxu0 %v629
    %v785 = vpop.f32.mrb[0].mxu0
    %v786 = vadd.f32 0.0, %v785
    %v787 = vpop.f32.mrb[0].mxu0
    %v788 = vpop.f32.mrb[0].mxu0
    %v789 = vadd.f32 0.0, %v788
    %v790 = vpop.f32.mrb[0].mxu0
    %791 = vdwg.mxu0
    %v808 = vunpack.c.l.b16 %v589
    %v809 = vunpack.c.l.b16 %v590
    %v810 = vunpack.c.l.b16 %v591
    %v811 = vunpack.c.l.b16 %v592
    %v812 = vunpack.c.l.b16 %v593
    %v813 = vunpack.c.l.b16 %v594
    %v814 = vunpack.c.l.b16 %v595
    %v815 = vunpack.c.l.b16 %v596
    %v816 = vunpack.c.l.b16 %v597
    %v817 = vunpack.c.l.b16 %v598
    %v818 = vunpack.c.l.b16 %v599
    %v819 = vunpack.c.l.b16 %v600
    %v820 = vunpack.c.l.b16 %v601
    %v821 = vunpack.c.l.b16 %v602
    %v822 = vunpack.c.l.b16 %v603
    %v823 = vunpack.c.l.b16 %v604
    %v824 = vpack.c.b16 %v809, %v808
    %v825 = vpack.c.b16 %v811, %v810
    %v826 = vpack.c.b16 %v813, %v812
    %v827 = vpack.c.b16 %v815, %v814
    %v828 = vpack.c.b16 %v817, %v816
    %v829 = vpack.c.b16 %v819, %v818
    %v830 = vpack.c.b16 %v821, %v820
    %v831 = vpack.c.b16 %v823, %v822
    %840 = vmatprep.subr.bf16.mxu0 0
    %841 = vmatpush1.bf16.msra.mxu0 %v824
    %842 = vmatprep.subr.bf16.mxu0 0
    %843 = vmatpush1.bf16.msra.mxu0 %v825
    %844 = vmatprep.subr.bf16.mxu0 0
    %845 = vmatpush1.bf16.msra.mxu0 %v826
    %846 = vmatprep.subr.bf16.mxu0 0
    %847 = vmatpush1.bf16.msra.mxu0 %v827
    %848 = vmatprep.subr.bf16.mxu0 0
    %849 = vmatpush1.bf16.msra.mxu0 %v828
    %850 = vmatprep.subr.bf16.mxu0 0
    %851 = vmatpush1.bf16.msra.mxu0 %v829
    %852 = vmatprep.subr.bf16.mxu0 0
    %853 = vmatpush1.bf16.msra.mxu0 %v830
    %854 = vmatprep.subr.bf16.mxu0 0
    %855 = vmatpush1.bf16.msra.mxu0 %v831
    %856 = vmatprep.subr.bf16.mxu0 0
    %857 = vmatpush1.bf16.msra.mxu0 0
    %858 = vmatprep.subr.bf16.mxu0 0
    %859 = vmatpush1.bf16.msra.mxu0 0
    %860 = vmatprep.subr.bf16.mxu0 0
    %861 = vmatpush1.bf16.msra.mxu0 0
    %862 = vmatprep.subr.bf16.mxu0 0
    %863 = vmatpush1.bf16.msra.mxu0 0
    %864 = vmatprep.subr.bf16.mxu0 0
    %865 = vmatpush1.bf16.msra.mxu0 0
    %866 = vmatprep.subr.bf16.mxu0 0
    %867 = vmatpush1.bf16.msra.mxu0 0
    %868 = vmatprep.subr.bf16.mxu0 0
    %869 = vmatpush1.bf16.msra.mxu0 0
    %870 = vmatprep.subr.bf16.mxu0 0
    %871 = vmatpush1.bf16.msra.mxu0 0
    %872 = vmatprep.mubr.bf16.mxu0 0
    %873 = vmatmul.mubr.bf16.gmra.mrb[0].mxu0 %v581
    %v874 = vpop.f32.mrb[0].mxu0
    %v875 = vadd.f32 %v730, %v874
    %v876 = vpop.f32.mrb[0].mxu0
    %v877 = vpop.f32.mrb[0].mxu0
    %v878 = vadd.f32 %v733, %v877
    %v879 = vpop.f32.mrb[0].mxu0
    %880 = vmatprep.mubr.bf16.mxu0 0
    %881 = vmatmul.mubr.bf16.gmra.mrb[0].mxu0 %v582
    %v882 = vpop.f32.mrb[0].mxu0
    %v883 = vadd.f32 %v738, %v882
    %v884 = vpop.f32.mrb[0].mxu0
    %v885 = vpop.f32.mrb[0].mxu0
    %v886 = vadd.f32 %v741, %v885
    %v887 = vpop.f32.mrb[0].mxu0
    %888 = vmatprep.mubr.bf16.mxu0 0
    %889 = vmatmul.mubr.bf16.gmra.mrb[0].mxu0 %v583
    %v890 = vpop.f32.mrb[0].mxu0
    %v891 = vadd.f32 %v746, %v890
    %v892 = vpop.f32.mrb[0].mxu0
    %v893 = vpop.f32.mrb[0].mxu0
    %v894 = vadd.f32 %v749, %v893
    %v895 = vpop.f32.mrb[0].mxu0
    %896 = vmatprep.mubr.bf16.mxu0 0
    %897 = vmatmul.mubr.bf16.gmra.mrb[0].mxu0 %v584
    %v898 = vpop.f32.mrb[0].mxu0
    %v899 = vadd.f32 %v754, %v898
    %v900 = vpop.f32.mrb[0].mxu0
    %v901 = vpop.f32.mrb[0].mxu0
    %v902 = vadd.f32 %v757, %v901
    %v903 = vpop.f32.mrb[0].mxu0
    %904 = vmatprep.mubr.bf16.mxu0 0
    %905 = vmatmul.mubr.bf16.gmra.mrb[0].mxu0 %v585
    %v906 = vpop.f32.mrb[0].mxu0
    %v907 = vadd.f32 %v762, %v906
    %v908 = vpop.f32.mrb[0].mxu0
    %v909 = vpop.f32.mrb[0].mxu0
    %v910 = vadd.f32 %v765, %v909
    %v911 = vpop.f32.mrb[0].mxu0
    %912 = vmatprep.mubr.bf16.mxu0 0
    %913 = vmatmul.mubr.bf16.gmra.mrb[0].mxu0 %v586
    %v914 = vpop.f32.mrb[0].mxu0
    %v915 = vadd.f32 %v770, %v914
    %v916 = vpop.f32.mrb[0].mxu0
    %v917 = vpop.f32.mrb[0].mxu0
    %v918 = vadd.f32 %v773, %v917
    %v919 = vpop.f32.mrb[0].mxu0
    %920 = vmatprep.mubr.bf16.mxu0 0
    %921 = vmatmul.mubr.bf16.gmra.mrb[0].mxu0 %v587
    %v922 = vpop.f32.mrb[0].mxu0
    %v923 = vadd.f32 %v778, %v922
    %v924 = vpop.f32.mrb[0].mxu0
    %v925 = vpop.f32.mrb[0].mxu0
    %v926 = vadd.f32 %v781, %v925
    %v927 = vpop.f32.mrb[0].mxu0
    %928 = vmatprep.mubr.bf16.mxu0 0
    %929 = vmatmul.mubr.bf16.gmra.mrb[0].mxu0 %v588
    %v930 = vpop.f32.mrb[0].mxu0
    %v931 = vadd.f32 %v786, %v930
    %v932 = vpop.f32.mrb[0].mxu0
    %v933 = vpop.f32.mrb[0].mxu0
    %v934 = vadd.f32 %v789, %v933
    %v935 = vpop.f32.mrb[0].mxu0
    %936 = vdwg.mxu0
    %v937 = vld [vmem:[%s564 + $0x1] sm:$0xff]
    %v938 = vld [vmem:[%s564 + $0x11] sm:$0xff]
    %v939 = vld [vmem:[%s564 + $0x21] sm:$0xff]
    %v940 = vld [vmem:[%s564 + $0x31] sm:$0xff]
    %v941 = vld [vmem:[%s564 + $0x41] sm:$0xff]
    %v942 = vld [vmem:[%s564 + $0x51] sm:$0xff]
    %v943 = vld [vmem:[%s564 + $0x61] sm:$0xff]
    %v944 = vld [vmem:[%s564 + $0x71] sm:$0xff]
    %v945 = vld [vmem:[%s564 + $0x91] sm:$0xff]
    %v946 = vld [vmem:[%s564 + $0xa1] sm:$0xff]
    %v947 = vld [vmem:[%s564 + $0xb1] sm:$0xff]
    %v948 = vld [vmem:[%s564 + $0xc1] sm:$0xff]
    %v949 = vld [vmem:[%s564 + $0xd1] sm:$0xff]
    %v950 = vld [vmem:[%s564 + $0xe1] sm:$0xff]
    %v951 = vld [vmem:[%s564 + $0xf1] sm:$0xff]
    %v952 = vld [vmem:[%s564 + $0x101] sm:$0xff]
    %v953 = vpack.c.bf16 %v938, %v937
    %v954 = vpack.c.bf16 %v940, %v939
    %v955 = vpack.c.bf16 %v942, %v941
    %v956 = vpack.c.bf16 %v944, %v943
    %v957 = vpack.c.bf16 %v946, %v945
    %v958 = vpack.c.bf16 %v948, %v947
    %v959 = vpack.c.bf16 %v950, %v949
    %v960 = vpack.c.bf16 %v952, %v951
    %s961 = scalar_lea.vmem [#allocation7], 128
    %v962 = vld [vmem:[%s961] sm:$0xf]
    %v963 = vld [vmem:[%s961 + $0x4] sm:$0xf]
    %v964 = vld [vmem:[%s961 + $0x8] sm:$0xf]
    %v965 = vld [vmem:[%s961 + $0xc] sm:$0xf]
    %v966 = vld [vmem:[%s961 + $0x10] sm:$0xf]
    %v967 = vld [vmem:[%s961 + $0x14] sm:$0xf]
    %v968 = vld [vmem:[%s961 + $0x18] sm:$0xf]
    %v969 = vld [vmem:[%s961 + $0x1c] sm:$0xf]
    %v970 = vld [vmem:[%s961 + $0x20] sm:$0xf]
    %v971 = vld [vmem:[%s961 + $0x24] sm:$0xf]
    %v972 = vld [vmem:[%s961 + $0x28] sm:$0xf]
    %v973 = vld [vmem:[%s961 + $0x2c] sm:$0xf]
    %v974 = vld [vmem:[%s961 + $0x30] sm:$0xf]
    %v975 = vld [vmem:[%s961 + $0x34] sm:$0xf]
    %v976 = vld [vmem:[%s961 + $0x38] sm:$0xf]
    %v977 = vld [vmem:[%s961 + $0x3c] sm:$0xf]
    %v994 = vunpack.c.l.b16 %v962
    %v995 = vunpack.c.l.b16 %v963
    %v996 = vunpack.c.l.b16 %v964
    %v997 = vunpack.c.l.b16 %v965
    %v998 = vunpack.c.l.b16 %v966
    %v999 = vunpack.c.l.b16 %v967
    %v1000 = vunpack.c.l.b16 %v968
    %v1001 = vunpack.c.l.b16 %v969
    %v1002 = vunpack.c.l.b16 %v970
    %v1003 = vunpack.c.l.b16 %v971
    %v1004 = vunpack.c.l.b16 %v972
    %v1005 = vunpack.c.l.b16 %v973
    %v1006 = vunpack.c.l.b16 %v974
    %v1007 = vunpack.c.l.b16 %v975
    %v1008 = vunpack.c.l.b16 %v976
    %v1009 = vunpack.c.l.b16 %v977
    %v1010 = vpack.c.b16 %v995, %v994
    %v1011 = vpack.c.b16 %v997, %v996
    %v1012 = vpack.c.b16 %v999, %v998
    %v1013 = vpack.c.b16 %v1001, %v1000
    %v1014 = vpack.c.b16 %v1003, %v1002
    %v1015 = vpack.c.b16 %v1005, %v1004
    %v1016 = vpack.c.b16 %v1007, %v1006
    %v1017 = vpack.c.b16 %v1009, %v1008
    %1026 = vmatprep.subr.bf16.mxu0 0
    %1027 = vmatpush1.bf16.msra.mxu0 %v1010
    %1028 = vmatprep.subr.bf16.mxu0 0
    %1029 = vmatpush1.bf16.msra.mxu0 %v1011
    %1030 = vmatprep.subr.bf16.mxu0 0
    %1031 = vmatpush1.bf16.msra.mxu0 %v1012
    %1032 = vmatprep.subr.bf16.mxu0 0
    %1033 = vmatpush1.bf16.msra.mxu0 %v1013
    %1034 = vmatprep.subr.bf16.mxu0 0
    %1035 = vmatpush1.bf16.msra.mxu0 %v1014
    %1036 = vmatprep.subr.bf16.mxu0 0
    %1037 = vmatpush1.bf16.msra.mxu0 %v1015
    %1038 = vmatprep.subr.bf16.mxu0 0
    %1039 = vmatpush1.bf16.msra.mxu0 %v1016
    %1040 = vmatprep.subr.bf16.mxu0 0
    %1041 = vmatpush1.bf16.msra.mxu0 %v1017
    %1042 = vmatprep.subr.bf16.mxu0 0
    %1043 = vmatpush1.bf16.msra.mxu0 0
    %1044 = vmatprep.subr.bf16.mxu0 0
    %1045 = vmatpush1.bf16.msra.mxu0 0
    %1046 = vmatprep.subr.bf16.mxu0 0
    %1047 = vmatpush1.bf16.msra.mxu0 0
    %1048 = vmatprep.subr.bf16.mxu0 0
    %1049 = vmatpush1.bf16.msra.mxu0 0
    %1050 = vmatprep.subr.bf16.mxu0 0
    %1051 = vmatpush1.bf16.msra.mxu0 0
    %1052 = vmatprep.subr.bf16.mxu0 0
    %1053 = vmatpush1.bf16.msra.mxu0 0
    %1054 = vmatprep.subr.bf16.mxu0 0
    %1055 = vmatpush1.bf16.msra.mxu0 0
    %1056 = vmatprep.subr.bf16.mxu0 0
    %1057 = vmatpush1.bf16.msra.mxu0 0
    %1058 = vmatprep.mubr.bf16.mxu0 0
    %1059 = vmatmul.mubr.bf16.gmra.mrb[0].mxu0 %v953
    %v1060 = vpop.f32.mrb[0].mxu0
    %v1061 = vadd.f32 0.0, %v1060
    %v1062 = vpop.f32.mrb[0].mxu0
    %v1063 = vpop.f32.mrb[0].mxu0
    %v1064 = vadd.f32 0.0, %v1063
    %v1065 = vpop.f32.mrb[0].mxu0
    %1066 = vmatprep.mubr.bf16.mxu0 0
    %1067 = vmatmul.mubr.bf16.gmra.mrb[0].mxu0 %v954
    %v1068 = vpop.f32.mrb[0].mxu0
    %v1069 = vadd.f32 0.0, %v1068
    %v1070 = vpop.f32.mrb[0].mxu0
    %v1071 = vpop.f32.mrb[0].mxu0
    %v1072 = vadd.f32 0.0, %v1071
    %v1073 = vpop.f32.mrb[0].mxu0
    %1074 = vmatprep.mubr.bf16.mxu0 0
    %1075 = vmatmul.mubr.bf16.gmra.mrb[0].mxu0 %v955
    %v1076 = vpop.f32.mrb[0].mxu0
    %v1077 = vadd.f32 0.0, %v1076
    %v1078 = vpop.f32.mrb[0].mxu0
    %v1079 = vpop.f32.mrb[0].mxu0
    %v1080 = vadd.f32 0.0, %v1079
    %v1081 = vpop.f32.mrb[0].mxu0
    %1082 = vmatprep.mubr.bf16.mxu0 0
    %1083 = vmatmul.mubr.bf16.gmra.mrb[0].mxu0 %v956
    %v1084 = vpop.f32.mrb[0].mxu0
    %v1085 = vadd.f32 0.0, %v1084
    %v1086 = vpop.f32.mrb[0].mxu0
    %v1087 = vpop.f32.mrb[0].mxu0
    %v1088 = vadd.f32 0.0, %v1087
    %v1089 = vpop.f32.mrb[0].mxu0
    %1090 = vmatprep.mubr.bf16.mxu0 0
    %1091 = vmatmul.mubr.bf16.gmra.mrb[0].mxu0 %v957
    %v1092 = vpop.f32.mrb[0].mxu0
    %v1093 = vadd.f32 0.0, %v1092
    %v1094 = vpop.f32.mrb[0].mxu0
    %v1095 = vpop.f32.mrb[0].mxu0
    %v1096 = vadd.f32 0.0, %v1095
    %v1097 = vpop.f32.mrb[0].mxu0
    %1098 = vmatprep.mubr.bf16.mxu0 0
    %1099 = vmatmul.mubr.bf16.gmra.mrb[0].mxu0 %v958
    %v1100 = vpop.f32.mrb[0].mxu0
    %v1101 = vadd.f32 0.0, %v1100
    %v1102 = vpop.f32.mrb[0].mxu0
    %v1103 = vpop.f32.mrb[0].mxu0
    %v1104 = vadd.f32 0.0, %v1103
    %v1105 = vpop.f32.mrb[0].mxu0
    %1106 = vmatprep.mubr.bf16.mxu0 0
    %1107 = vmatmul.mubr.bf16.gmra.mrb[0].mxu0 %v959
    %v1108 = vpop.f32.mrb[0].mxu0
    %v1109 = vadd.f32 0.0, %v1108
    %v1110 = vpop.f32.mrb[0].mxu0
    %v1111 = vpop.f32.mrb[0].mxu0
    %v1112 = vadd.f32 0.0, %v1111
    %v1113 = vpop.f32.mrb[0].mxu0
    %1114 = vmatprep.mubr.bf16.mxu0 0
    %1115 = vmatmul.mubr.bf16.gmra.mrb[0].mxu0 %v960
    %v1116 = vpop.f32.mrb[0].mxu0
    %v1117 = vadd.f32 0.0, %v1116
    %v1118 = vpop.f32.mrb[0].mxu0
    %v1119 = vpop.f32.mrb[0].mxu0
    %v1120 = vadd.f32 0.0, %v1119
    %v1121 = vpop.f32.mrb[0].mxu0
    %1122 = vdwg.mxu0
    %v1123 = vadd.f32 %v875, %v1061
    %v1124 = vadd.f32 %v878, %v1064
    %v1125 = vadd.f32 %v883, %v1069
    %v1126 = vadd.f32 %v886, %v1072
    %v1127 = vadd.f32 %v891, %v1077
    %v1128 = vadd.f32 %v894, %v1080
    %v1129 = vadd.f32 %v899, %v1085
    %v1130 = vadd.f32 %v902, %v1088
    %v1131 = vadd.f32 %v907, %v1093
    %v1132 = vadd.f32 %v910, %v1096
    %v1133 = vadd.f32 %v915, %v1101
    %v1134 = vadd.f32 %v918, %v1104
    %v1135 = vadd.f32 %v923, %v1109
    %v1136 = vadd.f32 %v926, %v1112
    %v1137 = vadd.f32 %v931, %v1117
    %v1138 = vadd.f32 %v934, %v1120
    %v1139 = vld [vmem:[%s383] sm:$0xff]
    %v1140 = vld [vmem:[%s383 + $0x10] sm:$0xff]
    %v1141 = vld [vmem:[%s383 + $0x20] sm:$0xff]
    %v1142 = vld [vmem:[%s383 + $0x30] sm:$0xff]
    %v1143 = vld [vmem:[%s383 + $0x40] sm:$0xff]
    %v1144 = vld [vmem:[%s383 + $0x50] sm:$0xff]
    %v1145 = vld [vmem:[%s383 + $0x60] sm:$0xff]
    %v1146 = vld [vmem:[%s383 + $0x70] sm:$0xff]
    %v1147 = vld [vmem:[%s383 + $0x90] sm:$0xff]
    %v1148 = vld [vmem:[%s383 + $0xa0] sm:$0xff]
    %v1149 = vld [vmem:[%s383 + $0xb0] sm:$0xff]
    %v1150 = vld [vmem:[%s383 + $0xc0] sm:$0xff]
    %v1151 = vld [vmem:[%s383 + $0xd0] sm:$0xff]
    %v1152 = vld [vmem:[%s383 + $0xe0] sm:$0xff]
    %v1153 = vld [vmem:[%s383 + $0xf0] sm:$0xff]
    %v1154 = vld [vmem:[%s383 + $0x100] sm:$0xff]
    %v1155 = vpack.c.bf16 %v1140, %v1139
    %v1156 = vpack.c.bf16 %v1142, %v1141
    %v1157 = vpack.c.bf16 %v1144, %v1143
    %v1158 = vpack.c.bf16 %v1146, %v1145
    %v1159 = vpack.c.bf16 %v1148, %v1147
    %v1160 = vpack.c.bf16 %v1150, %v1149
    %v1161 = vpack.c.bf16 %v1152, %v1151
    %v1162 = vpack.c.bf16 %v1154, %v1153
    %s1163 = scalar_lea.vmem [#allocation7], 192
    %v1164 = vld [vmem:[%s1163] sm:$0xf]
    %v1165 = vld [vmem:[%s1163 + $0x4] sm:$0xf]
    %v1166 = vld [vmem:[%s1163 + $0x8] sm:$0xf]
    %v1167 = vld [vmem:[%s1163 + $0xc] sm:$0xf]
    %v1168 = vld [vmem:[%s1163 + $0x10] sm:$0xf]
    %v1169 = vld [vmem:[%s1163 + $0x14] sm:$0xf]
    %v1170 = vld [vmem:[%s1163 + $0x18] sm:$0xf]
    %v1171 = vld [vmem:[%s1163 + $0x1c] sm:$0xf]
    %v1172 = vld [vmem:[%s1163 + $0x20] sm:$0xf]
    %v1173 = vld [vmem:[%s1163 + $0x24] sm:$0xf]
    %v1174 = vld [vmem:[%s1163 + $0x28] sm:$0xf]
    %v1175 = vld [vmem:[%s1163 + $0x2c] sm:$0xf]
    %v1176 = vld [vmem:[%s1163 + $0x30] sm:$0xf]
    %v1177 = vld [vmem:[%s1163 + $0x34] sm:$0xf]
    %v1178 = vld [vmem:[%s1163 + $0x38] sm:$0xf]
    %v1179 = vld [vmem:[%s1163 + $0x3c] sm:$0xf]
    %v1196 = vunpack.c.l.b16 %v1164
    %v1197 = vunpack.c.l.b16 %v1165
    %v1198 = vunpack.c.l.b16 %v1166
    %v1199 = vunpack.c.l.b16 %v1167
    %v1200 = vunpack.c.l.b16 %v1168
    %v1201 = vunpack.c.l.b16 %v1169
    %v1202 = vunpack.c.l.b16 %v1170
    %v1203 = vunpack.c.l.b16 %v1171
    %v1204 = vunpack.c.l.b16 %v1172
    %v1205 = vunpack.c.l.b16 %v1173
    %v1206 = vunpack.c.l.b16 %v1174
    %v1207 = vunpack.c.l.b16 %v1175
    %v1208 = vunpack.c.l.b16 %v1176
    %v1209 = vunpack.c.l.b16 %v1177
    %v1210 = vunpack.c.l.b16 %v1178
    %v1211 = vunpack.c.l.b16 %v1179
    %v1212 = vpack.c.b16 %v1197, %v1196
    %v1213 = vpack.c.b16 %v1199, %v1198
    %v1214 = vpack.c.b16 %v1201, %v1200
    %v1215 = vpack.c.b16 %v1203, %v1202
    %v1216 = vpack.c.b16 %v1205, %v1204
    %v1217 = vpack.c.b16 %v1207, %v1206
    %v1218 = vpack.c.b16 %v1209, %v1208
    %v1219 = vpack.c.b16 %v1211, %v1210
    %1228 = vmatprep.subr.bf16.mxu0 0
    %1229 = vmatpush1.bf16.msra.mxu0 %v1212
    %1230 = vmatprep.subr.bf16.mxu0 0
    %1231 = vmatpush1.bf16.msra.mxu0 %v1213
    %1232 = vmatprep.subr.bf16.mxu0 0
    %1233 = vmatpush1.bf16.msra.mxu0 %v1214
    %1234 = vmatprep.subr.bf16.mxu0 0
    %1235 = vmatpush1.bf16.msra.mxu0 %v1215
    %1236 = vmatprep.subr.bf16.mxu0 0
    %1237 = vmatpush1.bf16.msra.mxu0 %v1216
    %1238 = vmatprep.subr.bf16.mxu0 0
    %1239 = vmatpush1.bf16.msra.mxu0 %v1217
    %1240 = vmatprep.subr.bf16.mxu0 0
    %1241 = vmatpush1.bf16.msra.mxu0 %v1218
    %1242 = vmatprep.subr.bf16.mxu0 0
    %1243 = vmatpush1.bf16.msra.mxu0 %v1219
    %1244 = vmatprep.subr.bf16.mxu0 0
    %1245 = vmatpush1.bf16.msra.mxu0 0
    %1246 = vmatprep.subr.bf16.mxu0 0
    %1247 = vmatpush1.bf16.msra.mxu0 0
    %1248 = vmatprep.subr.bf16.mxu0 0
    %1249 = vmatpush1.bf16.msra.mxu0 0
    %1250 = vmatprep.subr.bf16.mxu0 0
    %1251 = vmatpush1.bf16.msra.mxu0 0
    %1252 = vmatprep.subr.bf16.mxu0 0
    %1253 = vmatpush1.bf16.msra.mxu0 0
    %1254 = vmatprep.subr.bf16.mxu0 0
    %1255 = vmatpush1.bf16.msra.mxu0 0
    %1256 = vmatprep.subr.bf16.mxu0 0
    %1257 = vmatpush1.bf16.msra.mxu0 0
    %1258 = vmatprep.subr.bf16.mxu0 0
    %1259 = vmatpush1.bf16.msra.mxu0 0
    %1260 = vmatprep.mubr.bf16.mxu0 0
    %1261 = vmatmul.mubr.bf16.gmra.mrb[0].mxu0 %v1155
    %v1262 = vpop.f32.mrb[0].mxu0
    %v1263 = vadd.f32 0.0, %v1262
    %v1264 = vpop.f32.mrb[0].mxu0
    %v1265 = vpop.f32.mrb[0].mxu0
    %v1266 = vadd.f32 0.0, %v1265
    %v1267 = vpop.f32.mrb[0].mxu0
    %1268 = vmatprep.mubr.bf16.mxu0 0
    %1269 = vmatmul.mubr.bf16.gmra.mrb[0].mxu0 %v1156
    %v1270 = vpop.f32.mrb[0].mxu0
    %v1271 = vadd.f32 0.0, %v1270
    %v1272 = vpop.f32.mrb[0].mxu0
    %v1273 = vpop.f32.mrb[0].mxu0
    %v1274 = vadd.f32 0.0, %v1273
    %v1275 = vpop.f32.mrb[0].mxu0
    %1276 = vmatprep.mubr.bf16.mxu0 0
    %1277 = vmatmul.mubr.bf16.gmra.mrb[0].mxu0 %v1157
    %v1278 = vpop.f32.mrb[0].mxu0
    %v1279 = vadd.f32 0.0, %v1278
    %v1280 = vpop.f32.mrb[0].mxu0
    %v1281 = vpop.f32.mrb[0].mxu0
    %v1282 = vadd.f32 0.0, %v1281
    %v1283 = vpop.f32.mrb[0].mxu0
    %1284 = vmatprep.mubr.bf16.mxu0 0
    %1285 = vmatmul.mubr.bf16.gmra.mrb[0].mxu0 %v1158
    %v1286 = vpop.f32.mrb[0].mxu0
    %v1287 = vadd.f32 0.0, %v1286
    %v1288 = vpop.f32.mrb[0].mxu0
    %v1289 = vpop.f32.mrb[0].mxu0
    %v1290 = vadd.f32 0.0, %v1289
    %v1291 = vpop.f32.mrb[0].mxu0
    %1292 = vmatprep.mubr.bf16.mxu0 0
    %1293 = vmatmul.mubr.bf16.gmra.mrb[0].mxu0 %v1159
    %v1294 = vpop.f32.mrb[0].mxu0
    %v1295 = vadd.f32 0.0, %v1294
    %v1296 = vpop.f32.mrb[0].mxu0
    %v1297 = vpop.f32.mrb[0].mxu0
    %v1298 = vadd.f32 0.0, %v1297
    %v1299 = vpop.f32.mrb[0].mxu0
    %1300 = vmatprep.mubr.bf16.mxu0 0
    %1301 = vmatmul.mubr.bf16.gmra.mrb[0].mxu0 %v1160
    %v1302 = vpop.f32.mrb[0].mxu0
    %v1303 = vadd.f32 0.0, %v1302
    %v1304 = vpop.f32.mrb[0].mxu0
    %v1305 = vpop.f32.mrb[0].mxu0
    %v1306 = vadd.f32 0.0, %v1305
    %v1307 = vpop.f32.mrb[0].mxu0
    %1308 = vmatprep.mubr.bf16.mxu0 0
    %1309 = vmatmul.mubr.bf16.gmra.mrb[0].mxu0 %v1161
    %v1310 = vpop.f32.mrb[0].mxu0
    %v1311 = vadd.f32 0.0, %v1310
    %v1312 = vpop.f32.mrb[0].mxu0
    %v1313 = vpop.f32.mrb[0].mxu0
    %v1314 = vadd.f32 0.0, %v1313
    %v1315 = vpop.f32.mrb[0].mxu0
    %1316 = vmatprep.mubr.bf16.mxu0 0
    %1317 = vmatmul.mubr.bf16.gmra.mrb[0].mxu0 %v1162
    %v1318 = vpop.f32.mrb[0].mxu0
    %v1319 = vadd.f32 0.0, %v1318
    %v1320 = vpop.f32.mrb[0].mxu0
    %v1321 = vpop.f32.mrb[0].mxu0
    %v1322 = vadd.f32 0.0, %v1321
    %v1323 = vpop.f32.mrb[0].mxu0
    %1324 = vdwg.mxu0
    %v1325 = vadd.f32 %v1123, %v1263
    %v1326 = vadd.f32 %v1124, %v1266
    %v1327 = vadd.f32 %v1125, %v1271
    %v1328 = vadd.f32 %v1126, %v1274
    %v1329 = vadd.f32 %v1127, %v1279
    %v1330 = vadd.f32 %v1128, %v1282
    %v1331 = vadd.f32 %v1129, %v1287
    %v1332 = vadd.f32 %v1130, %v1290
    %v1333 = vadd.f32 %v1131, %v1295
    %v1334 = vadd.f32 %v1132, %v1298
    %v1335 = vadd.f32 %v1133, %v1303
    %v1336 = vadd.f32 %v1134, %v1306
    %v1337 = vadd.f32 %v1135, %v1311
    %v1338 = vadd.f32 %v1136, %v1314
    %v1339 = vadd.f32 %v1137, %v1319
    %v1340 = vadd.f32 %v1138, %v1322
    %v1341 = vld [vmem:[%s301 + $0x1] sm:$0xff]
    %v1342 = vld [vmem:[%s301 + $0x11] sm:$0xff]
    %v1343 = vld [vmem:[%s301 + $0x21] sm:$0xff]
    %v1344 = vld [vmem:[%s301 + $0x31] sm:$0xff]
    %v1345 = vld [vmem:[%s301 + $0x41] sm:$0xff]
    %v1346 = vld [vmem:[%s301 + $0x51] sm:$0xff]
    %v1347 = vld [vmem:[%s301 + $0x61] sm:$0xff]
    %v1348 = vld [vmem:[%s301 + $0x71] sm:$0xff]
    %v1349 = vld [vmem:[%s301 + $0x91] sm:$0xff]
    %v1350 = vld [vmem:[%s301 + $0xa1] sm:$0xff]
    %v1351 = vld [vmem:[%s301 + $0xb1] sm:$0xff]
    %v1352 = vld [vmem:[%s301 + $0xc1] sm:$0xff]
    %v1353 = vld [vmem:[%s301 + $0xd1] sm:$0xff]
    %v1354 = vld [vmem:[%s301 + $0xe1] sm:$0xff]
    %v1355 = vld [vmem:[%s301 + $0xf1] sm:$0xff]
    %v1356 = vld [vmem:[%s301 + $0x101] sm:$0xff]
    %v1357 = vpack.c.bf16 %v1342, %v1341
    %v1358 = vpack.c.bf16 %v1344, %v1343
    %v1359 = vpack.c.bf16 %v1346, %v1345
    %v1360 = vpack.c.bf16 %v1348, %v1347
    %v1361 = vpack.c.bf16 %v1350, %v1349
    %v1362 = vpack.c.bf16 %v1352, %v1351
    %v1363 = vpack.c.bf16 %v1354, %v1353
    %v1364 = vpack.c.bf16 %v1356, %v1355
    %s1365 = scalar_lea.vmem [#allocation7], 256
    %v1366 = vld [vmem:[%s1365] sm:$0xf]
    %v1367 = vld [vmem:[%s1365 + $0x4] sm:$0xf]
    %v1368 = vld [vmem:[%s1365 + $0x8] sm:$0xf]
    %v1369 = vld [vmem:[%s1365 + $0xc] sm:$0xf]
    %v1370 = vld [vmem:[%s1365 + $0x10] sm:$0xf]
    %v1371 = vld [vmem:[%s1365 + $0x14] sm:$0xf]
    %v1372 = vld [vmem:[%s1365 + $0x18] sm:$0xf]
    %v1373 = vld [vmem:[%s1365 + $0x1c] sm:$0xf]
    %v1374 = vld [vmem:[%s1365 + $0x20] sm:$0xf]
    %v1375 = vld [vmem:[%s1365 + $0x24] sm:$0xf]
    %v1376 = vld [vmem:[%s1365 + $0x28] sm:$0xf]
    %v1377 = vld [vmem:[%s1365 + $0x2c] sm:$0xf]
    %v1378 = vld [vmem:[%s1365 + $0x30] sm:$0xf]
    %v1379 = vld [vmem:[%s1365 + $0x34] sm:$0xf]
    %v1380 = vld [vmem:[%s1365 + $0x38] sm:$0xf]
    %v1381 = vld [vmem:[%s1365 + $0x3c] sm:$0xf]
    %v1398 = vunpack.c.l.b16 %v1366
    %v1399 = vunpack.c.l.b16 %v1367
    %v1400 = vunpack.c.l.b16 %v1368
    %v1401 = vunpack.c.l.b16 %v1369
    %v1402 = vunpack.c.l.b16 %v1370
    %v1403 = vunpack.c.l.b16 %v1371
    %v1404 = vunpack.c.l.b16 %v1372
    %v1405 = vunpack.c.l.b16 %v1373
    %v1406 = vunpack.c.l.b16 %v1374
    %v1407 = vunpack.c.l.b16 %v1375
    %v1408 = vunpack.c.l.b16 %v1376
    %v1409 = vunpack.c.l.b16 %v1377
    %v1410 = vunpack.c.l.b16 %v1378
    %v1411 = vunpack.c.l.b16 %v1379
    %v1412 = vunpack.c.l.b16 %v1380
    %v1413 = vunpack.c.l.b16 %v1381
    %v1414 = vpack.c.b16 %v1399, %v1398
    %v1415 = vpack.c.b16 %v1401, %v1400
    %v1416 = vpack.c.b16 %v1403, %v1402
    %v1417 = vpack.c.b16 %v1405, %v1404
    %v1418 = vpack.c.b16 %v1407, %v1406
    %v1419 = vpack.c.b16 %v1409, %v1408
    %v1420 = vpack.c.b16 %v1411, %v1410
    %v1421 = vpack.c.b16 %v1413, %v1412
    %1430 = vmatprep.subr.bf16.mxu0 0
    %1431 = vmatpush1.bf16.msra.mxu0 %v1414
    %1432 = vmatprep.subr.bf16.mxu0 0
    %1433 = vmatpush1.bf16.msra.mxu0 %v1415
    %1434 = vmatprep.subr.bf16.mxu0 0
    %1435 = vmatpush1.bf16.msra.mxu0 %v1416
    %1436 = vmatprep.subr.bf16.mxu0 0
    %1437 = vmatpush1.bf16.msra.mxu0 %v1417
    %1438 = vmatprep.subr.bf16.mxu0 0
    %1439 = vmatpush1.bf16.msra.mxu0 %v1418
    %1440 = vmatprep.subr.bf16.mxu0 0
    %1441 = vmatpush1.bf16.msra.mxu0 %v1419
    %1442 = vmatprep.subr.bf16.mxu0 0
    %1443 = vmatpush1.bf16.msra.mxu0 %v1420
    %1444 = vmatprep.subr.bf16.mxu0 0
    %1445 = vmatpush1.bf16.msra.mxu0 %v1421
    %1446 = vmatprep.subr.bf16.mxu0 0
    %1447 = vmatpush1.bf16.msra.mxu0 0
    %1448 = vmatprep.subr.bf16.mxu0 0
    %1449 = vmatpush1.bf16.msra.mxu0 0
    %1450 = vmatprep.subr.bf16.mxu0 0
    %1451 = vmatpush1.bf16.msra.mxu0 0
    %1452 = vmatprep.subr.bf16.mxu0 0
    %1453 = vmatpush1.bf16.msra.mxu0 0
    %1454 = vmatprep.subr.bf16.mxu0 0
    %1455 = vmatpush1.bf16.msra.mxu0 0
    %1456 = vmatprep.subr.bf16.mxu0 0
    %1457 = vmatpush1.bf16.msra.mxu0 0
    %1458 = vmatprep.subr.bf16.mxu0 0
    %1459 = vmatpush1.bf16.msra.mxu0 0
    %1460 = vmatprep.subr.bf16.mxu0 0
    %1461 = vmatpush1.bf16.msra.mxu0 0
    %1462 = vmatprep.mubr.bf16.mxu0 0
    %1463 = vmatmul.mubr.bf16.gmra.mrb[0].mxu0 %v1357
    %v1464 = vpop.f32.mrb[0].mxu0
    %v1465 = vadd.f32 0.0, %v1464
    %v1466 = vpop.f32.mrb[0].mxu0
    %v1467 = vpop.f32.mrb[0].mxu0
    %v1468 = vadd.f32 0.0, %v1467
    %v1469 = vpop.f32.mrb[0].mxu0
    %1470 = vmatprep.mubr.bf16.mxu0 0
    %1471 = vmatmul.mubr.bf16.gmra.mrb[0].mxu0 %v1358
    %v1472 = vpop.f32.mrb[0].mxu0
    %v1473 = vadd.f32 0.0, %v1472
    %v1474 = vpop.f32.mrb[0].mxu0
    %v1475 = vpop.f32.mrb[0].mxu0
    %v1476 = vadd.f32 0.0, %v1475
    %v1477 = vpop.f32.mrb[0].mxu0
    %1478 = vmatprep.mubr.bf16.mxu0 0
    %1479 = vmatmul.mubr.bf16.gmra.mrb[0].mxu0 %v1359
    %v1480 = vpop.f32.mrb[0].mxu0
    %v1481 = vadd.f32 0.0, %v1480
    %v1482 = vpop.f32.mrb[0].mxu0
    %v1483 = vpop.f32.mrb[0].mxu0
    %v1484 = vadd.f32 0.0, %v1483
    %v1485 = vpop.f32.mrb[0].mxu0
    %1486 = vmatprep.mubr.bf16.mxu0 0
    %1487 = vmatmul.mubr.bf16.gmra.mrb[0].mxu0 %v1360
    %v1488 = vpop.f32.mrb[0].mxu0
    %v1489 = vadd.f32 0.0, %v1488
    %v1490 = vpop.f32.mrb[0].mxu0
    %v1491 = vpop.f32.mrb[0].mxu0
    %v1492 = vadd.f32 0.0, %v1491
    %v1493 = vpop.f32.mrb[0].mxu0
    %1494 = vmatprep.mubr.bf16.mxu0 0
    %1495 = vmatmul.mubr.bf16.gmra.mrb[0].mxu0 %v1361
    %v1496 = vpop.f32.mrb[0].mxu0
    %v1497 = vadd.f32 0.0, %v1496
    %v1498 = vpop.f32.mrb[0].mxu0
    %v1499 = vpop.f32.mrb[0].mxu0
    %v1500 = vadd.f32 0.0, %v1499
    %v1501 = vpop.f32.mrb[0].mxu0
    %1502 = vmatprep.mubr.bf16.mxu0 0
    %1503 = vmatmul.mubr.bf16.gmra.mrb[0].mxu0 %v1362
    %v1504 = vpop.f32.mrb[0].mxu0
    %v1505 = vadd.f32 0.0, %v1504
    %v1506 = vpop.f32.mrb[0].mxu0
    %v1507 = vpop.f32.mrb[0].mxu0
    %v1508 = vadd.f32 0.0, %v1507
    %v1509 = vpop.f32.mrb[0].mxu0
    %1510 = vmatprep.mubr.bf16.mxu0 0
    %1511 = vmatmul.mubr.bf16.gmra.mrb[0].mxu0 %v1363
    %v1512 = vpop.f32.mrb[0].mxu0
    %v1513 = vadd.f32 0.0, %v1512
    %v1514 = vpop.f32.mrb[0].mxu0
    %v1515 = vpop.f32.mrb[0].mxu0
    %v1516 = vadd.f32 0.0, %v1515
    %v1517 = vpop.f32.mrb[0].mxu0
    %1518 = vmatprep.mubr.bf16.mxu0 0
    %1519 = vmatmul.mubr.bf16.gmra.mrb[0].mxu0 %v1364
    %v1520 = vpop.f32.mrb[0].mxu0
    %v1521 = vadd.f32 0.0, %v1520
    %v1522 = vpop.f32.mrb[0].mxu0
    %v1523 = vpop.f32.mrb[0].mxu0
    %v1524 = vadd.f32 0.0, %v1523
    %v1525 = vpop.f32.mrb[0].mxu0
    %1526 = vdwg.mxu0
    %v1527 = vadd.f32 %v1325, %v1465
    %v1528 = vadd.f32 %v1326, %v1468
    %v1529 = vadd.f32 %v1327, %v1473
    %v1530 = vadd.f32 %v1328, %v1476
    %v1531 = vadd.f32 %v1329, %v1481
    %v1532 = vadd.f32 %v1330, %v1484
    %v1533 = vadd.f32 %v1331, %v1489
    %v1534 = vadd.f32 %v1332, %v1492
    %v1535 = vadd.f32 %v1333, %v1497
    %v1536 = vadd.f32 %v1334, %v1500
    %v1537 = vadd.f32 %v1335, %v1505
    %v1538 = vadd.f32 %v1336, %v1508
    %v1539 = vadd.f32 %v1337, %v1513
    %v1540 = vadd.f32 %v1338, %v1516
    %v1541 = vadd.f32 %v1339, %v1521
    %v1542 = vadd.f32 %v1340, %v1524
    %v1543 = vld [vmem:[%s383 + $0x1] sm:$0xff]
    %v1544 = vld [vmem:[%s383 + $0x11] sm:$0xff]
    %v1545 = vld [vmem:[%s383 + $0x21] sm:$0xff]
    %v1546 = vld [vmem:[%s383 + $0x31] sm:$0xff]
    %v1547 = vld [vmem:[%s383 + $0x41] sm:$0xff]
    %v1548 = vld [vmem:[%s383 + $0x51] sm:$0xff]
    %v1549 = vld [vmem:[%s383 + $0x61] sm:$0xff]
    %v1550 = vld [vmem:[%s383 + $0x71] sm:$0xff]
    %v1551 = vld [vmem:[%s383 + $0x91] sm:$0xff]
    %v1552 = vld [vmem:[%s383 + $0xa1] sm:$0xff]
    %v1553 = vld [vmem:[%s383 + $0xb1] sm:$0xff]
    %v1554 = vld [vmem:[%s383 + $0xc1] sm:$0xff]
    %v1555 = vld [vmem:[%s383 + $0xd1] sm:$0xff]
    %v1556 = vld [vmem:[%s383 + $0xe1] sm:$0xff]
    %v1557 = vld [vmem:[%s383 + $0xf1] sm:$0xff]
    %v1558 = vld [vmem:[%s383 + $0x101] sm:$0xff]
    %v1559 = vpack.c.bf16 %v1544, %v1543
    %v1560 = vpack.c.bf16 %v1546, %v1545
    %v1561 = vpack.c.bf16 %v1548, %v1547
    %v1562 = vpack.c.bf16 %v1550, %v1549
    %v1563 = vpack.c.bf16 %v1552, %v1551
    %v1564 = vpack.c.bf16 %v1554, %v1553
    %v1565 = vpack.c.bf16 %v1556, %v1555
    %v1566 = vpack.c.bf16 %v1558, %v1557
    %s1567 = scalar_lea.vmem [#allocation7], 320
    %v1568 = vld [vmem:[%s1567] sm:$0xf]
    %v1569 = vld [vmem:[%s1567 + $0x4] sm:$0xf]
    %v1570 = vld [vmem:[%s1567 + $0x8] sm:$0xf]
    %v1571 = vld [vmem:[%s1567 + $0xc] sm:$0xf]
    %v1572 = vld [vmem:[%s1567 + $0x10] sm:$0xf]
    %v1573 = vld [vmem:[%s1567 + $0x14] sm:$0xf]
    %v1574 = vld [vmem:[%s1567 + $0x18] sm:$0xf]
    %v1575 = vld [vmem:[%s1567 + $0x1c] sm:$0xf]
    %v1576 = vld [vmem:[%s1567 + $0x20] sm:$0xf]
    %v1577 = vld [vmem:[%s1567 + $0x24] sm:$0xf]
    %v1578 = vld [vmem:[%s1567 + $0x28] sm:$0xf]
    %v1579 = vld [vmem:[%s1567 + $0x2c] sm:$0xf]
    %v1580 = vld [vmem:[%s1567 + $0x30] sm:$0xf]
    %v1581 = vld [vmem:[%s1567 + $0x34] sm:$0xf]
    %v1582 = vld [vmem:[%s1567 + $0x38] sm:$0xf]
    %v1583 = vld [vmem:[%s1567 + $0x3c] sm:$0xf]
    %v1600 = vunpack.c.l.b16 %v1568
    %v1601 = vunpack.c.l.b16 %v1569
    %v1602 = vunpack.c.l.b16 %v1570
    %v1603 = vunpack.c.l.b16 %v1571
    %v1604 = vunpack.c.l.b16 %v1572
    %v1605 = vunpack.c.l.b16 %v1573
    %v1606 = vunpack.c.l.b16 %v1574
    %v1607 = vunpack.c.l.b16 %v1575
    %v1608 = vunpack.c.l.b16 %v1576
    %v1609 = vunpack.c.l.b16 %v1577
    %v1610 = vunpack.c.l.b16 %v1578
    %v1611 = vunpack.c.l.b16 %v1579
    %v1612 = vunpack.c.l.b16 %v1580
    %v1613 = vunpack.c.l.b16 %v1581
    %v1614 = vunpack.c.l.b16 %v1582
    %v1615 = vunpack.c.l.b16 %v1583
    %v1616 = vpack.c.b16 %v1601, %v1600
    %v1617 = vpack.c.b16 %v1603, %v1602
    %v1618 = vpack.c.b16 %v1605, %v1604
    %v1619 = vpack.c.b16 %v1607, %v1606
    %v1620 = vpack.c.b16 %v1609, %v1608
    %v1621 = vpack.c.b16 %v1611, %v1610
    %v1622 = vpack.c.b16 %v1613, %v1612
    %v1623 = vpack.c.b16 %v1615, %v1614
    %1632 = vmatprep.subr.bf16.mxu0 0
    %1633 = vmatpush1.bf16.msra.mxu0 %v1616
    %1634 = vmatprep.subr.bf16.mxu0 0
    %1635 = vmatpush1.bf16.msra.mxu0 %v1617
    %1636 = vmatprep.subr.bf16.mxu0 0
    %1637 = vmatpush1.bf16.msra.mxu0 %v1618
    %1638 = vmatprep.subr.bf16.mxu0 0
    %1639 = vmatpush1.bf16.msra.mxu0 %v1619
    %1640 = vmatprep.subr.bf16.mxu0 0
    %1641 = vmatpush1.bf16.msra.mxu0 %v1620
    %1642 = vmatprep.subr.bf16.mxu0 0
    %1643 = vmatpush1.bf16.msra.mxu0 %v1621
    %1644 = vmatprep.subr.bf16.mxu0 0
    %1645 = vmatpush1.bf16.msra.mxu0 %v1622
    %1646 = vmatprep.subr.bf16.mxu0 0
    %1647 = vmatpush1.bf16.msra.mxu0 %v1623
    %1648 = vmatprep.subr.bf16.mxu0 0
    %1649 = vmatpush1.bf16.msra.mxu0 0
    %1650 = vmatprep.subr.bf16.mxu0 0
    %1651 = vmatpush1.bf16.msra.mxu0 0
    %1652 = vmatprep.subr.bf16.mxu0 0
    %1653 = vmatpush1.bf16.msra.mxu0 0
    %1654 = vmatprep.subr.bf16.mxu0 0
    %1655 = vmatpush1.bf16.msra.mxu0 0
    %1656 = vmatprep.subr.bf16.mxu0 0
    %1657 = vmatpush1.bf16.msra.mxu0 0
    %1658 = vmatprep.subr.bf16.mxu0 0
    %1659 = vmatpush1.bf16.msra.mxu0 0
    %1660 = vmatprep.subr.bf16.mxu0 0
    %1661 = vmatpush1.bf16.msra.mxu0 0
    %1662 = vmatprep.subr.bf16.mxu0 0
    %1663 = vmatpush1.bf16.msra.mxu0 0
    %1664 = vmatprep.mubr.bf16.mxu0 0
    %1665 = vmatmul.mubr.bf16.gmra.mrb[0].mxu0 %v1559
    %v1666 = vpop.f32.mrb[0].mxu0
    %v1667 = vadd.f32 0.0, %v1666
    %v1668 = vpop.f32.mrb[0].mxu0
    %v1669 = vpop.f32.mrb[0].mxu0
    %v1670 = vadd.f32 0.0, %v1669
    %v1671 = vpop.f32.mrb[0].mxu0
    %1672 = vmatprep.mubr.bf16.mxu0 0
    %1673 = vmatmul.mubr.bf16.gmra.mrb[0].mxu0 %v1560
    %v1674 = vpop.f32.mrb[0].mxu0
    %v1675 = vadd.f32 0.0, %v1674
    %v1676 = vpop.f32.mrb[0].mxu0
    %v1677 = vpop.f32.mrb[0].mxu0
    %v1678 = vadd.f32 0.0, %v1677
    %v1679 = vpop.f32.mrb[0].mxu0
    %1680 = vmatprep.mubr.bf16.mxu0 0
    %1681 = vmatmul.mubr.bf16.gmra.mrb[0].mxu0 %v1561
    %v1682 = vpop.f32.mrb[0].mxu0
    %v1683 = vadd.f32 0.0, %v1682
    %v1684 = vpop.f32.mrb[0].mxu0
    %v1685 = vpop.f32.mrb[0].mxu0
    %v1686 = vadd.f32 0.0, %v1685
    %v1687 = vpop.f32.mrb[0].mxu0
    %1688 = vmatprep.mubr.bf16.mxu0 0
    %1689 = vmatmul.mubr.bf16.gmra.mrb[0].mxu0 %v1562
    %v1690 = vpop.f32.mrb[0].mxu0
    %v1691 = vadd.f32 0.0, %v1690
    %v1692 = vpop.f32.mrb[0].mxu0
    %v1693 = vpop.f32.mrb[0].mxu0
    %v1694 = vadd.f32 0.0, %v1693
    %v1695 = vpop.f32.mrb[0].mxu0
    %1696 = vmatprep.mubr.bf16.mxu0 0
    %1697 = vmatmul.mubr.bf16.gmra.mrb[0].mxu0 %v1563
    %v1698 = vpop.f32.mrb[0].mxu0
    %v1699 = vadd.f32 0.0, %v1698
    %v1700 = vpop.f32.mrb[0].mxu0
    %v1701 = vpop.f32.mrb[0].mxu0
    %v1702 = vadd.f32 0.0, %v1701
    %v1703 = vpop.f32.mrb[0].mxu0
    %1704 = vmatprep.mubr.bf16.mxu0 0
    %1705 = vmatmul.mubr.bf16.gmra.mrb[0].mxu0 %v1564
    %v1706 = vpop.f32.mrb[0].mxu0
    %v1707 = vadd.f32 0.0, %v1706
    %v1708 = vpop.f32.mrb[0].mxu0
    %v1709 = vpop.f32.mrb[0].mxu0
    %v1710 = vadd.f32 0.0, %v1709
    %v1711 = vpop.f32.mrb[0].mxu0
    %1712 = vmatprep.mubr.bf16.mxu0 0
    %1713 = vmatmul.mubr.bf16.gmra.mrb[0].mxu0 %v1565
    %v1714 = vpop.f32.mrb[0].mxu0
    %v1715 = vadd.f32 0.0, %v1714
    %v1716 = vpop.f32.mrb[0].mxu0
    %v1717 = vpop.f32.mrb[0].mxu0
    %v1718 = vadd.f32 0.0, %v1717
    %v1719 = vpop.f32.mrb[0].mxu0
    %1720 = vmatprep.mubr.bf16.mxu0 0
    %1721 = vmatmul.mubr.bf16.gmra.mrb[0].mxu0 %v1566
    %v1722 = vpop.f32.mrb[0].mxu0
    %v1723 = vadd.f32 0.0, %v1722
    %v1724 = vpop.f32.mrb[0].mxu0
    %v1725 = vpop.f32.mrb[0].mxu0
    %v1726 = vadd.f32 0.0, %v1725
    %v1727 = vpop.f32.mrb[0].mxu0
    %1728 = vdwg.mxu0
    %v1729 = vadd.f32 %v1527, %v1667
    %v1730 = vadd.f32 %v1528, %v1670
    %v1731 = vadd.f32 %v1529, %v1675
    %v1732 = vadd.f32 %v1530, %v1678
    %v1733 = vadd.f32 %v1531, %v1683
    %v1734 = vadd.f32 %v1532, %v1686
    %v1735 = vadd.f32 %v1533, %v1691
    %v1736 = vadd.f32 %v1534, %v1694
    %v1737 = vadd.f32 %v1535, %v1699
    %v1738 = vadd.f32 %v1536, %v1702
    %v1739 = vadd.f32 %v1537, %v1707
    %v1740 = vadd.f32 %v1538, %v1710
    %v1741 = vadd.f32 %v1539, %v1715
    %v1742 = vadd.f32 %v1540, %v1718
    %v1743 = vadd.f32 %v1541, %v1723
    %v1744 = vadd.f32 %v1542, %v1726
    %v1745 = vld [vmem:[%s547] sm:$0xff]
    %v1746 = vld [vmem:[%s547 + $0x10] sm:$0xff]
    %v1747 = vld [vmem:[%s547 + $0x20] sm:$0xff]
    %v1748 = vld [vmem:[%s547 + $0x30] sm:$0xff]
    %v1749 = vld [vmem:[%s547 + $0x40] sm:$0xff]
    %v1750 = vld [vmem:[%s547 + $0x50] sm:$0xff]
    %v1751 = vld [vmem:[%s547 + $0x60] sm:$0xff]
    %v1752 = vld [vmem:[%s547 + $0x70] sm:$0xff]
    %v1753 = vld [vmem:[%s547 + $0x90] sm:$0xff]
    %v1754 = vld [vmem:[%s547 + $0xa0] sm:$0xff]
    %v1755 = vld [vmem:[%s547 + $0xb0] sm:$0xff]
    %v1756 = vld [vmem:[%s547 + $0xc0] sm:$0xff]
    %v1757 = vld [vmem:[%s547 + $0xd0] sm:$0xff]
    %v1758 = vld [vmem:[%s547 + $0xe0] sm:$0xff]
    %v1759 = vld [vmem:[%s547 + $0xf0] sm:$0xff]
    %v1760 = vld [vmem:[%s547 + $0x100] sm:$0xff]
    %v1761 = vpack.c.bf16 %v1746, %v1745
    %v1762 = vpack.c.bf16 %v1748, %v1747
    %v1763 = vpack.c.bf16 %v1750, %v1749
    %v1764 = vpack.c.bf16 %v1752, %v1751
    %v1765 = vpack.c.bf16 %v1754, %v1753
    %v1766 = vpack.c.bf16 %v1756, %v1755
    %v1767 = vpack.c.bf16 %v1758, %v1757
    %v1768 = vpack.c.bf16 %v1760, %v1759
    %s1769 = scalar_lea.vmem [#allocation7], 384
    %v1770 = vld [vmem:[%s1769] sm:$0xf]
    %v1771 = vld [vmem:[%s1769 + $0x4] sm:$0xf]
    %v1772 = vld [vmem:[%s1769 + $0x8] sm:$0xf]
    %v1773 = vld [vmem:[%s1769 + $0xc] sm:$0xf]
    %v1774 = vld [vmem:[%s1769 + $0x10] sm:$0xf]
    %v1775 = vld [vmem:[%s1769 + $0x14] sm:$0xf]
    %v1776 = vld [vmem:[%s1769 + $0x18] sm:$0xf]
    %v1777 = vld [vmem:[%s1769 + $0x1c] sm:$0xf]
    %v1778 = vld [vmem:[%s1769 + $0x20] sm:$0xf]
    %v1779 = vld [vmem:[%s1769 + $0x24] sm:$0xf]
    %v1780 = vld [vmem:[%s1769 + $0x28] sm:$0xf]
    %v1781 = vld [vmem:[%s1769 + $0x2c] sm:$0xf]
    %v1782 = vld [vmem:[%s1769 + $0x30] sm:$0xf]
    %v1783 = vld [vmem:[%s1769 + $0x34] sm:$0xf]
    %v1784 = vld [vmem:[%s1769 + $0x38] sm:$0xf]
    %v1785 = vld [vmem:[%s1769 + $0x3c] sm:$0xf]
    %v1802 = vunpack.c.l.b16 %v1770
    %v1803 = vunpack.c.l.b16 %v1771
    %v1804 = vunpack.c.l.b16 %v1772
    %v1805 = vunpack.c.l.b16 %v1773
    %v1806 = vunpack.c.l.b16 %v1774
    %v1807 = vunpack.c.l.b16 %v1775
    %v1808 = vunpack.c.l.b16 %v1776
    %v1809 = vunpack.c.l.b16 %v1777
    %v1810 = vunpack.c.l.b16 %v1778
    %v1811 = vunpack.c.l.b16 %v1779
    %v1812 = vunpack.c.l.b16 %v1780
    %v1813 = vunpack.c.l.b16 %v1781
    %v1814 = vunpack.c.l.b16 %v1782
    %v1815 = vunpack.c.l.b16 %v1783
    %v1816 = vunpack.c.l.b16 %v1784
    %v1817 = vunpack.c.l.b16 %v1785
    %v1818 = vpack.c.b16 %v1803, %v1802
    %v1819 = vpack.c.b16 %v1805, %v1804
    %v1820 = vpack.c.b16 %v1807, %v1806
    %v1821 = vpack.c.b16 %v1809, %v1808
    %v1822 = vpack.c.b16 %v1811, %v1810
    %v1823 = vpack.c.b16 %v1813, %v1812
    %v1824 = vpack.c.b16 %v1815, %v1814
    %v1825 = vpack.c.b16 %v1817, %v1816
    %1834 = vmatprep.subr.bf16.mxu0 0
    %1835 = vmatpush1.bf16.msra.mxu0 %v1818
    %1836 = vmatprep.subr.bf16.mxu0 0
    %1837 = vmatpush1.bf16.msra.mxu0 %v1819
    %1838 = vmatprep.subr.bf16.mxu0 0
    %1839 = vmatpush1.bf16.msra.mxu0 %v1820
    %1840 = vmatprep.subr.bf16.mxu0 0
    %1841 = vmatpush1.bf16.msra.mxu0 %v1821
    %1842 = vmatprep.subr.bf16.mxu0 0
    %1843 = vmatpush1.bf16.msra.mxu0 %v1822
    %1844 = vmatprep.subr.bf16.mxu0 0
    %1845 = vmatpush1.bf16.msra.mxu0 %v1823
    %1846 = vmatprep.subr.bf16.mxu0 0
    %1847 = vmatpush1.bf16.msra.mxu0 %v1824
    %1848 = vmatprep.subr.bf16.mxu0 0
    %1849 = vmatpush1.bf16.msra.mxu0 %v1825
    %1850 = vmatprep.subr.bf16.mxu0 0
    %1851 = vmatpush1.bf16.msra.mxu0 0
    %1852 = vmatprep.subr.bf16.mxu0 0
    %1853 = vmatpush1.bf16.msra.mxu0 0
    %1854 = vmatprep.subr.bf16.mxu0 0
    %1855 = vmatpush1.bf16.msra.mxu0 0
    %1856 = vmatprep.subr.bf16.mxu0 0
    %1857 = vmatpush1.bf16.msra.mxu0 0
    %1858 = vmatprep.subr.bf16.mxu0 0
    %1859 = vmatpush1.bf16.msra.mxu0 0
    %1860 = vmatprep.subr.bf16.mxu0 0
    %1861 = vmatpush1.bf16.msra.mxu0 0
    %1862 = vmatprep.subr.bf16.mxu0 0
    %1863 = vmatpush1.bf16.msra.mxu0 0
    %1864 = vmatprep.subr.bf16.mxu0 0
    %1865 = vmatpush1.bf16.msra.mxu0 0
    %1866 = vmatprep.mubr.bf16.mxu0 0
    %1867 = vmatmul.mubr.bf16.gmra.mrb[0].mxu0 %v1761
    %v1868 = vpop.f32.mrb[0].mxu0
    %v1869 = vadd.f32 0.0, %v1868
    %v1870 = vpop.f32.mrb[0].mxu0
    %v1871 = vpop.f32.mrb[0].mxu0
    %v1872 = vadd.f32 0.0, %v1871
    %v1873 = vpop.f32.mrb[0].mxu0
    %1874 = vmatprep.mubr.bf16.mxu0 0
    %1875 = vmatmul.mubr.bf16.gmra.mrb[0].mxu0 %v1762
    %v1876 = vpop.f32.mrb[0].mxu0
    %v1877 = vadd.f32 0.0, %v1876
    %v1878 = vpop.f32.mrb[0].mxu0
    %v1879 = vpop.f32.mrb[0].mxu0
    %v1880 = vadd.f32 0.0, %v1879
    %v1881 = vpop.f32.mrb[0].mxu0
    %1882 = vmatprep.mubr.bf16.mxu0 0
    %1883 = vmatmul.mubr.bf16.gmra.mrb[0].mxu0 %v1763
    %v1884 = vpop.f32.mrb[0].mxu0
    %v1885 = vadd.f32 0.0, %v1884
    %v1886 = vpop.f32.mrb[0].mxu0
    %v1887 = vpop.f32.mrb[0].mxu0
    %v1888 = vadd.f32 0.0, %v1887
    %v1889 = vpop.f32.mrb[0].mxu0
    %1890 = vmatprep.mubr.bf16.mxu0 0
    %1891 = vmatmul.mubr.bf16.gmra.mrb[0].mxu0 %v1764
    %v1892 = vpop.f32.mrb[0].mxu0
    %v1893 = vadd.f32 0.0, %v1892
    %v1894 = vpop.f32.mrb[0].mxu0
    %v1895 = vpop.f32.mrb[0].mxu0
    %v1896 = vadd.f32 0.0, %v1895
    %v1897 = vpop.f32.mrb[0].mxu0
    %1898 = vmatprep.mubr.bf16.mxu0 0
    %1899 = vmatmul.mubr.bf16.gmra.mrb[0].mxu0 %v1765
    %v1900 = vpop.f32.mrb[0].mxu0
    %v1901 = vadd.f32 0.0, %v1900
    %v1902 = vpop.f32.mrb[0].mxu0
    %v1903 = vpop.f32.mrb[0].mxu0
    %v1904 = vadd.f32 0.0, %v1903
    %v1905 = vpop.f32.mrb[0].mxu0
    %1906 = vmatprep.mubr.bf16.mxu0 0
    %1907 = vmatmul.mubr.bf16.gmra.mrb[0].mxu0 %v1766
    %v1908 = vpop.f32.mrb[0].mxu0
    %v1909 = vadd.f32 0.0, %v1908
    %v1910 = vpop.f32.mrb[0].mxu0
    %v1911 = vpop.f32.mrb[0].mxu0
    %v1912 = vadd.f32 0.0, %v1911
    %v1913 = vpop.f32.mrb[0].mxu0
    %1914 = vmatprep.mubr.bf16.mxu0 0
    %1915 = vmatmul.mubr.bf16.gmra.mrb[0].mxu0 %v1767
    %v1916 = vpop.f32.mrb[0].mxu0
    %v1917 = vadd.f32 0.0, %v1916
    %v1918 = vpop.f32.mrb[0].mxu0
    %v1919 = vpop.f32.mrb[0].mxu0
    %v1920 = vadd.f32 0.0, %v1919
    %v1921 = vpop.f32.mrb[0].mxu0
    %1922 = vmatprep.mubr.bf16.mxu0 0
    %1923 = vmatmul.mubr.bf16.gmra.mrb[0].mxu0 %v1768
    %v1924 = vpop.f32.mrb[0].mxu0
    %v1925 = vadd.f32 0.0, %v1924
    %v1926 = vpop.f32.mrb[0].mxu0
    %v1927 = vpop.f32.mrb[0].mxu0
    %v1928 = vadd.f32 0.0, %v1927
    %v1929 = vpop.f32.mrb[0].mxu0
    %1930 = vdwg.mxu0
    %v1931 = vadd.f32 %v1729, %v1869
    %v1932 = vadd.f32 %v1730, %v1872
    %v1933 = vadd.f32 %v1731, %v1877
    %v1934 = vadd.f32 %v1732, %v1880
    %v1935 = vadd.f32 %v1733, %v1885
    %v1936 = vadd.f32 %v1734, %v1888
    %v1937 = vadd.f32 %v1735, %v1893
    %v1938 = vadd.f32 %v1736, %v1896
    %v1939 = vadd.f32 %v1737, %v1901
    %v1940 = vadd.f32 %v1738, %v1904
    %v1941 = vadd.f32 %v1739, %v1909
    %v1942 = vadd.f32 %v1740, %v1912
    %v1943 = vadd.f32 %v1741, %v1917
    %v1944 = vadd.f32 %v1742, %v1920
    %v1945 = vadd.f32 %v1743, %v1925
    %v1946 = vadd.f32 %v1744, %v1928
    %v1947 = vld [vmem:[%s465 + $0x1] sm:$0xff]
    %v1948 = vld [vmem:[%s465 + $0x11] sm:$0xff]
    %v1949 = vld [vmem:[%s465 + $0x21] sm:$0xff]
    %v1950 = vld [vmem:[%s465 + $0x31] sm:$0xff]
    %v1951 = vld [vmem:[%s465 + $0x41] sm:$0xff]
    %v1952 = vld [vmem:[%s465 + $0x51] sm:$0xff]
    %v1953 = vld [vmem:[%s465 + $0x61] sm:$0xff]
    %v1954 = vld [vmem:[%s465 + $0x71] sm:$0xff]
    %v1955 = vld [vmem:[%s465 + $0x91] sm:$0xff]
    %v1956 = vld [vmem:[%s465 + $0xa1] sm:$0xff]
    %v1957 = vld [vmem:[%s465 + $0xb1] sm:$0xff]
    %v1958 = vld [vmem:[%s465 + $0xc1] sm:$0xff]
    %v1959 = vld [vmem:[%s465 + $0xd1] sm:$0xff]
    %v1960 = vld [vmem:[%s465 + $0xe1] sm:$0xff]
    %v1961 = vld [vmem:[%s465 + $0xf1] sm:$0xff]
    %v1962 = vld [vmem:[%s465 + $0x101] sm:$0xff]
    %v1963 = vpack.c.bf16 %v1948, %v1947
    %v1964 = vpack.c.bf16 %v1950, %v1949
    %v1965 = vpack.c.bf16 %v1952, %v1951
    %v1966 = vpack.c.bf16 %v1954, %v1953
    %v1967 = vpack.c.bf16 %v1956, %v1955
    %v1968 = vpack.c.bf16 %v1958, %v1957
    %v1969 = vpack.c.bf16 %v1960, %v1959
    %v1970 = vpack.c.bf16 %v1962, %v1961
    %s1971 = scalar_lea.vmem [#allocation7], 448
    %v1972 = vld [vmem:[%s1971] sm:$0xf]
    %v1973 = vld [vmem:[%s1971 + $0x4] sm:$0xf]
    %v1974 = vld [vmem:[%s1971 + $0x8] sm:$0xf]
    %v1975 = vld [vmem:[%s1971 + $0xc] sm:$0xf]
    %v1976 = vld [vmem:[%s1971 + $0x10] sm:$0xf]
    %v1977 = vld [vmem:[%s1971 + $0x14] sm:$0xf]
    %v1978 = vld [vmem:[%s1971 + $0x18] sm:$0xf]
    %v1979 = vld [vmem:[%s1971 + $0x1c] sm:$0xf]
    %v1980 = vld [vmem:[%s1971 + $0x20] sm:$0xf]
    %v1981 = vld [vmem:[%s1971 + $0x24] sm:$0xf]
    %v1982 = vld [vmem:[%s1971 + $0x28] sm:$0xf]
    %v1983 = vld [vmem:[%s1971 + $0x2c] sm:$0xf]
    %v1984 = vld [vmem:[%s1971 + $0x30] sm:$0xf]
    %v1985 = vld [vmem:[%s1971 + $0x34] sm:$0xf]
    %v1986 = vld [vmem:[%s1971 + $0x38] sm:$0xf]
    %v1987 = vld [vmem:[%s1971 + $0x3c] sm:$0xf]
    %v2004 = vunpack.c.l.b16 %v1972
    %v2005 = vunpack.c.l.b16 %v1973
    %v2006 = vunpack.c.l.b16 %v1974
    %v2007 = vunpack.c.l.b16 %v1975
    %v2008 = vunpack.c.l.b16 %v1976
    %v2009 = vunpack.c.l.b16 %v1977
    %v2010 = vunpack.c.l.b16 %v1978
    %v2011 = vunpack.c.l.b16 %v1979
    %v2012 = vunpack.c.l.b16 %v1980
    %v2013 = vunpack.c.l.b16 %v1981
    %v2014 = vunpack.c.l.b16 %v1982
    %v2015 = vunpack.c.l.b16 %v1983
    %v2016 = vunpack.c.l.b16 %v1984
    %v2017 = vunpack.c.l.b16 %v1985
    %v2018 = vunpack.c.l.b16 %v1986
    %v2019 = vunpack.c.l.b16 %v1987
    %v2020 = vpack.c.b16 %v2005, %v2004
    %v2021 = vpack.c.b16 %v2007, %v2006
    %v2022 = vpack.c.b16 %v2009, %v2008
    %v2023 = vpack.c.b16 %v2011, %v2010
    %v2024 = vpack.c.b16 %v2013, %v2012
    %v2025 = vpack.c.b16 %v2015, %v2014
    %v2026 = vpack.c.b16 %v2017, %v2016
    %v2027 = vpack.c.b16 %v2019, %v2018
    %2036 = vmatprep.subr.bf16.mxu0 0
    %2037 = vmatpush1.bf16.msra.mxu0 %v2020
    %2038 = vmatprep.subr.bf16.mxu0 0
    %2039 = vmatpush1.bf16.msra.mxu0 %v2021
    %2040 = vmatprep.subr.bf16.mxu0 0
    %2041 = vmatpush1.bf16.msra.mxu0 %v2022
    %2042 = vmatprep.subr.bf16.mxu0 0
    %2043 = vmatpush1.bf16.msra.mxu0 %v2023
    %2044 = vmatprep.subr.bf16.mxu0 0
    %2045 = vmatpush1.bf16.msra.mxu0 %v2024
    %2046 = vmatprep.subr.bf16.mxu0 0
    %2047 = vmatpush1.bf16.msra.mxu0 %v2025
    %2048 = vmatprep.subr.bf16.mxu0 0
    %2049 = vmatpush1.bf16.msra.mxu0 %v2026
    %2050 = vmatprep.subr.bf16.mxu0 0
    %2051 = vmatpush1.bf16.msra.mxu0 %v2027
    %2052 = vmatprep.subr.bf16.mxu0 0
    %2053 = vmatpush1.bf16.msra.mxu0 0
    %2054 = vmatprep.subr.bf16.mxu0 0
    %2055 = vmatpush1.bf16.msra.mxu0 0
    %2056 = vmatprep.subr.bf16.mxu0 0
    %2057 = vmatpush1.bf16.msra.mxu0 0
    %2058 = vmatprep.subr.bf16.mxu0 0
    %2059 = vmatpush1.bf16.msra.mxu0 0
    %2060 = vmatprep.subr.bf16.mxu0 0
    %2061 = vmatpush1.bf16.msra.mxu0 0
    %2062 = vmatprep.subr.bf16.mxu0 0
    %2063 = vmatpush1.bf16.msra.mxu0 0
    %2064 = vmatprep.subr.bf16.mxu0 0
    %2065 = vmatpush1.bf16.msra.mxu0 0
    %2066 = vmatprep.subr.bf16.mxu0 0
    %2067 = vmatpush1.bf16.msra.mxu0 0
    %2068 = vmatprep.mubr.bf16.mxu0 0
    %2069 = vmatmul.mubr.bf16.gmra.mrb[0].mxu0 %v1963
    %v2070 = vpop.f32.mrb[0].mxu0
    %v2071 = vadd.f32 0.0, %v2070
    %v2072 = vpop.f32.mrb[0].mxu0
    %v2073 = vpop.f32.mrb[0].mxu0
    %v2074 = vadd.f32 0.0, %v2073
    %v2075 = vpop.f32.mrb[0].mxu0
    %2076 = vmatprep.mubr.bf16.mxu0 0
    %2077 = vmatmul.mubr.bf16.gmra.mrb[0].mxu0 %v1964
    %v2078 = vpop.f32.mrb[0].mxu0
    %v2079 = vadd.f32 0.0, %v2078
    %v2080 = vpop.f32.mrb[0].mxu0
    %v2081 = vpop.f32.mrb[0].mxu0
    %v2082 = vadd.f32 0.0, %v2081
    %v2083 = vpop.f32.mrb[0].mxu0
    %2084 = vmatprep.mubr.bf16.mxu0 0
    %2085 = vmatmul.mubr.bf16.gmra.mrb[0].mxu0 %v1965
    %v2086 = vpop.f32.mrb[0].mxu0
    %v2087 = vadd.f32 0.0, %v2086
    %v2088 = vpop.f32.mrb[0].mxu0
    %v2089 = vpop.f32.mrb[0].mxu0
    %v2090 = vadd.f32 0.0, %v2089
    %v2091 = vpop.f32.mrb[0].mxu0
    %2092 = vmatprep.mubr.bf16.mxu0 0
    %2093 = vmatmul.mubr.bf16.gmra.mrb[0].mxu0 %v1966
    %v2094 = vpop.f32.mrb[0].mxu0
    %v2095 = vadd.f32 0.0, %v2094
    %v2096 = vpop.f32.mrb[0].mxu0
    %v2097 = vpop.f32.mrb[0].mxu0
    %v2098 = vadd.f32 0.0, %v2097
    %v2099 = vpop.f32.mrb[0].mxu0
    %2100 = vmatprep.mubr.bf16.mxu0 0
    %2101 = vmatmul.mubr.bf16.gmra.mrb[0].mxu0 %v1967
    %v2102 = vpop.f32.mrb[0].mxu0
    %v2103 = vadd.f32 0.0, %v2102
    %v2104 = vpop.f32.mrb[0].mxu0
    %v2105 = vpop.f32.mrb[0].mxu0
    %v2106 = vadd.f32 0.0, %v2105
    %v2107 = vpop.f32.mrb[0].mxu0
    %2108 = vmatprep.mubr.bf16.mxu0 0
    %2109 = vmatmul.mubr.bf16.gmra.mrb[0].mxu0 %v1968
    %v2110 = vpop.f32.mrb[0].mxu0
    %v2111 = vadd.f32 0.0, %v2110
    %v2112 = vpop.f32.mrb[0].mxu0
    %v2113 = vpop.f32.mrb[0].mxu0
    %v2114 = vadd.f32 0.0, %v2113
    %v2115 = vpop.f32.mrb[0].mxu0
    %2116 = vmatprep.mubr.bf16.mxu0 0
    %2117 = vmatmul.mubr.bf16.gmra.mrb[0].mxu0 %v1969
    %v2118 = vpop.f32.mrb[0].mxu0
    %v2119 = vadd.f32 0.0, %v2118
    %v2120 = vpop.f32.mrb[0].mxu0
    %v2121 = vpop.f32.mrb[0].mxu0
    %v2122 = vadd.f32 0.0, %v2121
    %v2123 = vpop.f32.mrb[0].mxu0
    %2124 = vmatprep.mubr.bf16.mxu0 0
    %2125 = vmatmul.mubr.bf16.gmra.mrb[0].mxu0 %v1970
    %v2126 = vpop.f32.mrb[0].mxu0
    %v2127 = vadd.f32 0.0, %v2126
    %v2128 = vpop.f32.mrb[0].mxu0
    %v2129 = vpop.f32.mrb[0].mxu0
    %v2130 = vadd.f32 0.0, %v2129
    %v2131 = vpop.f32.mrb[0].mxu0
    %2132 = vdwg.mxu0
    %v2133 = vadd.f32 %v1931, %v2071
    %v2134 = vadd.f32 %v1932, %v2074
    %v2135 = vadd.f32 %v1933, %v2079
    %v2136 = vadd.f32 %v1934, %v2082
    %v2137 = vadd.f32 %v1935, %v2087
    %v2138 = vadd.f32 %v1936, %v2090
    %v2139 = vadd.f32 %v1937, %v2095
    %v2140 = vadd.f32 %v1938, %v2098
    %v2141 = vadd.f32 %v1939, %v2103
    %v2142 = vadd.f32 %v1940, %v2106
    %v2143 = vadd.f32 %v1941, %v2111
    %v2144 = vadd.f32 %v1942, %v2114
    %v2145 = vadd.f32 %v1943, %v2119
    %v2146 = vadd.f32 %v1944, %v2122
    %v2147 = vadd.f32 %v1945, %v2127
    %v2148 = vadd.f32 %v1946, %v2130
    %v2149 = vld [vmem:[%s547 + $0x1] sm:$0xff]
    %v2150 = vld [vmem:[%s547 + $0x11] sm:$0xff]
    %v2151 = vld [vmem:[%s547 + $0x21] sm:$0xff]
    %v2152 = vld [vmem:[%s547 + $0x31] sm:$0xff]
    %v2153 = vld [vmem:[%s547 + $0x41] sm:$0xff]
    %v2154 = vld [vmem:[%s547 + $0x51] sm:$0xff]
    %v2155 = vld [vmem:[%s547 + $0x61] sm:$0xff]
    %v2156 = vld [vmem:[%s547 + $0x71] sm:$0xff]
    %v2157 = vld [vmem:[%s547 + $0x91] sm:$0xff]
    %v2158 = vld [vmem:[%s547 + $0xa1] sm:$0xff]
    %v2159 = vld [vmem:[%s547 + $0xb1] sm:$0xff]
    %v2160 = vld [vmem:[%s547 + $0xc1] sm:$0xff]
    %v2161 = vld [vmem:[%s547 + $0xd1] sm:$0xff]
    %v2162 = vld [vmem:[%s547 + $0xe1] sm:$0xff]
    %v2163 = vld [vmem:[%s547 + $0xf1] sm:$0xff]
    %v2164 = vld [vmem:[%s547 + $0x101] sm:$0xff]
    %v2165 = vpack.c.bf16 %v2150, %v2149
    %v2166 = vpack.c.bf16 %v2152, %v2151
    %v2167 = vpack.c.bf16 %v2154, %v2153
    %v2168 = vpack.c.bf16 %v2156, %v2155
    %v2169 = vpack.c.bf16 %v2158, %v2157
    %v2170 = vpack.c.bf16 %v2160, %v2159
    %v2171 = vpack.c.bf16 %v2162, %v2161
    %v2172 = vpack.c.bf16 %v2164, %v2163
    %s2173 = scalar_lea.vmem [#allocation7], 512
    %v2174 = vld [vmem:[%s2173] sm:$0xf]
    %v2175 = vld [vmem:[%s2173 + $0x4] sm:$0xf]
    %v2176 = vld [vmem:[%s2173 + $0x8] sm:$0xf]
    %v2177 = vld [vmem:[%s2173 + $0xc] sm:$0xf]
    %v2178 = vld [vmem:[%s2173 + $0x10] sm:$0xf]
    %v2179 = vld [vmem:[%s2173 + $0x14] sm:$0xf]
    %v2180 = vld [vmem:[%s2173 + $0x18] sm:$0xf]
    %v2181 = vld [vmem:[%s2173 + $0x1c] sm:$0xf]
    %v2182 = vld [vmem:[%s2173 + $0x20] sm:$0xf]
    %v2183 = vld [vmem:[%s2173 + $0x24] sm:$0xf]
    %v2184 = vld [vmem:[%s2173 + $0x28] sm:$0xf]
    %v2185 = vld [vmem:[%s2173 + $0x2c] sm:$0xf]
    %v2186 = vld [vmem:[%s2173 + $0x30] sm:$0xf]
    %v2187 = vld [vmem:[%s2173 + $0x34] sm:$0xf]
    %v2188 = vld [vmem:[%s2173 + $0x38] sm:$0xf]
    %v2189 = vld [vmem:[%s2173 + $0x3c] sm:$0xf]
    %v2206 = vunpack.c.l.b16 %v2174
    %v2207 = vunpack.c.l.b16 %v2175
    %v2208 = vunpack.c.l.b16 %v2176
    %v2209 = vunpack.c.l.b16 %v2177
    %v2210 = vunpack.c.l.b16 %v2178
    %v2211 = vunpack.c.l.b16 %v2179
    %v2212 = vunpack.c.l.b16 %v2180
    %v2213 = vunpack.c.l.b16 %v2181
    %v2214 = vunpack.c.l.b16 %v2182
    %v2215 = vunpack.c.l.b16 %v2183
    %v2216 = vunpack.c.l.b16 %v2184
    %v2217 = vunpack.c.l.b16 %v2185
    %v2218 = vunpack.c.l.b16 %v2186
    %v2219 = vunpack.c.l.b16 %v2187
    %v2220 = vunpack.c.l.b16 %v2188
    %v2221 = vunpack.c.l.b16 %v2189
    %v2222 = vpack.c.b16 %v2207, %v2206
    %v2223 = vpack.c.b16 %v2209, %v2208
    %v2224 = vpack.c.b16 %v2211, %v2210
    %v2225 = vpack.c.b16 %v2213, %v2212
    %v2226 = vpack.c.b16 %v2215, %v2214
    %v2227 = vpack.c.b16 %v2217, %v2216
    %v2228 = vpack.c.b16 %v2219, %v2218
    %v2229 = vpack.c.b16 %v2221, %v2220
    %2238 = vmatprep.subr.bf16.mxu0 0
    %2239 = vmatpush1.bf16.msra.mxu0 %v2222
    %2240 = vmatprep.subr.bf16.mxu0 0
    %2241 = vmatpush1.bf16.msra.mxu0 %v2223
    %2242 = vmatprep.subr.bf16.mxu0 0
    %2243 = vmatpush1.bf16.msra.mxu0 %v2224
    %2244 = vmatprep.subr.bf16.mxu0 0
    %2245 = vmatpush1.bf16.msra.mxu0 %v2225
    %2246 = vmatprep.subr.bf16.mxu0 0
    %2247 = vmatpush1.bf16.msra.mxu0 %v2226
    %2248 = vmatprep.subr.bf16.mxu0 0
    %2249 = vmatpush1.bf16.msra.mxu0 %v2227
    %2250 = vmatprep.subr.bf16.mxu0 0
    %2251 = vmatpush1.bf16.msra.mxu0 %v2228
    %2252 = vmatprep.subr.bf16.mxu0 0
    %2253 = vmatpush1.bf16.msra.mxu0 %v2229
    %2254 = vmatprep.subr.bf16.mxu0 0
    %2255 = vmatpush1.bf16.msra.mxu0 0
    %2256 = vmatprep.subr.bf16.mxu0 0
    %2257 = vmatpush1.bf16.msra.mxu0 0
    %2258 = vmatprep.subr.bf16.mxu0 0
    %2259 = vmatpush1.bf16.msra.mxu0 0
    %2260 = vmatprep.subr.bf16.mxu0 0
    %2261 = vmatpush1.bf16.msra.mxu0 0
    %2262 = vmatprep.subr.bf16.mxu0 0
    %2263 = vmatpush1.bf16.msra.mxu0 0
    %2264 = vmatprep.subr.bf16.mxu0 0
    %2265 = vmatpush1.bf16.msra.mxu0 0
    %2266 = vmatprep.subr.bf16.mxu0 0
    %2267 = vmatpush1.bf16.msra.mxu0 0
    %2268 = vmatprep.subr.bf16.mxu0 0
    %2269 = vmatpush1.bf16.msra.mxu0 0
    %2270 = vmatprep.mubr.bf16.mxu0 0
    %2271 = vmatmul.mubr.bf16.gmra.mrb[0].mxu0 %v2165
    %v2272 = vpop.f32.mrb[0].mxu0
    %v2273 = vadd.f32 0.0, %v2272
    %v2274 = vpop.f32.mrb[0].mxu0
    %v2275 = vpop.f32.mrb[0].mxu0
    %v2276 = vadd.f32 0.0, %v2275
    %v2277 = vpop.f32.mrb[0].mxu0
    %2278 = vmatprep.mubr.bf16.mxu0 0
    %2279 = vmatmul.mubr.bf16.gmra.mrb[0].mxu0 %v2166
    %v2280 = vpop.f32.mrb[0].mxu0
    %v2281 = vadd.f32 0.0, %v2280
    %v2282 = vpop.f32.mrb[0].mxu0
    %v2283 = vpop.f32.mrb[0].mxu0
    %v2284 = vadd.f32 0.0, %v2283
    %v2285 = vpop.f32.mrb[0].mxu0
    %2286 = vmatprep.mubr.bf16.mxu0 0
    %2287 = vmatmul.mubr.bf16.gmra.mrb[0].mxu0 %v2167
    %v2288 = vpop.f32.mrb[0].mxu0
    %v2289 = vadd.f32 0.0, %v2288
    %v2290 = vpop.f32.mrb[0].mxu0
    %v2291 = vpop.f32.mrb[0].mxu0
    %v2292 = vadd.f32 0.0, %v2291
    %v2293 = vpop.f32.mrb[0].mxu0
    %2294 = vmatprep.mubr.bf16.mxu0 0
    %2295 = vmatmul.mubr.bf16.gmra.mrb[0].mxu0 %v2168
    %v2296 = vpop.f32.mrb[0].mxu0
    %v2297 = vadd.f32 0.0, %v2296
    %v2298 = vpop.f32.mrb[0].mxu0
    %v2299 = vpop.f32.mrb[0].mxu0
    %v2300 = vadd.f32 0.0, %v2299
    %v2301 = vpop.f32.mrb[0].mxu0
    %2302 = vmatprep.mubr.bf16.mxu0 0
    %2303 = vmatmul.mubr.bf16.gmra.mrb[0].mxu0 %v2169
    %v2304 = vpop.f32.mrb[0].mxu0
    %v2305 = vadd.f32 0.0, %v2304
    %v2306 = vpop.f32.mrb[0].mxu0
    %v2307 = vpop.f32.mrb[0].mxu0
    %v2308 = vadd.f32 0.0, %v2307
    %v2309 = vpop.f32.mrb[0].mxu0
    %2310 = vmatprep.mubr.bf16.mxu0 0
    %2311 = vmatmul.mubr.bf16.gmra.mrb[0].mxu0 %v2170
    %v2312 = vpop.f32.mrb[0].mxu0
    %v2313 = vadd.f32 0.0, %v2312
    %v2314 = vpop.f32.mrb[0].mxu0
    %v2315 = vpop.f32.mrb[0].mxu0
    %v2316 = vadd.f32 0.0, %v2315
    %v2317 = vpop.f32.mrb[0].mxu0
    %2318 = vmatprep.mubr.bf16.mxu0 0
    %2319 = vmatmul.mubr.bf16.gmra.mrb[0].mxu0 %v2171
    %v2320 = vpop.f32.mrb[0].mxu0
    %v2321 = vadd.f32 0.0, %v2320
    %v2322 = vpop.f32.mrb[0].mxu0
    %v2323 = vpop.f32.mrb[0].mxu0
    %v2324 = vadd.f32 0.0, %v2323
    %v2325 = vpop.f32.mrb[0].mxu0
    %2326 = vmatprep.mubr.bf16.mxu0 0
    %2327 = vmatmul.mubr.bf16.gmra.mrb[0].mxu0 %v2172
    %v2328 = vpop.f32.mrb[0].mxu0
    %v2329 = vadd.f32 0.0, %v2328
    %v2330 = vpop.f32.mrb[0].mxu0
    %v2331 = vpop.f32.mrb[0].mxu0
    %v2332 = vadd.f32 0.0, %v2331
    %v2333 = vpop.f32.mrb[0].mxu0
    %2334 = vdwg.mxu0
    %v2335 = vadd.f32 %v2133, %v2273
    %v2336 = vadd.f32 %v2134, %v2276
    %v2337 = vadd.f32 %v2135, %v2281
    %v2338 = vadd.f32 %v2136, %v2284
    %v2339 = vadd.f32 %v2137, %v2289
    %v2340 = vadd.f32 %v2138, %v2292
    %v2341 = vadd.f32 %v2139, %v2297
    %v2342 = vadd.f32 %v2140, %v2300
    %v2343 = vadd.f32 %v2141, %v2305
    %v2344 = vadd.f32 %v2142, %v2308
    %v2345 = vadd.f32 %v2143, %v2313
    %v2346 = vadd.f32 %v2144, %v2316
    %v2347 = vadd.f32 %v2145, %v2321
    %v2348 = vadd.f32 %v2146, %v2324
    %v2349 = vadd.f32 %v2147, %v2329
    %v2350 = vadd.f32 %v2148, %v2332
    %v2351 = vld [vmem:[%s4] sm:$0x1]
    %v2353 = vlaneseq
    %v2354 = vshrl.u32 %v2353, 7
    %v2355 = vsub.s32 0, %v2354
    %v2356 = vrot.slane %v2351, %v2355
    %v2358 = vmul.f32 %v2335, %v2356
    %v2359 = vmul.f32 %v2336, %v2356
    %v2360 = vmul.f32 %v2337, %v2356
    %v2361 = vmul.f32 %v2338, %v2356
    %v2362 = vmul.f32 %v2339, %v2356
    %v2363 = vmul.f32 %v2340, %v2356
    %v2364 = vmul.f32 %v2341, %v2356
    %v2365 = vmul.f32 %v2342, %v2356
    %v2366 = vmul.f32 %v2343, %v2356
    %v2367 = vmul.f32 %v2344, %v2356
    %v2368 = vmul.f32 %v2345, %v2356
    %v2369 = vmul.f32 %v2346, %v2356
    %v2370 = vmul.f32 %v2347, %v2356
    %v2371 = vmul.f32 %v2348, %v2356
    %v2372 = vmul.f32 %v2349, %v2356
    %v2373 = vmul.f32 %v2350, %v2356
    %v2374 = vld [vmem:[%s5] sm:$0x1]
    %v2376 = vlaneseq
    %v2377 = vshrl.u32 %v2376, 7
    %v2378 = vsub.s32 0, %v2377
    %v2379 = vrot.slane %v2374, %v2378
    %v2381 = vadd.f32 %v2358, %v2379
    %v2382 = vadd.f32 %v2359, %v2379
    %v2383 = vadd.f32 %v2360, %v2379
    %v2384 = vadd.f32 %v2361, %v2379
    %v2385 = vadd.f32 %v2362, %v2379
    %v2386 = vadd.f32 %v2363, %v2379
    %v2387 = vadd.f32 %v2364, %v2379
    %v2388 = vadd.f32 %v2365, %v2379
    %v2389 = vadd.f32 %v2366, %v2379
    %v2390 = vadd.f32 %v2367, %v2379
    %v2391 = vadd.f32 %v2368, %v2379
    %v2392 = vadd.f32 %v2369, %v2379
    %v2393 = vadd.f32 %v2370, %v2379
    %v2394 = vadd.f32 %v2371, %v2379
    %v2395 = vadd.f32 %v2372, %v2379
    %v2396 = vadd.f32 %v2373, %v2379
    %v2397 = vmax.f32 %v2381, 0.0
    %v2398 = vmax.f32 %v2382, 0.0
    %v2399 = vmax.f32 %v2383, 0.0
    %v2400 = vmax.f32 %v2384, 0.0
    %v2401 = vmax.f32 %v2385, 0.0
    %v2402 = vmax.f32 %v2386, 0.0
    %v2403 = vmax.f32 %v2387, 0.0
    %v2404 = vmax.f32 %v2388, 0.0
    %v2405 = vmax.f32 %v2389, 0.0
    %v2406 = vmax.f32 %v2390, 0.0
    %v2407 = vmax.f32 %v2391, 0.0
    %v2408 = vmax.f32 %v2392, 0.0
    %v2409 = vmax.f32 %v2393, 0.0
    %v2410 = vmax.f32 %v2394, 0.0
    %v2411 = vmax.f32 %v2395, 0.0
    %v2412 = vmax.f32 %v2396, 0.0
    %s2413 = scalar_lea.vmem [#allocation3], 16
    %2414 = vst [vmem:[%s2413 + $0x1] sm:$0xff] %v2397
    %2415 = vst [vmem:[%s2413 + $0x11] sm:$0xff] %v2398
    %2416 = vst [vmem:[%s2413 + $0x21] sm:$0xff] %v2399
    %2417 = vst [vmem:[%s2413 + $0x31] sm:$0xff] %v2400
    %2418 = vst [vmem:[%s2413 + $0x41] sm:$0xff] %v2401
    %2419 = vst [vmem:[%s2413 + $0x51] sm:$0xff] %v2402
    %2420 = vst [vmem:[%s2413 + $0x61] sm:$0xff] %v2403
    %2421 = vst [vmem:[%s2413 + $0x71] sm:$0xff] %v2404
    %2422 = vst [vmem:[%s2413 + $0xa1] sm:$0xff] %v2405
    %2423 = vst [vmem:[%s2413 + $0xb1] sm:$0xff] %v2406
    %2424 = vst [vmem:[%s2413 + $0xc1] sm:$0xff] %v2407
    %2425 = vst [vmem:[%s2413 + $0xd1] sm:$0xff] %v2408
    %2426 = vst [vmem:[%s2413 + $0xe1] sm:$0xff] %v2409
    %2427 = vst [vmem:[%s2413 + $0xf1] sm:$0xff] %v2410
    %2428 = vst [vmem:[%s2413 + $0x101] sm:$0xff] %v2411
    %2429 = vst [vmem:[%s2413 + $0x111] sm:$0xff] %v2412
    %v2430 = vld [vmem:[%s301 + $0x1] sm:$0xff]
    %v2431 = vld [vmem:[%s301 + $0x11] sm:$0xff]
    %v2432 = vld [vmem:[%s301 + $0x21] sm:$0xff]
    %v2433 = vld [vmem:[%s301 + $0x31] sm:$0xff]
    %v2434 = vld [vmem:[%s301 + $0x41] sm:$0xff]
    %v2435 = vld [vmem:[%s301 + $0x51] sm:$0xff]
    %v2436 = vld [vmem:[%s301 + $0x61] sm:$0xff]
    %v2437 = vld [vmem:[%s301 + $0x71] sm:$0xff]
    %v2438 = vld [vmem:[%s301 + $0x91] sm:$0xff]
    %v2439 = vld [vmem:[%s301 + $0xa1] sm:$0xff]
    %v2440 = vld [vmem:[%s301 + $0xb1] sm:$0xff]
    %v2441 = vld [vmem:[%s301 + $0xc1] sm:$0xff]
    %v2442 = vld [vmem:[%s301 + $0xd1] sm:$0xff]
    %v2443 = vld [vmem:[%s301 + $0xe1] sm:$0xff]
    %v2444 = vld [vmem:[%s301 + $0xf1] sm:$0xff]
    %v2445 = vld [vmem:[%s301 + $0x101] sm:$0xff]
    %v2446 = vpack.c.bf16 %v2431, %v2430
    %v2447 = vpack.c.bf16 %v2433, %v2432
    %v2448 = vpack.c.bf16 %v2435, %v2434
    %v2449 = vpack.c.bf16 %v2437, %v2436
    %v2450 = vpack.c.bf16 %v2439, %v2438
    %v2451 = vpack.c.bf16 %v2441, %v2440
    %v2452 = vpack.c.bf16 %v2443, %v2442
    %v2453 = vpack.c.bf16 %v2445, %v2444
    %v2454 = vld [vmem:[#allocation10] sm:$0xf]
    %v2455 = vld [vmem:[#allocation10 + $0x4] sm:$0xf]
    %v2456 = vld [vmem:[#allocation10 + $0x8] sm:$0xf]
    %v2457 = vld [vmem:[#allocation10 + $0xc] sm:$0xf]
    %v2458 = vld [vmem:[#allocation10 + $0x10] sm:$0xf]
    %v2459 = vld [vmem:[#allocation10 + $0x14] sm:$0xf]
    %v2460 = vld [vmem:[#allocation10 + $0x18] sm:$0xf]
    %v2461 = vld [vmem:[#allocation10 + $0x1c] sm:$0xf]
    %v2462 = vld [vmem:[#allocation10 + $0x20] sm:$0xf]
    %v2463 = vld [vmem:[#allocation10 + $0x24] sm:$0xf]
    %v2464 = vld [vmem:[#allocation10 + $0x28] sm:$0xf]
    %v2465 = vld [vmem:[#allocation10 + $0x2c] sm:$0xf]
    %v2466 = vld [vmem:[#allocation10 + $0x30] sm:$0xf]
    %v2467 = vld [vmem:[#allocation10 + $0x34] sm:$0xf]
    %v2468 = vld [vmem:[#allocation10 + $0x38] sm:$0xf]
    %v2469 = vld [vmem:[#allocation10 + $0x3c] sm:$0xf]
    %v2470 = vld [vmem:[#allocation3] sm:$0xff]
    %v2471 = vld [vmem:[#allocation3 + $0x10] sm:$0xff]
    %v2472 = vld [vmem:[#allocation3 + $0x20] sm:$0xff]
    %v2473 = vld [vmem:[#allocation3 + $0x30] sm:$0xff]
    %v2474 = vld [vmem:[#allocation3 + $0x40] sm:$0xff]
    %v2475 = vld [vmem:[#allocation3 + $0x50] sm:$0xff]
    %v2476 = vld [vmem:[#allocation3 + $0x60] sm:$0xff]
    %v2477 = vld [vmem:[#allocation3 + $0x70] sm:$0xff]
    %v2478 = vld [vmem:[#allocation3 + $0xa0] sm:$0xff]
    %v2479 = vld [vmem:[#allocation3 + $0xb0] sm:$0xff]
    %v2480 = vld [vmem:[#allocation3 + $0xc0] sm:$0xff]
    %v2481 = vld [vmem:[#allocation3 + $0xd0] sm:$0xff]
    %v2482 = vld [vmem:[#allocation3 + $0xe0] sm:$0xff]
    %v2483 = vld [vmem:[#allocation3 + $0xf0] sm:$0xff]
    %v2484 = vld [vmem:[#allocation3 + $0x100] sm:$0xff]
    %v2485 = vld [vmem:[#allocation3 + $0x110] sm:$0xff]
    %v2486 = vpack.c.bf16 %v2471, %v2470
    %v2487 = vpack.c.bf16 %v2473, %v2472
    %v2488 = vpack.c.bf16 %v2475, %v2474
    %v2489 = vpack.c.bf16 %v2477, %v2476
    %v2490 = vpack.c.bf16 %v2479, %v2478
    %v2491 = vpack.c.bf16 %v2481, %v2480
    %v2492 = vpack.c.bf16 %v2483, %v2482
    %v2493 = vpack.c.bf16 %v2485, %v2484
    %v2494 = vld [vmem:[#allocation9] sm:$0xf]
    %v2495 = vld [vmem:[#allocation9 + $0x4] sm:$0xf]
    %v2496 = vld [vmem:[#allocation9 + $0x8] sm:$0xf]
    %v2497 = vld [vmem:[#allocation9 + $0xc] sm:$0xf]
    %v2498 = vld [vmem:[#allocation9 + $0x10] sm:$0xf]
    %v2499 = vld [vmem:[#allocation9 + $0x14] sm:$0xf]
    %v2500 = vld [vmem:[#allocation9 + $0x18] sm:$0xf]
    %v2501 = vld [vmem:[#allocation9 + $0x1c] sm:$0xf]
    %v2502 = vld [vmem:[#allocation9 + $0x20] sm:$0xf]
    %v2503 = vld [vmem:[#allocation9 + $0x24] sm:$0xf]
    %v2504 = vld [vmem:[#allocation9 + $0x28] sm:$0xf]
    %v2505 = vld [vmem:[#allocation9 + $0x2c] sm:$0xf]
    %v2506 = vld [vmem:[#allocation9 + $0x30] sm:$0xf]
    %v2507 = vld [vmem:[#allocation9 + $0x34] sm:$0xf]
    %v2508 = vld [vmem:[#allocation9 + $0x38] sm:$0xf]
    %v2509 = vld [vmem:[#allocation9 + $0x3c] sm:$0xf]
    %v2526 = vunpack.c.l.b16 %v2494
    %v2527 = vunpack.c.l.b16 %v2495
    %v2528 = vunpack.c.l.b16 %v2496
    %v2529 = vunpack.c.l.b16 %v2497
    %v2530 = vunpack.c.l.b16 %v2498
    %v2531 = vunpack.c.l.b16 %v2499
    %v2532 = vunpack.c.l.b16 %v2500
    %v2533 = vunpack.c.l.b16 %v2501
    %v2534 = vunpack.c.l.b16 %v2502
    %v2535 = vunpack.c.l.b16 %v2503
    %v2536 = vunpack.c.l.b16 %v2504
    %v2537 = vunpack.c.l.b16 %v2505
    %v2538 = vunpack.c.l.b16 %v2506
    %v2539 = vunpack.c.l.b16 %v2507
    %v2540 = vunpack.c.l.b16 %v2508
    %v2541 = vunpack.c.l.b16 %v2509
    %v2542 = vpack.c.b16 %v2527, %v2526
    %v2543 = vpack.c.b16 %v2529, %v2528
    %v2544 = vpack.c.b16 %v2531, %v2530
    %v2545 = vpack.c.b16 %v2533, %v2532
    %v2546 = vpack.c.b16 %v2535, %v2534
    %v2547 = vpack.c.b16 %v2537, %v2536
    %v2548 = vpack.c.b16 %v2539, %v2538
    %v2549 = vpack.c.b16 %v2541, %v2540
    %2558 = vmatprep.subr.bf16.mxu0 0
    %2559 = vmatpush1.bf16.msra.mxu0 %v2542
    %2560 = vmatprep.subr.bf16.mxu0 0
    %2561 = vmatpush1.bf16.msra.mxu0 %v2543
    %2562 = vmatprep.subr.bf16.mxu0 0
    %2563 = vmatpush1.bf16.msra.mxu0 %v2544
    %2564 = vmatprep.subr.bf16.mxu0 0
    %2565 = vmatpush1.bf16.msra.mxu0 %v2545
    %2566 = vmatprep.subr.bf16.mxu0 0
    %2567 = vmatpush1.bf16.msra.mxu0 %v2546
    %2568 = vmatprep.subr.bf16.mxu0 0
    %2569 = vmatpush1.bf16.msra.mxu0 %v2547
    %2570 = vmatprep.subr.bf16.mxu0 0
    %2571 = vmatpush1.bf16.msra.mxu0 %v2548
    %2572 = vmatprep.subr.bf16.mxu0 0
    %2573 = vmatpush1.bf16.msra.mxu0 %v2549
    %2574 = vmatprep.subr.bf16.mxu0 0
    %2575 = vmatpush1.bf16.msra.mxu0 0
    %2576 = vmatprep.subr.bf16.mxu0 0
    %2577 = vmatpush1.bf16.msra.mxu0 0
    %2578 = vmatprep.subr.bf16.mxu0 0
    %2579 = vmatpush1.bf16.msra.mxu0 0
    %2580 = vmatprep.subr.bf16.mxu0 0
    %2581 = vmatpush1.bf16.msra.mxu0 0
    %2582 = vmatprep.subr.bf16.mxu0 0
    %2583 = vmatpush1.bf16.msra.mxu0 0
    %2584 = vmatprep.subr.bf16.mxu0 0
    %2585 = vmatpush1.bf16.msra.mxu0 0
    %2586 = vmatprep.subr.bf16.mxu0 0
    %2587 = vmatpush1.bf16.msra.mxu0 0
    %2588 = vmatprep.subr.bf16.mxu0 0
    %2589 = vmatpush1.bf16.msra.mxu0 0
    %2590 = vmatprep.mubr.bf16.mxu0 0
    %2591 = vmatmul.mubr.bf16.gmra.mrb[0].mxu0 %v2486
    %v2592 = vpop.f32.mrb[0].mxu0
    %v2593 = vadd.f32 0.0, %v2592
    %v2594 = vpop.f32.mrb[0].mxu0
    %v2595 = vpop.f32.mrb[0].mxu0
    %v2596 = vadd.f32 0.0, %v2595
    %v2597 = vpop.f32.mrb[0].mxu0
    %2598 = vmatprep.mubr.bf16.mxu0 0
    %2599 = vmatmul.mubr.bf16.gmra.mrb[0].mxu0 %v2487
    %v2600 = vpop.f32.mrb[0].mxu0
    %v2601 = vadd.f32 0.0, %v2600
    %v2602 = vpop.f32.mrb[0].mxu0
    %v2603 = vpop.f32.mrb[0].mxu0
    %v2604 = vadd.f32 0.0, %v2603
    %v2605 = vpop.f32.mrb[0].mxu0
    %2606 = vmatprep.mubr.bf16.mxu0 0
    %2607 = vmatmul.mubr.bf16.gmra.mrb[0].mxu0 %v2488
    %v2608 = vpop.f32.mrb[0].mxu0
    %v2609 = vadd.f32 0.0, %v2608
    %v2610 = vpop.f32.mrb[0].mxu0
    %v2611 = vpop.f32.mrb[0].mxu0
    %v2612 = vadd.f32 0.0, %v2611
    %v2613 = vpop.f32.mrb[0].mxu0
    %2614 = vmatprep.mubr.bf16.mxu0 0
    %2615 = vmatmul.mubr.bf16.gmra.mrb[0].mxu0 %v2489
    %v2616 = vpop.f32.mrb[0].mxu0
    %v2617 = vadd.f32 0.0, %v2616
    %v2618 = vpop.f32.mrb[0].mxu0
    %v2619 = vpop.f32.mrb[0].mxu0
    %v2620 = vadd.f32 0.0, %v2619
    %v2621 = vpop.f32.mrb[0].mxu0
    %2622 = vmatprep.mubr.bf16.mxu0 0
    %2623 = vmatmul.mubr.bf16.gmra.mrb[0].mxu0 %v2490
    %v2624 = vpop.f32.mrb[0].mxu0
    %v2625 = vadd.f32 0.0, %v2624
    %v2626 = vpop.f32.mrb[0].mxu0
    %v2627 = vpop.f32.mrb[0].mxu0
    %v2628 = vadd.f32 0.0, %v2627
    %v2629 = vpop.f32.mrb[0].mxu0
    %2630 = vmatprep.mubr.bf16.mxu0 0
    %2631 = vmatmul.mubr.bf16.gmra.mrb[0].mxu0 %v2491
    %v2632 = vpop.f32.mrb[0].mxu0
    %v2633 = vadd.f32 0.0, %v2632
    %v2634 = vpop.f32.mrb[0].mxu0
    %v2635 = vpop.f32.mrb[0].mxu0
    %v2636 = vadd.f32 0.0, %v2635
    %v2637 = vpop.f32.mrb[0].mxu0
    %2638 = vmatprep.mubr.bf16.mxu0 0
    %2639 = vmatmul.mubr.bf16.gmra.mrb[0].mxu0 %v2492
    %v2640 = vpop.f32.mrb[0].mxu0
    %v2641 = vadd.f32 0.0, %v2640
    %v2642 = vpop.f32.mrb[0].mxu0
    %v2643 = vpop.f32.mrb[0].mxu0
    %v2644 = vadd.f32 0.0, %v2643
    %v2645 = vpop.f32.mrb[0].mxu0
    %2646 = vmatprep.mubr.bf16.mxu0 0
    %2647 = vmatmul.mubr.bf16.gmra.mrb[0].mxu0 %v2493
    %v2648 = vpop.f32.mrb[0].mxu0
    %v2649 = vadd.f32 0.0, %v2648
    %v2650 = vpop.f32.mrb[0].mxu0
    %v2651 = vpop.f32.mrb[0].mxu0
    %v2652 = vadd.f32 0.0, %v2651
    %v2653 = vpop.f32.mrb[0].mxu0
    %2654 = vdwg.mxu0
    %v2671 = vunpack.c.l.b16 %v2454
    %v2672 = vunpack.c.l.b16 %v2455
    %v2673 = vunpack.c.l.b16 %v2456
    %v2674 = vunpack.c.l.b16 %v2457
    %v2675 = vunpack.c.l.b16 %v2458
    %v2676 = vunpack.c.l.b16 %v2459
    %v2677 = vunpack.c.l.b16 %v2460
    %v2678 = vunpack.c.l.b16 %v2461
    %v2679 = vunpack.c.l.b16 %v2462
    %v2680 = vunpack.c.l.b16 %v2463
    %v2681 = vunpack.c.l.b16 %v2464
    %v2682 = vunpack.c.l.b16 %v2465
    %v2683 = vunpack.c.l.b16 %v2466
    %v2684 = vunpack.c.l.b16 %v2467
    %v2685 = vunpack.c.l.b16 %v2468
    %v2686 = vunpack.c.l.b16 %v2469
    %v2687 = vpack.c.b16 %v2672, %v2671
    %v2688 = vpack.c.b16 %v2674, %v2673
    %v2689 = vpack.c.b16 %v2676, %v2675
    %v2690 = vpack.c.b16 %v2678, %v2677
    %v2691 = vpack.c.b16 %v2680, %v2679
    %v2692 = vpack.c.b16 %v2682, %v2681
    %v2693 = vpack.c.b16 %v2684, %v2683
    %v2694 = vpack.c.b16 %v2686, %v2685
    %2703 = vmatprep.subr.bf16.mxu0 0
    %2704 = vmatpush1.bf16.msra.mxu0 %v2687
    %2705 = vmatprep.subr.bf16.mxu0 0
    %2706 = vmatpush1.bf16.msra.mxu0 %v2688
    %2707 = vmatprep.subr.bf16.mxu0 0
    %2708 = vmatpush1.bf16.msra.mxu0 %v2689
    %2709 = vmatprep.subr.bf16.mxu0 0
    %2710 = vmatpush1.bf16.msra.mxu0 %v2690
    %2711 = vmatprep.subr.bf16.mxu0 0
    %2712 = vmatpush1.bf16.msra.mxu0 %v2691
    %2713 = vmatprep.subr.bf16.mxu0 0
    %2714 = vmatpush1.bf16.msra.mxu0 %v2692
    %2715 = vmatprep.subr.bf16.mxu0 0
    %2716 = vmatpush1.bf16.msra.mxu0 %v2693
    %2717 = vmatprep.subr.bf16.mxu0 0
    %2718 = vmatpush1.bf16.msra.mxu0 %v2694
    %2719 = vmatprep.subr.bf16.mxu0 0
    %2720 = vmatpush1.bf16.msra.mxu0 0
    %2721 = vmatprep.subr.bf16.mxu0 0
    %2722 = vmatpush1.bf16.msra.mxu0 0
    %2723 = vmatprep.subr.bf16.mxu0 0
    %2724 = vmatpush1.bf16.msra.mxu0 0
    %2725 = vmatprep.subr.bf16.mxu0 0
    %2726 = vmatpush1.bf16.msra.mxu0 0
    %2727 = vmatprep.subr.bf16.mxu0 0
    %2728 = vmatpush1.bf16.msra.mxu0 0
    %2729 = vmatprep.subr.bf16.mxu0 0
    %2730 = vmatpush1.bf16.msra.mxu0 0
    %2731 = vmatprep.subr.bf16.mxu0 0
    %2732 = vmatpush1.bf16.msra.mxu0 0
    %2733 = vmatprep.subr.bf16.mxu0 0
    %2734 = vmatpush1.bf16.msra.mxu0 0
    %2735 = vmatprep.mubr.bf16.mxu0 0
    %2736 = vmatmul.mubr.bf16.gmra.mrb[0].mxu0 %v2446
    %v2737 = vpop.f32.mrb[0].mxu0
    %v2738 = vadd.f32 %v2593, %v2737
    %v2739 = vpop.f32.mrb[0].mxu0
    %v2740 = vpop.f32.mrb[0].mxu0
    %v2741 = vadd.f32 %v2596, %v2740
    %v2742 = vpop.f32.mrb[0].mxu0
    %2743 = vmatprep.mubr.bf16.mxu0 0
    %2744 = vmatmul.mubr.bf16.gmra.mrb[0].mxu0 %v2447
    %v2745 = vpop.f32.mrb[0].mxu0
    %v2746 = vadd.f32 %v2601, %v2745
    %v2747 = vpop.f32.mrb[0].mxu0
    %v2748 = vpop.f32.mrb[0].mxu0
    %v2749 = vadd.f32 %v2604, %v2748
    %v2750 = vpop.f32.mrb[0].mxu0
    %2751 = vmatprep.mubr.bf16.mxu0 0
    %2752 = vmatmul.mubr.bf16.gmra.mrb[0].mxu0 %v2448
    %v2753 = vpop.f32.mrb[0].mxu0
    %v2754 = vadd.f32 %v2609, %v2753
    %v2755 = vpop.f32.mrb[0].mxu0
    %v2756 = vpop.f32.mrb[0].mxu0
    %v2757 = vadd.f32 %v2612, %v2756
    %v2758 = vpop.f32.mrb[0].mxu0
    %2759 = vmatprep.mubr.bf16.mxu0 0
    %2760 = vmatmul.mubr.bf16.gmra.mrb[0].mxu0 %v2449
    %v2761 = vpop.f32.mrb[0].mxu0
    %v2762 = vadd.f32 %v2617, %v2761
    %v2763 = vpop.f32.mrb[0].mxu0
    %v2764 = vpop.f32.mrb[0].mxu0
    %v2765 = vadd.f32 %v2620, %v2764
    %v2766 = vpop.f32.mrb[0].mxu0
    %2767 = vmatprep.mubr.bf16.mxu0 0
    %2768 = vmatmul.mubr.bf16.gmra.mrb[0].mxu0 %v2450
    %v2769 = vpop.f32.mrb[0].mxu0
    %v2770 = vadd.f32 %v2625, %v2769
    %v2771 = vpop.f32.mrb[0].mxu0
    %v2772 = vpop.f32.mrb[0].mxu0
    %v2773 = vadd.f32 %v2628, %v2772
    %v2774 = vpop.f32.mrb[0].mxu0
    %2775 = vmatprep.mubr.bf16.mxu0 0
    %2776 = vmatmul.mubr.bf16.gmra.mrb[0].mxu0 %v2451
    %v2777 = vpop.f32.mrb[0].mxu0
    %v2778 = vadd.f32 %v2633, %v2777
    %v2779 = vpop.f32.mrb[0].mxu0
    %v2780 = vpop.f32.mrb[0].mxu0
    %v2781 = vadd.f32 %v2636, %v2780
    %v2782 = vpop.f32.mrb[0].mxu0
    %2783 = vmatprep.mubr.bf16.mxu0 0
    %2784 = vmatmul.mubr.bf16.gmra.mrb[0].mxu0 %v2452
    %v2785 = vpop.f32.mrb[0].mxu0
    %v2786 = vadd.f32 %v2641, %v2785
    %v2787 = vpop.f32.mrb[0].mxu0
    %v2788 = vpop.f32.mrb[0].mxu0
    %v2789 = vadd.f32 %v2644, %v2788
    %v2790 = vpop.f32.mrb[0].mxu0
    %2791 = vmatprep.mubr.bf16.mxu0 0
    %2792 = vmatmul.mubr.bf16.gmra.mrb[0].mxu0 %v2453
    %v2793 = vpop.f32.mrb[0].mxu0
    %v2794 = vadd.f32 %v2649, %v2793
    %v2795 = vpop.f32.mrb[0].mxu0
    %v2796 = vpop.f32.mrb[0].mxu0
    %v2797 = vadd.f32 %v2652, %v2796
    %v2798 = vpop.f32.mrb[0].mxu0
    %2799 = vdwg.mxu0
    %v2800 = vld [vmem:[#allocation3 + $0x1] sm:$0xff]
    %v2801 = vld [vmem:[#allocation3 + $0x11] sm:$0xff]
    %v2802 = vld [vmem:[#allocation3 + $0x21] sm:$0xff]
    %v2803 = vld [vmem:[#allocation3 + $0x31] sm:$0xff]
    %v2804 = vld [vmem:[#allocation3 + $0x41] sm:$0xff]
    %v2805 = vld [vmem:[#allocation3 + $0x51] sm:$0xff]
    %v2806 = vld [vmem:[#allocation3 + $0x61] sm:$0xff]
    %v2807 = vld [vmem:[#allocation3 + $0x71] sm:$0xff]
    %v2808 = vld [vmem:[#allocation3 + $0xa1] sm:$0xff]
    %v2809 = vld [vmem:[#allocation3 + $0xb1] sm:$0xff]
    %v2810 = vld [vmem:[#allocation3 + $0xc1] sm:$0xff]
    %v2811 = vld [vmem:[#allocation3 + $0xd1] sm:$0xff]
    %v2812 = vld [vmem:[#allocation3 + $0xe1] sm:$0xff]
    %v2813 = vld [vmem:[#allocation3 + $0xf1] sm:$0xff]
    %v2814 = vld [vmem:[#allocation3 + $0x101] sm:$0xff]
    %v2815 = vld [vmem:[#allocation3 + $0x111] sm:$0xff]
    %v2816 = vpack.c.bf16 %v2801, %v2800
    %v2817 = vpack.c.bf16 %v2803, %v2802
    %v2818 = vpack.c.bf16 %v2805, %v2804
    %v2819 = vpack.c.bf16 %v2807, %v2806
    %v2820 = vpack.c.bf16 %v2809, %v2808
    %v2821 = vpack.c.bf16 %v2811, %v2810
    %v2822 = vpack.c.bf16 %v2813, %v2812
    %v2823 = vpack.c.bf16 %v2815, %v2814
    %s2824 = scalar_lea.vmem [#allocation9], 64
    %v2825 = vld [vmem:[%s2824] sm:$0xf]
    %v2826 = vld [vmem:[%s2824 + $0x4] sm:$0xf]
    %v2827 = vld [vmem:[%s2824 + $0x8] sm:$0xf]
    %v2828 = vld [vmem:[%s2824 + $0xc] sm:$0xf]
    %v2829 = vld [vmem:[%s2824 + $0x10] sm:$0xf]
    %v2830 = vld [vmem:[%s2824 + $0x14] sm:$0xf]
    %v2831 = vld [vmem:[%s2824 + $0x18] sm:$0xf]
    %v2832 = vld [vmem:[%s2824 + $0x1c] sm:$0xf]
    %v2833 = vld [vmem:[%s2824 + $0x20] sm:$0xf]
    %v2834 = vld [vmem:[%s2824 + $0x24] sm:$0xf]
    %v2835 = vld [vmem:[%s2824 + $0x28] sm:$0xf]
    %v2836 = vld [vmem:[%s2824 + $0x2c] sm:$0xf]
    %v2837 = vld [vmem:[%s2824 + $0x30] sm:$0xf]
    %v2838 = vld [vmem:[%s2824 + $0x34] sm:$0xf]
    %v2839 = vld [vmem:[%s2824 + $0x38] sm:$0xf]
    %v2840 = vld [vmem:[%s2824 + $0x3c] sm:$0xf]
    %v2857 = vunpack.c.l.b16 %v2825
    %v2858 = vunpack.c.l.b16 %v2826
    %v2859 = vunpack.c.l.b16 %v2827
    %v2860 = vunpack.c.l.b16 %v2828
    %v2861 = vunpack.c.l.b16 %v2829
    %v2862 = vunpack.c.l.b16 %v2830
    %v2863 = vunpack.c.l.b16 %v2831
    %v2864 = vunpack.c.l.b16 %v2832
    %v2865 = vunpack.c.l.b16 %v2833
    %v2866 = vunpack.c.l.b16 %v2834
    %v2867 = vunpack.c.l.b16 %v2835
    %v2868 = vunpack.c.l.b16 %v2836
    %v2869 = vunpack.c.l.b16 %v2837
    %v2870 = vunpack.c.l.b16 %v2838
    %v2871 = vunpack.c.l.b16 %v2839
    %v2872 = vunpack.c.l.b16 %v2840
    %v2873 = vpack.c.b16 %v2858, %v2857
    %v2874 = vpack.c.b16 %v2860, %v2859
    %v2875 = vpack.c.b16 %v2862, %v2861
    %v2876 = vpack.c.b16 %v2864, %v2863
    %v2877 = vpack.c.b16 %v2866, %v2865
    %v2878 = vpack.c.b16 %v2868, %v2867
    %v2879 = vpack.c.b16 %v2870, %v2869
    %v2880 = vpack.c.b16 %v2872, %v2871
    %2889 = vmatprep.subr.bf16.mxu0 0
    %2890 = vmatpush1.bf16.msra.mxu0 %v2873
    %2891 = vmatprep.subr.bf16.mxu0 0
    %2892 = vmatpush1.bf16.msra.mxu0 %v2874
    %2893 = vmatprep.subr.bf16.mxu0 0
    %2894 = vmatpush1.bf16.msra.mxu0 %v2875
    %2895 = vmatprep.subr.bf16.mxu0 0
    %2896 = vmatpush1.bf16.msra.mxu0 %v2876
    %2897 = vmatprep.subr.bf16.mxu0 0
    %2898 = vmatpush1.bf16.msra.mxu0 %v2877
    %2899 = vmatprep.subr.bf16.mxu0 0
    %2900 = vmatpush1.bf16.msra.mxu0 %v2878
    %2901 = vmatprep.subr.bf16.mxu0 0
    %2902 = vmatpush1.bf16.msra.mxu0 %v2879
    %2903 = vmatprep.subr.bf16.mxu0 0
    %2904 = vmatpush1.bf16.msra.mxu0 %v2880
    %2905 = vmatprep.subr.bf16.mxu0 0
    %2906 = vmatpush1.bf16.msra.mxu0 0
    %2907 = vmatprep.subr.bf16.mxu0 0
    %2908 = vmatpush1.bf16.msra.mxu0 0
    %2909 = vmatprep.subr.bf16.mxu0 0
    %2910 = vmatpush1.bf16.msra.mxu0 0
    %2911 = vmatprep.subr.bf16.mxu0 0
    %2912 = vmatpush1.bf16.msra.mxu0 0
    %2913 = vmatprep.subr.bf16.mxu0 0
    %2914 = vmatpush1.bf16.msra.mxu0 0
    %2915 = vmatprep.subr.bf16.mxu0 0
    %2916 = vmatpush1.bf16.msra.mxu0 0
    %2917 = vmatprep.subr.bf16.mxu0 0
    %2918 = vmatpush1.bf16.msra.mxu0 0
    %2919 = vmatprep.subr.bf16.mxu0 0
    %2920 = vmatpush1.bf16.msra.mxu0 0
    %2921 = vmatprep.mubr.bf16.mxu0 0
    %2922 = vmatmul.mubr.bf16.gmra.mrb[0].mxu0 %v2816
    %v2923 = vpop.f32.mrb[0].mxu0
    %v2924 = vadd.f32 0.0, %v2923
    %v2925 = vpop.f32.mrb[0].mxu0
    %v2926 = vpop.f32.mrb[0].mxu0
    %v2927 = vadd.f32 0.0, %v2926
    %v2928 = vpop.f32.mrb[0].mxu0
    %2929 = vmatprep.mubr.bf16.mxu0 0
    %2930 = vmatmul.mubr.bf16.gmra.mrb[0].mxu0 %v2817
    %v2931 = vpop.f32.mrb[0].mxu0
    %v2932 = vadd.f32 0.0, %v2931
    %v2933 = vpop.f32.mrb[0].mxu0
    %v2934 = vpop.f32.mrb[0].mxu0
    %v2935 = vadd.f32 0.0, %v2934
    %v2936 = vpop.f32.mrb[0].mxu0
    %2937 = vmatprep.mubr.bf16.mxu0 0
    %2938 = vmatmul.mubr.bf16.gmra.mrb[0].mxu0 %v2818
    %v2939 = vpop.f32.mrb[0].mxu0
    %v2940 = vadd.f32 0.0, %v2939
    %v2941 = vpop.f32.mrb[0].mxu0
    %v2942 = vpop.f32.mrb[0].mxu0
    %v2943 = vadd.f32 0.0, %v2942
    %v2944 = vpop.f32.mrb[0].mxu0
    %2945 = vmatprep.mubr.bf16.mxu0 0
    %2946 = vmatmul.mubr.bf16.gmra.mrb[0].mxu0 %v2819
    %v2947 = vpop.f32.mrb[0].mxu0
    %v2948 = vadd.f32 0.0, %v2947
    %v2949 = vpop.f32.mrb[0].mxu0
    %v2950 = vpop.f32.mrb[0].mxu0
    %v2951 = vadd.f32 0.0, %v2950
    %v2952 = vpop.f32.mrb[0].mxu0
    %2953 = vmatprep.mubr.bf16.mxu0 0
    %2954 = vmatmul.mubr.bf16.gmra.mrb[0].mxu0 %v2820
    %v2955 = vpop.f32.mrb[0].mxu0
    %v2956 = vadd.f32 0.0, %v2955
    %v2957 = vpop.f32.mrb[0].mxu0
    %v2958 = vpop.f32.mrb[0].mxu0
    %v2959 = vadd.f32 0.0, %v2958
    %v2960 = vpop.f32.mrb[0].mxu0
    %2961 = vmatprep.mubr.bf16.mxu0 0
    %2962 = vmatmul.mubr.bf16.gmra.mrb[0].mxu0 %v2821
    %v2963 = vpop.f32.mrb[0].mxu0
    %v2964 = vadd.f32 0.0, %v2963
    %v2965 = vpop.f32.mrb[0].mxu0
    %v2966 = vpop.f32.mrb[0].mxu0
    %v2967 = vadd.f32 0.0, %v2966
    %v2968 = vpop.f32.mrb[0].mxu0
    %2969 = vmatprep.mubr.bf16.mxu0 0
    %2970 = vmatmul.mubr.bf16.gmra.mrb[0].mxu0 %v2822
    %v2971 = vpop.f32.mrb[0].mxu0
    %v2972 = vadd.f32 0.0, %v2971
    %v2973 = vpop.f32.mrb[0].mxu0
    %v2974 = vpop.f32.mrb[0].mxu0
    %v2975 = vadd.f32 0.0, %v2974
    %v2976 = vpop.f32.mrb[0].mxu0
    %2977 = vmatprep.mubr.bf16.mxu0 0
    %2978 = vmatmul.mubr.bf16.gmra.mrb[0].mxu0 %v2823
    %v2979 = vpop.f32.mrb[0].mxu0
    %v2980 = vadd.f32 0.0, %v2979
    %v2981 = vpop.f32.mrb[0].mxu0
    %v2982 = vpop.f32.mrb[0].mxu0
    %v2983 = vadd.f32 0.0, %v2982
    %v2984 = vpop.f32.mrb[0].mxu0
    %2985 = vdwg.mxu0
    %v2986 = vadd.f32 %v2738, %v2924
    %v2987 = vadd.f32 %v2741, %v2927
    %v2988 = vadd.f32 %v2746, %v2932
    %v2989 = vadd.f32 %v2749, %v2935
    %v2990 = vadd.f32 %v2754, %v2940
    %v2991 = vadd.f32 %v2757, %v2943
    %v2992 = vadd.f32 %v2762, %v2948
    %v2993 = vadd.f32 %v2765, %v2951
    %v2994 = vadd.f32 %v2770, %v2956
    %v2995 = vadd.f32 %v2773, %v2959
    %v2996 = vadd.f32 %v2778, %v2964
    %v2997 = vadd.f32 %v2781, %v2967
    %v2998 = vadd.f32 %v2786, %v2972
    %v2999 = vadd.f32 %v2789, %v2975
    %v3000 = vadd.f32 %v2794, %v2980
    %v3001 = vadd.f32 %v2797, %v2983
    %v3002 = vld [vmem:[#allocation3 + $0x2] sm:$0xff]
    %v3003 = vld [vmem:[#allocation3 + $0x12] sm:$0xff]
    %v3004 = vld [vmem:[#allocation3 + $0x22] sm:$0xff]
    %v3005 = vld [vmem:[#allocation3 + $0x32] sm:$0xff]
    %v3006 = vld [vmem:[#allocation3 + $0x42] sm:$0xff]
    %v3007 = vld [vmem:[#allocation3 + $0x52] sm:$0xff]
    %v3008 = vld [vmem:[#allocation3 + $0x62] sm:$0xff]
    %v3009 = vld [vmem:[#allocation3 + $0x72] sm:$0xff]
    %v3010 = vld [vmem:[#allocation3 + $0xa2] sm:$0xff]
    %v3011 = vld [vmem:[#allocation3 + $0xb2] sm:$0xff]
    %v3012 = vld [vmem:[#allocation3 + $0xc2] sm:$0xff]
    %v3013 = vld [vmem:[#allocation3 + $0xd2] sm:$0xff]
    %v3014 = vld [vmem:[#allocation3 + $0xe2] sm:$0xff]
    %v3015 = vld [vmem:[#allocation3 + $0xf2] sm:$0xff]
    %v3016 = vld [vmem:[#allocation3 + $0x102] sm:$0xff]
    %v3017 = vld [vmem:[#allocation3 + $0x112] sm:$0xff]
    %v3018 = vpack.c.bf16 %v3003, %v3002
    %v3019 = vpack.c.bf16 %v3005, %v3004
    %v3020 = vpack.c.bf16 %v3007, %v3006
    %v3021 = vpack.c.bf16 %v3009, %v3008
    %v3022 = vpack.c.bf16 %v3011, %v3010
    %v3023 = vpack.c.bf16 %v3013, %v3012
    %v3024 = vpack.c.bf16 %v3015, %v3014
    %v3025 = vpack.c.bf16 %v3017, %v3016
    %s3026 = scalar_lea.vmem [#allocation9], 128
    %v3027 = vld [vmem:[%s3026] sm:$0xf]
    %v3028 = vld [vmem:[%s3026 + $0x4] sm:$0xf]
    %v3029 = vld [vmem:[%s3026 + $0x8] sm:$0xf]
    %v3030 = vld [vmem:[%s3026 + $0xc] sm:$0xf]
    %v3031 = vld [vmem:[%s3026 + $0x10] sm:$0xf]
    %v3032 = vld [vmem:[%s3026 + $0x14] sm:$0xf]
    %v3033 = vld [vmem:[%s3026 + $0x18] sm:$0xf]
    %v3034 = vld [vmem:[%s3026 + $0x1c] sm:$0xf]
    %v3035 = vld [vmem:[%s3026 + $0x20] sm:$0xf]
    %v3036 = vld [vmem:[%s3026 + $0x24] sm:$0xf]
    %v3037 = vld [vmem:[%s3026 + $0x28] sm:$0xf]
    %v3038 = vld [vmem:[%s3026 + $0x2c] sm:$0xf]
    %v3039 = vld [vmem:[%s3026 + $0x30] sm:$0xf]
    %v3040 = vld [vmem:[%s3026 + $0x34] sm:$0xf]
    %v3041 = vld [vmem:[%s3026 + $0x38] sm:$0xf]
    %v3042 = vld [vmem:[%s3026 + $0x3c] sm:$0xf]
    %v3059 = vunpack.c.l.b16 %v3027
    %v3060 = vunpack.c.l.b16 %v3028
    %v3061 = vunpack.c.l.b16 %v3029
    %v3062 = vunpack.c.l.b16 %v3030
    %v3063 = vunpack.c.l.b16 %v3031
    %v3064 = vunpack.c.l.b16 %v3032
    %v3065 = vunpack.c.l.b16 %v3033
    %v3066 = vunpack.c.l.b16 %v3034
    %v3067 = vunpack.c.l.b16 %v3035
    %v3068 = vunpack.c.l.b16 %v3036
    %v3069 = vunpack.c.l.b16 %v3037
    %v3070 = vunpack.c.l.b16 %v3038
    %v3071 = vunpack.c.l.b16 %v3039
    %v3072 = vunpack.c.l.b16 %v3040
    %v3073 = vunpack.c.l.b16 %v3041
    %v3074 = vunpack.c.l.b16 %v3042
    %v3075 = vpack.c.b16 %v3060, %v3059
    %v3076 = vpack.c.b16 %v3062, %v3061
    %v3077 = vpack.c.b16 %v3064, %v3063
    %v3078 = vpack.c.b16 %v3066, %v3065
    %v3079 = vpack.c.b16 %v3068, %v3067
    %v3080 = vpack.c.b16 %v3070, %v3069
    %v3081 = vpack.c.b16 %v3072, %v3071
    %v3082 = vpack.c.b16 %v3074, %v3073
    %3091 = vmatprep.subr.bf16.mxu0 0
    %3092 = vmatpush1.bf16.msra.mxu0 %v3075
    %3093 = vmatprep.subr.bf16.mxu0 0
    %3094 = vmatpush1.bf16.msra.mxu0 %v3076
    %3095 = vmatprep.subr.bf16.mxu0 0
    %3096 = vmatpush1.bf16.msra.mxu0 %v3077
    %3097 = vmatprep.subr.bf16.mxu0 0
    %3098 = vmatpush1.bf16.msra.mxu0 %v3078
    %3099 = vmatprep.subr.bf16.mxu0 0
    %3100 = vmatpush1.bf16.msra.mxu0 %v3079
    %3101 = vmatprep.subr.bf16.mxu0 0
    %3102 = vmatpush1.bf16.msra.mxu0 %v3080
    %3103 = vmatprep.subr.bf16.mxu0 0
    %3104 = vmatpush1.bf16.msra.mxu0 %v3081
    %3105 = vmatprep.subr.bf16.mxu0 0
    %3106 = vmatpush1.bf16.msra.mxu0 %v3082
    %3107 = vmatprep.subr.bf16.mxu0 0
    %3108 = vmatpush1.bf16.msra.mxu0 0
    %3109 = vmatprep.subr.bf16.mxu0 0
    %3110 = vmatpush1.bf16.msra.mxu0 0
    %3111 = vmatprep.subr.bf16.mxu0 0
    %3112 = vmatpush1.bf16.msra.mxu0 0
    %3113 = vmatprep.subr.bf16.mxu0 0
    %3114 = vmatpush1.bf16.msra.mxu0 0
    %3115 = vmatprep.subr.bf16.mxu0 0
    %3116 = vmatpush1.bf16.msra.mxu0 0
    %3117 = vmatprep.subr.bf16.mxu0 0
    %3118 = vmatpush1.bf16.msra.mxu0 0
    %3119 = vmatprep.subr.bf16.mxu0 0
    %3120 = vmatpush1.bf16.msra.mxu0 0
    %3121 = vmatprep.subr.bf16.mxu0 0
    %3122 = vmatpush1.bf16.msra.mxu0 0
    %3123 = vmatprep.mubr.bf16.mxu0 0
    %3124 = vmatmul.mubr.bf16.gmra.mrb[0].mxu0 %v3018
    %v3125 = vpop.f32.mrb[0].mxu0
    %v3126 = vadd.f32 0.0, %v3125
    %v3127 = vpop.f32.mrb[0].mxu0
    %v3128 = vpop.f32.mrb[0].mxu0
    %v3129 = vadd.f32 0.0, %v3128
    %v3130 = vpop.f32.mrb[0].mxu0
    %3131 = vmatprep.mubr.bf16.mxu0 0
    %3132 = vmatmul.mubr.bf16.gmra.mrb[0].mxu0 %v3019
    %v3133 = vpop.f32.mrb[0].mxu0
    %v3134 = vadd.f32 0.0, %v3133
    %v3135 = vpop.f32.mrb[0].mxu0
    %v3136 = vpop.f32.mrb[0].mxu0
    %v3137 = vadd.f32 0.0, %v3136
    %v3138 = vpop.f32.mrb[0].mxu0
    %3139 = vmatprep.mubr.bf16.mxu0 0
    %3140 = vmatmul.mubr.bf16.gmra.mrb[0].mxu0 %v3020
    %v3141 = vpop.f32.mrb[0].mxu0
    %v3142 = vadd.f32 0.0, %v3141
    %v3143 = vpop.f32.mrb[0].mxu0
    %v3144 = vpop.f32.mrb[0].mxu0
    %v3145 = vadd.f32 0.0, %v3144
    %v3146 = vpop.f32.mrb[0].mxu0
    %3147 = vmatprep.mubr.bf16.mxu0 0
    %3148 = vmatmul.mubr.bf16.gmra.mrb[0].mxu0 %v3021
    %v3149 = vpop.f32.mrb[0].mxu0
    %v3150 = vadd.f32 0.0, %v3149
    %v3151 = vpop.f32.mrb[0].mxu0
    %v3152 = vpop.f32.mrb[0].mxu0
    %v3153 = vadd.f32 0.0, %v3152
    %v3154 = vpop.f32.mrb[0].mxu0
    %3155 = vmatprep.mubr.bf16.mxu0 0
    %3156 = vmatmul.mubr.bf16.gmra.mrb[0].mxu0 %v3022
    %v3157 = vpop.f32.mrb[0].mxu0
    %v3158 = vadd.f32 0.0, %v3157
    %v3159 = vpop.f32.mrb[0].mxu0
    %v3160 = vpop.f32.mrb[0].mxu0
    %v3161 = vadd.f32 0.0, %v3160
    %v3162 = vpop.f32.mrb[0].mxu0
    %3163 = vmatprep.mubr.bf16.mxu0 0
    %3164 = vmatmul.mubr.bf16.gmra.mrb[0].mxu0 %v3023
    %v3165 = vpop.f32.mrb[0].mxu0
    %v3166 = vadd.f32 0.0, %v3165
    %v3167 = vpop.f32.mrb[0].mxu0
    %v3168 = vpop.f32.mrb[0].mxu0
    %v3169 = vadd.f32 0.0, %v3168
    %v3170 = vpop.f32.mrb[0].mxu0
    %3171 = vmatprep.mubr.bf16.mxu0 0
    %3172 = vmatmul.mubr.bf16.gmra.mrb[0].mxu0 %v3024
    %v3173 = vpop.f32.mrb[0].mxu0
    %v3174 = vadd.f32 0.0, %v3173
    %v3175 = vpop.f32.mrb[0].mxu0
    %v3176 = vpop.f32.mrb[0].mxu0
    %v3177 = vadd.f32 0.0, %v3176
    %v3178 = vpop.f32.mrb[0].mxu0
    %3179 = vmatprep.mubr.bf16.mxu0 0
    %3180 = vmatmul.mubr.bf16.gmra.mrb[0].mxu0 %v3025
    %v3181 = vpop.f32.mrb[0].mxu0
    %v3182 = vadd.f32 0.0, %v3181
    %v3183 = vpop.f32.mrb[0].mxu0
    %v3184 = vpop.f32.mrb[0].mxu0
    %v3185 = vadd.f32 0.0, %v3184
    %v3186 = vpop.f32.mrb[0].mxu0
    %3187 = vdwg.mxu0
    %v3188 = vadd.f32 %v2986, %v3126
    %v3189 = vadd.f32 %v2987, %v3129
    %v3190 = vadd.f32 %v2988, %v3134
    %v3191 = vadd.f32 %v2989, %v3137
    %v3192 = vadd.f32 %v2990, %v3142
    %v3193 = vadd.f32 %v2991, %v3145
    %v3194 = vadd.f32 %v2992, %v3150
    %v3195 = vadd.f32 %v2993, %v3153
    %v3196 = vadd.f32 %v2994, %v3158
    %v3197 = vadd.f32 %v2995, %v3161
    %v3198 = vadd.f32 %v2996, %v3166
    %v3199 = vadd.f32 %v2997, %v3169
    %v3200 = vadd.f32 %v2998, %v3174
    %v3201 = vadd.f32 %v2999, %v3177
    %v3202 = vadd.f32 %v3000, %v3182
    %v3203 = vadd.f32 %v3001, %v3185
    %v3204 = vld [vmem:[%s2413] sm:$0xff]
    %v3205 = vld [vmem:[%s2413 + $0x10] sm:$0xff]
    %v3206 = vld [vmem:[%s2413 + $0x20] sm:$0xff]
    %v3207 = vld [vmem:[%s2413 + $0x30] sm:$0xff]
    %v3208 = vld [vmem:[%s2413 + $0x40] sm:$0xff]
    %v3209 = vld [vmem:[%s2413 + $0x50] sm:$0xff]
    %v3210 = vld [vmem:[%s2413 + $0x60] sm:$0xff]
    %v3211 = vld [vmem:[%s2413 + $0x70] sm:$0xff]
    %v3212 = vld [vmem:[%s2413 + $0xa0] sm:$0xff]
    %v3213 = vld [vmem:[%s2413 + $0xb0] sm:$0xff]
    %v3214 = vld [vmem:[%s2413 + $0xc0] sm:$0xff]
    %v3215 = vld [vmem:[%s2413 + $0xd0] sm:$0xff]
    %v3216 = vld [vmem:[%s2413 + $0xe0] sm:$0xff]
    %v3217 = vld [vmem:[%s2413 + $0xf0] sm:$0xff]
    %v3218 = vld [vmem:[%s2413 + $0x100] sm:$0xff]
    %v3219 = vld [vmem:[%s2413 + $0x110] sm:$0xff]
    %v3220 = vpack.c.bf16 %v3205, %v3204
    %v3221 = vpack.c.bf16 %v3207, %v3206
    %v3222 = vpack.c.bf16 %v3209, %v3208
    %v3223 = vpack.c.bf16 %v3211, %v3210
    %v3224 = vpack.c.bf16 %v3213, %v3212
    %v3225 = vpack.c.bf16 %v3215, %v3214
    %v3226 = vpack.c.bf16 %v3217, %v3216
    %v3227 = vpack.c.bf16 %v3219, %v3218
    %s3228 = scalar_lea.vmem [#allocation9], 192
    %v3229 = vld [vmem:[%s3228] sm:$0xf]
    %v3230 = vld [vmem:[%s3228 + $0x4] sm:$0xf]
    %v3231 = vld [vmem:[%s3228 + $0x8] sm:$0xf]
    %v3232 = vld [vmem:[%s3228 + $0xc] sm:$0xf]
    %v3233 = vld [vmem:[%s3228 + $0x10] sm:$0xf]
    %v3234 = vld [vmem:[%s3228 + $0x14] sm:$0xf]
    %v3235 = vld [vmem:[%s3228 + $0x18] sm:$0xf]
    %v3236 = vld [vmem:[%s3228 + $0x1c] sm:$0xf]
    %v3237 = vld [vmem:[%s3228 + $0x20] sm:$0xf]
    %v3238 = vld [vmem:[%s3228 + $0x24] sm:$0xf]
    %v3239 = vld [vmem:[%s3228 + $0x28] sm:$0xf]
    %v3240 = vld [vmem:[%s3228 + $0x2c] sm:$0xf]
    %v3241 = vld [vmem:[%s3228 + $0x30] sm:$0xf]
    %v3242 = vld [vmem:[%s3228 + $0x34] sm:$0xf]
    %v3243 = vld [vmem:[%s3228 + $0x38] sm:$0xf]
    %v3244 = vld [vmem:[%s3228 + $0x3c] sm:$0xf]
    %v3261 = vunpack.c.l.b16 %v3229
    %v3262 = vunpack.c.l.b16 %v3230
    %v3263 = vunpack.c.l.b16 %v3231
    %v3264 = vunpack.c.l.b16 %v3232
    %v3265 = vunpack.c.l.b16 %v3233
    %v3266 = vunpack.c.l.b16 %v3234
    %v3267 = vunpack.c.l.b16 %v3235
    %v3268 = vunpack.c.l.b16 %v3236
    %v3269 = vunpack.c.l.b16 %v3237
    %v3270 = vunpack.c.l.b16 %v3238
    %v3271 = vunpack.c.l.b16 %v3239
    %v3272 = vunpack.c.l.b16 %v3240
    %v3273 = vunpack.c.l.b16 %v3241
    %v3274 = vunpack.c.l.b16 %v3242
    %v3275 = vunpack.c.l.b16 %v3243
    %v3276 = vunpack.c.l.b16 %v3244
    %v3277 = vpack.c.b16 %v3262, %v3261
    %v3278 = vpack.c.b16 %v3264, %v3263
    %v3279 = vpack.c.b16 %v3266, %v3265
    %v3280 = vpack.c.b16 %v3268, %v3267
    %v3281 = vpack.c.b16 %v3270, %v3269
    %v3282 = vpack.c.b16 %v3272, %v3271
    %v3283 = vpack.c.b16 %v3274, %v3273
    %v3284 = vpack.c.b16 %v3276, %v3275
    %3293 = vmatprep.subr.bf16.mxu0 0
    %3294 = vmatpush1.bf16.msra.mxu0 %v3277
    %3295 = vmatprep.subr.bf16.mxu0 0
    %3296 = vmatpush1.bf16.msra.mxu0 %v3278
    %3297 = vmatprep.subr.bf16.mxu0 0
    %3298 = vmatpush1.bf16.msra.mxu0 %v3279
    %3299 = vmatprep.subr.bf16.mxu0 0
    %3300 = vmatpush1.bf16.msra.mxu0 %v3280
    %3301 = vmatprep.subr.bf16.mxu0 0
    %3302 = vmatpush1.bf16.msra.mxu0 %v3281
    %3303 = vmatprep.subr.bf16.mxu0 0
    %3304 = vmatpush1.bf16.msra.mxu0 %v3282
    %3305 = vmatprep.subr.bf16.mxu0 0
    %3306 = vmatpush1.bf16.msra.mxu0 %v3283
    %3307 = vmatprep.subr.bf16.mxu0 0
    %3308 = vmatpush1.bf16.msra.mxu0 %v3284
    %3309 = vmatprep.subr.bf16.mxu0 0
    %3310 = vmatpush1.bf16.msra.mxu0 0
    %3311 = vmatprep.subr.bf16.mxu0 0
    %3312 = vmatpush1.bf16.msra.mxu0 0
    %3313 = vmatprep.subr.bf16.mxu0 0
    %3314 = vmatpush1.bf16.msra.mxu0 0
    %3315 = vmatprep.subr.bf16.mxu0 0
    %3316 = vmatpush1.bf16.msra.mxu0 0
    %3317 = vmatprep.subr.bf16.mxu0 0
    %3318 = vmatpush1.bf16.msra.mxu0 0
    %3319 = vmatprep.subr.bf16.mxu0 0
    %3320 = vmatpush1.bf16.msra.mxu0 0
    %3321 = vmatprep.subr.bf16.mxu0 0
    %3322 = vmatpush1.bf16.msra.mxu0 0
    %3323 = vmatprep.subr.bf16.mxu0 0
    %3324 = vmatpush1.bf16.msra.mxu0 0
    %3325 = vmatprep.mubr.bf16.mxu0 0
    %3326 = vmatmul.mubr.bf16.gmra.mrb[0].mxu0 %v3220
    %v3327 = vpop.f32.mrb[0].mxu0
    %v3328 = vadd.f32 0.0, %v3327
    %v3329 = vpop.f32.mrb[0].mxu0
    %v3330 = vpop.f32.mrb[0].mxu0
    %v3331 = vadd.f32 0.0, %v3330
    %v3332 = vpop.f32.mrb[0].mxu0
    %3333 = vmatprep.mubr.bf16.mxu0 0
    %3334 = vmatmul.mubr.bf16.gmra.mrb[0].mxu0 %v3221
    %v3335 = vpop.f32.mrb[0].mxu0
    %v3336 = vadd.f32 0.0, %v3335
    %v3337 = vpop.f32.mrb[0].mxu0
    %v3338 = vpop.f32.mrb[0].mxu0
    %v3339 = vadd.f32 0.0, %v3338
    %v3340 = vpop.f32.mrb[0].mxu0
    %3341 = vmatprep.mubr.bf16.mxu0 0
    %3342 = vmatmul.mubr.bf16.gmra.mrb[0].mxu0 %v3222
    %v3343 = vpop.f32.mrb[0].mxu0
    %v3344 = vadd.f32 0.0, %v3343
    %v3345 = vpop.f32.mrb[0].mxu0
    %v3346 = vpop.f32.mrb[0].mxu0
    %v3347 = vadd.f32 0.0, %v3346
    %v3348 = vpop.f32.mrb[0].mxu0
    %3349 = vmatprep.mubr.bf16.mxu0 0
    %3350 = vmatmul.mubr.bf16.gmra.mrb[0].mxu0 %v3223
    %v3351 = vpop.f32.mrb[0].mxu0
    %v3352 = vadd.f32 0.0, %v3351
    %v3353 = vpop.f32.mrb[0].mxu0
    %v3354 = vpop.f32.mrb[0].mxu0
    %v3355 = vadd.f32 0.0, %v3354
    %v3356 = vpop.f32.mrb[0].mxu0
    %3357 = vmatprep.mubr.bf16.mxu0 0
    %3358 = vmatmul.mubr.bf16.gmra.mrb[0].mxu0 %v3224
    %v3359 = vpop.f32.mrb[0].mxu0
    %v3360 = vadd.f32 0.0, %v3359
    %v3361 = vpop.f32.mrb[0].mxu0
    %v3362 = vpop.f32.mrb[0].mxu0
    %v3363 = vadd.f32 0.0, %v3362
    %v3364 = vpop.f32.mrb[0].mxu0
    %3365 = vmatprep.mubr.bf16.mxu0 0
    %3366 = vmatmul.mubr.bf16.gmra.mrb[0].mxu0 %v3225
    %v3367 = vpop.f32.mrb[0].mxu0
    %v3368 = vadd.f32 0.0, %v3367
    %v3369 = vpop.f32.mrb[0].mxu0
    %v3370 = vpop.f32.mrb[0].mxu0
    %v3371 = vadd.f32 0.0, %v3370
    %v3372 = vpop.f32.mrb[0].mxu0
    %3373 = vmatprep.mubr.bf16.mxu0 0
    %3374 = vmatmul.mubr.bf16.gmra.mrb[0].mxu0 %v3226
    %v3375 = vpop.f32.mrb[0].mxu0
    %v3376 = vadd.f32 0.0, %v3375
    %v3377 = vpop.f32.mrb[0].mxu0
    %v3378 = vpop.f32.mrb[0].mxu0
    %v3379 = vadd.f32 0.0, %v3378
    %v3380 = vpop.f32.mrb[0].mxu0
    %3381 = vmatprep.mubr.bf16.mxu0 0
    %3382 = vmatmul.mubr.bf16.gmra.mrb[0].mxu0 %v3227
    %v3383 = vpop.f32.mrb[0].mxu0
    %v3384 = vadd.f32 0.0, %v3383
    %v3385 = vpop.f32.mrb[0].mxu0
    %v3386 = vpop.f32.mrb[0].mxu0
    %v3387 = vadd.f32 0.0, %v3386
    %v3388 = vpop.f32.mrb[0].mxu0
    %3389 = vdwg.mxu0
    %v3390 = vadd.f32 %v3188, %v3328
    %v3391 = vadd.f32 %v3189, %v3331
    %v3392 = vadd.f32 %v3190, %v3336
    %v3393 = vadd.f32 %v3191, %v3339
    %v3394 = vadd.f32 %v3192, %v3344
    %v3395 = vadd.f32 %v3193, %v3347
    %v3396 = vadd.f32 %v3194, %v3352
    %v3397 = vadd.f32 %v3195, %v3355
    %v3398 = vadd.f32 %v3196, %v3360
    %v3399 = vadd.f32 %v3197, %v3363
    %v3400 = vadd.f32 %v3198, %v3368
    %v3401 = vadd.f32 %v3199, %v3371
    %v3402 = vadd.f32 %v3200, %v3376
    %v3403 = vadd.f32 %v3201, %v3379
    %v3404 = vadd.f32 %v3202, %v3384
    %v3405 = vadd.f32 %v3203, %v3387
    %v3406 = vld [vmem:[%s2413 + $0x1] sm:$0xff]
    %v3407 = vld [vmem:[%s2413 + $0x11] sm:$0xff]
    %v3408 = vld [vmem:[%s2413 + $0x21] sm:$0xff]
    %v3409 = vld [vmem:[%s2413 + $0x31] sm:$0xff]
    %v3410 = vld [vmem:[%s2413 + $0x41] sm:$0xff]
    %v3411 = vld [vmem:[%s2413 + $0x51] sm:$0xff]
    %v3412 = vld [vmem:[%s2413 + $0x61] sm:$0xff]
    %v3413 = vld [vmem:[%s2413 + $0x71] sm:$0xff]
    %v3414 = vld [vmem:[%s2413 + $0xa1] sm:$0xff]
    %v3415 = vld [vmem:[%s2413 + $0xb1] sm:$0xff]
    %v3416 = vld [vmem:[%s2413 + $0xc1] sm:$0xff]
    %v3417 = vld [vmem:[%s2413 + $0xd1] sm:$0xff]
    %v3418 = vld [vmem:[%s2413 + $0xe1] sm:$0xff]
    %v3419 = vld [vmem:[%s2413 + $0xf1] sm:$0xff]
    %v3420 = vld [vmem:[%s2413 + $0x101] sm:$0xff]
    %v3421 = vld [vmem:[%s2413 + $0x111] sm:$0xff]
    %v3422 = vpack.c.bf16 %v3407, %v3406
    %v3423 = vpack.c.bf16 %v3409, %v3408
    %v3424 = vpack.c.bf16 %v3411, %v3410
    %v3425 = vpack.c.bf16 %v3413, %v3412
    %v3426 = vpack.c.bf16 %v3415, %v3414
    %v3427 = vpack.c.bf16 %v3417, %v3416
    %v3428 = vpack.c.bf16 %v3419, %v3418
    %v3429 = vpack.c.bf16 %v3421, %v3420
    %s3430 = scalar_lea.vmem [#allocation9], 256
    %v3431 = vld [vmem:[%s3430] sm:$0xf]
    %v3432 = vld [vmem:[%s3430 + $0x4] sm:$0xf]
    %v3433 = vld [vmem:[%s3430 + $0x8] sm:$0xf]
    %v3434 = vld [vmem:[%s3430 + $0xc] sm:$0xf]
    %v3435 = vld [vmem:[%s3430 + $0x10] sm:$0xf]
    %v3436 = vld [vmem:[%s3430 + $0x14] sm:$0xf]
    %v3437 = vld [vmem:[%s3430 + $0x18] sm:$0xf]
    %v3438 = vld [vmem:[%s3430 + $0x1c] sm:$0xf]
    %v3439 = vld [vmem:[%s3430 + $0x20] sm:$0xf]
    %v3440 = vld [vmem:[%s3430 + $0x24] sm:$0xf]
    %v3441 = vld [vmem:[%s3430 + $0x28] sm:$0xf]
    %v3442 = vld [vmem:[%s3430 + $0x2c] sm:$0xf]
    %v3443 = vld [vmem:[%s3430 + $0x30] sm:$0xf]
    %v3444 = vld [vmem:[%s3430 + $0x34] sm:$0xf]
    %v3445 = vld [vmem:[%s3430 + $0x38] sm:$0xf]
    %v3446 = vld [vmem:[%s3430 + $0x3c] sm:$0xf]
    %v3463 = vunpack.c.l.b16 %v3431
    %v3464 = vunpack.c.l.b16 %v3432
    %v3465 = vunpack.c.l.b16 %v3433
    %v3466 = vunpack.c.l.b16 %v3434
    %v3467 = vunpack.c.l.b16 %v3435
    %v3468 = vunpack.c.l.b16 %v3436
    %v3469 = vunpack.c.l.b16 %v3437
    %v3470 = vunpack.c.l.b16 %v3438
    %v3471 = vunpack.c.l.b16 %v3439
    %v3472 = vunpack.c.l.b16 %v3440
    %v3473 = vunpack.c.l.b16 %v3441
    %v3474 = vunpack.c.l.b16 %v3442
    %v3475 = vunpack.c.l.b16 %v3443
    %v3476 = vunpack.c.l.b16 %v3444
    %v3477 = vunpack.c.l.b16 %v3445
    %v3478 = vunpack.c.l.b16 %v3446
    %v3479 = vpack.c.b16 %v3464, %v3463
    %v3480 = vpack.c.b16 %v3466, %v3465
    %v3481 = vpack.c.b16 %v3468, %v3467
    %v3482 = vpack.c.b16 %v3470, %v3469
    %v3483 = vpack.c.b16 %v3472, %v3471
    %v3484 = vpack.c.b16 %v3474, %v3473
    %v3485 = vpack.c.b16 %v3476, %v3475
    %v3486 = vpack.c.b16 %v3478, %v3477
    %3495 = vmatprep.subr.bf16.mxu0 0
    %3496 = vmatpush1.bf16.msra.mxu0 %v3479
    %3497 = vmatprep.subr.bf16.mxu0 0
    %3498 = vmatpush1.bf16.msra.mxu0 %v3480
    %3499 = vmatprep.subr.bf16.mxu0 0
    %3500 = vmatpush1.bf16.msra.mxu0 %v3481
    %3501 = vmatprep.subr.bf16.mxu0 0
    %3502 = vmatpush1.bf16.msra.mxu0 %v3482
    %3503 = vmatprep.subr.bf16.mxu0 0
    %3504 = vmatpush1.bf16.msra.mxu0 %v3483
    %3505 = vmatprep.subr.bf16.mxu0 0
    %3506 = vmatpush1.bf16.msra.mxu0 %v3484
    %3507 = vmatprep.subr.bf16.mxu0 0
    %3508 = vmatpush1.bf16.msra.mxu0 %v3485
    %3509 = vmatprep.subr.bf16.mxu0 0
    %3510 = vmatpush1.bf16.msra.mxu0 %v3486
    %3511 = vmatprep.subr.bf16.mxu0 0
    %3512 = vmatpush1.bf16.msra.mxu0 0
    %3513 = vmatprep.subr.bf16.mxu0 0
    %3514 = vmatpush1.bf16.msra.mxu0 0
    %3515 = vmatprep.subr.bf16.mxu0 0
    %3516 = vmatpush1.bf16.msra.mxu0 0
    %3517 = vmatprep.subr.bf16.mxu0 0
    %3518 = vmatpush1.bf16.msra.mxu0 0
    %3519 = vmatprep.subr.bf16.mxu0 0
    %3520 = vmatpush1.bf16.msra.mxu0 0
    %3521 = vmatprep.subr.bf16.mxu0 0
    %3522 = vmatpush1.bf16.msra.mxu0 0
    %3523 = vmatprep.subr.bf16.mxu0 0
    %3524 = vmatpush1.bf16.msra.mxu0 0
    %3525 = vmatprep.subr.bf16.mxu0 0
    %3526 = vmatpush1.bf16.msra.mxu0 0
    %3527 = vmatprep.mubr.bf16.mxu0 0
    %3528 = vmatmul.mubr.bf16.gmra.mrb[0].mxu0 %v3422
    %v3529 = vpop.f32.mrb[0].mxu0
    %v3530 = vadd.f32 0.0, %v3529
    %v3531 = vpop.f32.mrb[0].mxu0
    %v3532 = vpop.f32.mrb[0].mxu0
    %v3533 = vadd.f32 0.0, %v3532
    %v3534 = vpop.f32.mrb[0].mxu0
    %3535 = vmatprep.mubr.bf16.mxu0 0
    %3536 = vmatmul.mubr.bf16.gmra.mrb[0].mxu0 %v3423
    %v3537 = vpop.f32.mrb[0].mxu0
    %v3538 = vadd.f32 0.0, %v3537
    %v3539 = vpop.f32.mrb[0].mxu0
    %v3540 = vpop.f32.mrb[0].mxu0
    %v3541 = vadd.f32 0.0, %v3540
    %v3542 = vpop.f32.mrb[0].mxu0
    %3543 = vmatprep.mubr.bf16.mxu0 0
    %3544 = vmatmul.mubr.bf16.gmra.mrb[0].mxu0 %v3424
    %v3545 = vpop.f32.mrb[0].mxu0
    %v3546 = vadd.f32 0.0, %v3545
    %v3547 = vpop.f32.mrb[0].mxu0
    %v3548 = vpop.f32.mrb[0].mxu0
    %v3549 = vadd.f32 0.0, %v3548
    %v3550 = vpop.f32.mrb[0].mxu0
    %3551 = vmatprep.mubr.bf16.mxu0 0
    %3552 = vmatmul.mubr.bf16.gmra.mrb[0].mxu0 %v3425
    %v3553 = vpop.f32.mrb[0].mxu0
    %v3554 = vadd.f32 0.0, %v3553
    %v3555 = vpop.f32.mrb[0].mxu0
    %v3556 = vpop.f32.mrb[0].mxu0
    %v3557 = vadd.f32 0.0, %v3556
    %v3558 = vpop.f32.mrb[0].mxu0
    %3559 = vmatprep.mubr.bf16.mxu0 0
    %3560 = vmatmul.mubr.bf16.gmra.mrb[0].mxu0 %v3426
    %v3561 = vpop.f32.mrb[0].mxu0
    %v3562 = vadd.f32 0.0, %v3561
    %v3563 = vpop.f32.mrb[0].mxu0
    %v3564 = vpop.f32.mrb[0].mxu0
    %v3565 = vadd.f32 0.0, %v3564
    %v3566 = vpop.f32.mrb[0].mxu0
    %3567 = vmatprep.mubr.bf16.mxu0 0
    %3568 = vmatmul.mubr.bf16.gmra.mrb[0].mxu0 %v3427
    %v3569 = vpop.f32.mrb[0].mxu0
    %v3570 = vadd.f32 0.0, %v3569
    %v3571 = vpop.f32.mrb[0].mxu0
    %v3572 = vpop.f32.mrb[0].mxu0
    %v3573 = vadd.f32 0.0, %v3572
    %v3574 = vpop.f32.mrb[0].mxu0
    %3575 = vmatprep.mubr.bf16.mxu0 0
    %3576 = vmatmul.mubr.bf16.gmra.mrb[0].mxu0 %v3428
    %v3577 = vpop.f32.mrb[0].mxu0
    %v3578 = vadd.f32 0.0, %v3577
    %v3579 = vpop.f32.mrb[0].mxu0
    %v3580 = vpop.f32.mrb[0].mxu0
    %v3581 = vadd.f32 0.0, %v3580
    %v3582 = vpop.f32.mrb[0].mxu0
    %3583 = vmatprep.mubr.bf16.mxu0 0
    %3584 = vmatmul.mubr.bf16.gmra.mrb[0].mxu0 %v3429
    %v3585 = vpop.f32.mrb[0].mxu0
    %v3586 = vadd.f32 0.0, %v3585
    %v3587 = vpop.f32.mrb[0].mxu0
    %v3588 = vpop.f32.mrb[0].mxu0
    %v3589 = vadd.f32 0.0, %v3588
    %v3590 = vpop.f32.mrb[0].mxu0
    %3591 = vdwg.mxu0
    %v3592 = vadd.f32 %v3390, %v3530
    %v3593 = vadd.f32 %v3391, %v3533
    %v3594 = vadd.f32 %v3392, %v3538
    %v3595 = vadd.f32 %v3393, %v3541
    %v3596 = vadd.f32 %v3394, %v3546
    %v3597 = vadd.f32 %v3395, %v3549
    %v3598 = vadd.f32 %v3396, %v3554
    %v3599 = vadd.f32 %v3397, %v3557
    %v3600 = vadd.f32 %v3398, %v3562
    %v3601 = vadd.f32 %v3399, %v3565
    %v3602 = vadd.f32 %v3400, %v3570
    %v3603 = vadd.f32 %v3401, %v3573
    %v3604 = vadd.f32 %v3402, %v3578
    %v3605 = vadd.f32 %v3403, %v3581
    %v3606 = vadd.f32 %v3404, %v3586
    %v3607 = vadd.f32 %v3405, %v3589
    %v3608 = vld [vmem:[%s2413 + $0x2] sm:$0xff]
    %v3609 = vld [vmem:[%s2413 + $0x12] sm:$0xff]
    %v3610 = vld [vmem:[%s2413 + $0x22] sm:$0xff]
    %v3611 = vld [vmem:[%s2413 + $0x32] sm:$0xff]
    %v3612 = vld [vmem:[%s2413 + $0x42] sm:$0xff]
    %v3613 = vld [vmem:[%s2413 + $0x52] sm:$0xff]
    %v3614 = vld [vmem:[%s2413 + $0x62] sm:$0xff]
    %v3615 = vld [vmem:[%s2413 + $0x72] sm:$0xff]
    %v3616 = vld [vmem:[%s2413 + $0xa2] sm:$0xff]
    %v3617 = vld [vmem:[%s2413 + $0xb2] sm:$0xff]
    %v3618 = vld [vmem:[%s2413 + $0xc2] sm:$0xff]
    %v3619 = vld [vmem:[%s2413 + $0xd2] sm:$0xff]
    %v3620 = vld [vmem:[%s2413 + $0xe2] sm:$0xff]
    %v3621 = vld [vmem:[%s2413 + $0xf2] sm:$0xff]
    %v3622 = vld [vmem:[%s2413 + $0x102] sm:$0xff]
    %v3623 = vld [vmem:[%s2413 + $0x112] sm:$0xff]
    %v3624 = vpack.c.bf16 %v3609, %v3608
    %v3625 = vpack.c.bf16 %v3611, %v3610
    %v3626 = vpack.c.bf16 %v3613, %v3612
    %v3627 = vpack.c.bf16 %v3615, %v3614
    %v3628 = vpack.c.bf16 %v3617, %v3616
    %v3629 = vpack.c.bf16 %v3619, %v3618
    %v3630 = vpack.c.bf16 %v3621, %v3620
    %v3631 = vpack.c.bf16 %v3623, %v3622
    %s3632 = scalar_lea.vmem [#allocation9], 320
    %v3633 = vld [vmem:[%s3632] sm:$0xf]
    %v3634 = vld [vmem:[%s3632 + $0x4] sm:$0xf]
    %v3635 = vld [vmem:[%s3632 + $0x8] sm:$0xf]
    %v3636 = vld [vmem:[%s3632 + $0xc] sm:$0xf]
    %v3637 = vld [vmem:[%s3632 + $0x10] sm:$0xf]
    %v3638 = vld [vmem:[%s3632 + $0x14] sm:$0xf]
    %v3639 = vld [vmem:[%s3632 + $0x18] sm:$0xf]
    %v3640 = vld [vmem:[%s3632 + $0x1c] sm:$0xf]
    %v3641 = vld [vmem:[%s3632 + $0x20] sm:$0xf]
    %v3642 = vld [vmem:[%s3632 + $0x24] sm:$0xf]
    %v3643 = vld [vmem:[%s3632 + $0x28] sm:$0xf]
    %v3644 = vld [vmem:[%s3632 + $0x2c] sm:$0xf]
    %v3645 = vld [vmem:[%s3632 + $0x30] sm:$0xf]
    %v3646 = vld [vmem:[%s3632 + $0x34] sm:$0xf]
    %v3647 = vld [vmem:[%s3632 + $0x38] sm:$0xf]
    %v3648 = vld [vmem:[%s3632 + $0x3c] sm:$0xf]
    %v3665 = vunpack.c.l.b16 %v3633
    %v3666 = vunpack.c.l.b16 %v3634
    %v3667 = vunpack.c.l.b16 %v3635
    %v3668 = vunpack.c.l.b16 %v3636
    %v3669 = vunpack.c.l.b16 %v3637
    %v3670 = vunpack.c.l.b16 %v3638
    %v3671 = vunpack.c.l.b16 %v3639
    %v3672 = vunpack.c.l.b16 %v3640
    %v3673 = vunpack.c.l.b16 %v3641
    %v3674 = vunpack.c.l.b16 %v3642
    %v3675 = vunpack.c.l.b16 %v3643
    %v3676 = vunpack.c.l.b16 %v3644
    %v3677 = vunpack.c.l.b16 %v3645
    %v3678 = vunpack.c.l.b16 %v3646
    %v3679 = vunpack.c.l.b16 %v3647
    %v3680 = vunpack.c.l.b16 %v3648
    %v3681 = vpack.c.b16 %v3666, %v3665
    %v3682 = vpack.c.b16 %v3668, %v3667
    %v3683 = vpack.c.b16 %v3670, %v3669
    %v3684 = vpack.c.b16 %v3672, %v3671
    %v3685 = vpack.c.b16 %v3674, %v3673
    %v3686 = vpack.c.b16 %v3676, %v3675
    %v3687 = vpack.c.b16 %v3678, %v3677
    %v3688 = vpack.c.b16 %v3680, %v3679
    %3697 = vmatprep.subr.bf16.mxu0 0
    %3698 = vmatpush1.bf16.msra.mxu0 %v3681
    %3699 = vmatprep.subr.bf16.mxu0 0
    %3700 = vmatpush1.bf16.msra.mxu0 %v3682
    %3701 = vmatprep.subr.bf16.mxu0 0
    %3702 = vmatpush1.bf16.msra.mxu0 %v3683
    %3703 = vmatprep.subr.bf16.mxu0 0
    %3704 = vmatpush1.bf16.msra.mxu0 %v3684
    %3705 = vmatprep.subr.bf16.mxu0 0
    %3706 = vmatpush1.bf16.msra.mxu0 %v3685
    %3707 = vmatprep.subr.bf16.mxu0 0
    %3708 = vmatpush1.bf16.msra.mxu0 %v3686
    %3709 = vmatprep.subr.bf16.mxu0 0
    %3710 = vmatpush1.bf16.msra.mxu0 %v3687
    %3711 = vmatprep.subr.bf16.mxu0 0
    %3712 = vmatpush1.bf16.msra.mxu0 %v3688
    %3713 = vmatprep.subr.bf16.mxu0 0
    %3714 = vmatpush1.bf16.msra.mxu0 0
    %3715 = vmatprep.subr.bf16.mxu0 0
    %3716 = vmatpush1.bf16.msra.mxu0 0
    %3717 = vmatprep.subr.bf16.mxu0 0
    %3718 = vmatpush1.bf16.msra.mxu0 0
    %3719 = vmatprep.subr.bf16.mxu0 0
    %3720 = vmatpush1.bf16.msra.mxu0 0
    %3721 = vmatprep.subr.bf16.mxu0 0
    %3722 = vmatpush1.bf16.msra.mxu0 0
    %3723 = vmatprep.subr.bf16.mxu0 0
    %3724 = vmatpush1.bf16.msra.mxu0 0
    %3725 = vmatprep.subr.bf16.mxu0 0
    %3726 = vmatpush1.bf16.msra.mxu0 0
    %3727 = vmatprep.subr.bf16.mxu0 0
    %3728 = vmatpush1.bf16.msra.mxu0 0
    %3729 = vmatprep.mubr.bf16.mxu0 0
    %3730 = vmatmul.mubr.bf16.gmra.mrb[0].mxu0 %v3624
    %v3731 = vpop.f32.mrb[0].mxu0
    %v3732 = vadd.f32 0.0, %v3731
    %v3733 = vpop.f32.mrb[0].mxu0
    %v3734 = vpop.f32.mrb[0].mxu0
    %v3735 = vadd.f32 0.0, %v3734
    %v3736 = vpop.f32.mrb[0].mxu0
    %3737 = vmatprep.mubr.bf16.mxu0 0
    %3738 = vmatmul.mubr.bf16.gmra.mrb[0].mxu0 %v3625
    %v3739 = vpop.f32.mrb[0].mxu0
    %v3740 = vadd.f32 0.0, %v3739
    %v3741 = vpop.f32.mrb[0].mxu0
    %v3742 = vpop.f32.mrb[0].mxu0
    %v3743 = vadd.f32 0.0, %v3742
    %v3744 = vpop.f32.mrb[0].mxu0
    %3745 = vmatprep.mubr.bf16.mxu0 0
    %3746 = vmatmul.mubr.bf16.gmra.mrb[0].mxu0 %v3626
    %v3747 = vpop.f32.mrb[0].mxu0
    %v3748 = vadd.f32 0.0, %v3747
    %v3749 = vpop.f32.mrb[0].mxu0
    %v3750 = vpop.f32.mrb[0].mxu0
    %v3751 = vadd.f32 0.0, %v3750
    %v3752 = vpop.f32.mrb[0].mxu0
    %3753 = vmatprep.mubr.bf16.mxu0 0
    %3754 = vmatmul.mubr.bf16.gmra.mrb[0].mxu0 %v3627
    %v3755 = vpop.f32.mrb[0].mxu0
    %v3756 = vadd.f32 0.0, %v3755
    %v3757 = vpop.f32.mrb[0].mxu0
    %v3758 = vpop.f32.mrb[0].mxu0
    %v3759 = vadd.f32 0.0, %v3758
    %v3760 = vpop.f32.mrb[0].mxu0
    %3761 = vmatprep.mubr.bf16.mxu0 0
    %3762 = vmatmul.mubr.bf16.gmra.mrb[0].mxu0 %v3628
    %v3763 = vpop.f32.mrb[0].mxu0
    %v3764 = vadd.f32 0.0, %v3763
    %v3765 = vpop.f32.mrb[0].mxu0
    %v3766 = vpop.f32.mrb[0].mxu0
    %v3767 = vadd.f32 0.0, %v3766
    %v3768 = vpop.f32.mrb[0].mxu0
    %3769 = vmatprep.mubr.bf16.mxu0 0
    %3770 = vmatmul.mubr.bf16.gmra.mrb[0].mxu0 %v3629
    %v3771 = vpop.f32.mrb[0].mxu0
    %v3772 = vadd.f32 0.0, %v3771
    %v3773 = vpop.f32.mrb[0].mxu0
    %v3774 = vpop.f32.mrb[0].mxu0
    %v3775 = vadd.f32 0.0, %v3774
    %v3776 = vpop.f32.mrb[0].mxu0
    %3777 = vmatprep.mubr.bf16.mxu0 0
    %3778 = vmatmul.mubr.bf16.gmra.mrb[0].mxu0 %v3630
    %v3779 = vpop.f32.mrb[0].mxu0
    %v3780 = vadd.f32 0.0, %v3779
    %v3781 = vpop.f32.mrb[0].mxu0
    %v3782 = vpop.f32.mrb[0].mxu0
    %v3783 = vadd.f32 0.0, %v3782
    %v3784 = vpop.f32.mrb[0].mxu0
    %3785 = vmatprep.mubr.bf16.mxu0 0
    %3786 = vmatmul.mubr.bf16.gmra.mrb[0].mxu0 %v3631
    %v3787 = vpop.f32.mrb[0].mxu0
    %v3788 = vadd.f32 0.0, %v3787
    %v3789 = vpop.f32.mrb[0].mxu0
    %v3790 = vpop.f32.mrb[0].mxu0
    %v3791 = vadd.f32 0.0, %v3790
    %v3792 = vpop.f32.mrb[0].mxu0
    %3793 = vdwg.mxu0
    %v3794 = vadd.f32 %v3592, %v3732
    %v3795 = vadd.f32 %v3593, %v3735
    %v3796 = vadd.f32 %v3594, %v3740
    %v3797 = vadd.f32 %v3595, %v3743
    %v3798 = vadd.f32 %v3596, %v3748
    %v3799 = vadd.f32 %v3597, %v3751
    %v3800 = vadd.f32 %v3598, %v3756
    %v3801 = vadd.f32 %v3599, %v3759
    %v3802 = vadd.f32 %v3600, %v3764
    %v3803 = vadd.f32 %v3601, %v3767
    %v3804 = vadd.f32 %v3602, %v3772
    %v3805 = vadd.f32 %v3603, %v3775
    %v3806 = vadd.f32 %v3604, %v3780
    %v3807 = vadd.f32 %v3605, %v3783
    %v3808 = vadd.f32 %v3606, %v3788
    %v3809 = vadd.f32 %v3607, %v3791
    %s3810 = scalar_lea.vmem [#allocation3], 32
    %v3811 = vld [vmem:[%s3810] sm:$0xff]
    %v3812 = vld [vmem:[%s3810 + $0x10] sm:$0xff]
    %v3813 = vld [vmem:[%s3810 + $0x20] sm:$0xff]
    %v3814 = vld [vmem:[%s3810 + $0x30] sm:$0xff]
    %v3815 = vld [vmem:[%s3810 + $0x40] sm:$0xff]
    %v3816 = vld [vmem:[%s3810 + $0x50] sm:$0xff]
    %v3817 = vld [vmem:[%s3810 + $0x60] sm:$0xff]
    %v3818 = vld [vmem:[%s3810 + $0x70] sm:$0xff]
    %v3819 = vld [vmem:[%s3810 + $0xa0] sm:$0xff]
    %v3820 = vld [vmem:[%s3810 + $0xb0] sm:$0xff]
    %v3821 = vld [vmem:[%s3810 + $0xc0] sm:$0xff]
    %v3822 = vld [vmem:[%s3810 + $0xd0] sm:$0xff]
    %v3823 = vld [vmem:[%s3810 + $0xe0] sm:$0xff]
    %v3824 = vld [vmem:[%s3810 + $0xf0] sm:$0xff]
    %v3825 = vld [vmem:[%s3810 + $0x100] sm:$0xff]
    %v3826 = vld [vmem:[%s3810 + $0x110] sm:$0xff]
    %v3827 = vpack.c.bf16 %v3812, %v3811
    %v3828 = vpack.c.bf16 %v3814, %v3813
    %v3829 = vpack.c.bf16 %v3816, %v3815
    %v3830 = vpack.c.bf16 %v3818, %v3817
    %v3831 = vpack.c.bf16 %v3820, %v3819
    %v3832 = vpack.c.bf16 %v3822, %v3821
    %v3833 = vpack.c.bf16 %v3824, %v3823
    %v3834 = vpack.c.bf16 %v3826, %v3825
    %s3835 = scalar_lea.vmem [#allocation9], 384
    %v3836 = vld [vmem:[%s3835] sm:$0xf]
    %v3837 = vld [vmem:[%s3835 + $0x4] sm:$0xf]
    %v3838 = vld [vmem:[%s3835 + $0x8] sm:$0xf]
    %v3839 = vld [vmem:[%s3835 + $0xc] sm:$0xf]
    %v3840 = vld [vmem:[%s3835 + $0x10] sm:$0xf]
    %v3841 = vld [vmem:[%s3835 + $0x14] sm:$0xf]
    %v3842 = vld [vmem:[%s3835 + $0x18] sm:$0xf]
    %v3843 = vld [vmem:[%s3835 + $0x1c] sm:$0xf]
    %v3844 = vld [vmem:[%s3835 + $0x20] sm:$0xf]
    %v3845 = vld [vmem:[%s3835 + $0x24] sm:$0xf]
    %v3846 = vld [vmem:[%s3835 + $0x28] sm:$0xf]
    %v3847 = vld [vmem:[%s3835 + $0x2c] sm:$0xf]
    %v3848 = vld [vmem:[%s3835 + $0x30] sm:$0xf]
    %v3849 = vld [vmem:[%s3835 + $0x34] sm:$0xf]
    %v3850 = vld [vmem:[%s3835 + $0x38] sm:$0xf]
    %v3851 = vld [vmem:[%s3835 + $0x3c] sm:$0xf]
    %v3868 = vunpack.c.l.b16 %v3836
    %v3869 = vunpack.c.l.b16 %v3837
    %v3870 = vunpack.c.l.b16 %v3838
    %v3871 = vunpack.c.l.b16 %v3839
    %v3872 = vunpack.c.l.b16 %v3840
    %v3873 = vunpack.c.l.b16 %v3841
    %v3874 = vunpack.c.l.b16 %v3842
    %v3875 = vunpack.c.l.b16 %v3843
    %v3876 = vunpack.c.l.b16 %v3844
    %v3877 = vunpack.c.l.b16 %v3845
    %v3878 = vunpack.c.l.b16 %v3846
    %v3879 = vunpack.c.l.b16 %v3847
    %v3880 = vunpack.c.l.b16 %v3848
    %v3881 = vunpack.c.l.b16 %v3849
    %v3882 = vunpack.c.l.b16 %v3850
    %v3883 = vunpack.c.l.b16 %v3851
    %v3884 = vpack.c.b16 %v3869, %v3868
    %v3885 = vpack.c.b16 %v3871, %v3870
    %v3886 = vpack.c.b16 %v3873, %v3872
    %v3887 = vpack.c.b16 %v3875, %v3874
    %v3888 = vpack.c.b16 %v3877, %v3876
    %v3889 = vpack.c.b16 %v3879, %v3878
    %v3890 = vpack.c.b16 %v3881, %v3880
    %v3891 = vpack.c.b16 %v3883, %v3882
    %3900 = vmatprep.subr.bf16.mxu0 0
    %3901 = vmatpush1.bf16.msra.mxu0 %v3884
    %3902 = vmatprep.subr.bf16.mxu0 0
    %3903 = vmatpush1.bf16.msra.mxu0 %v3885
    %3904 = vmatprep.subr.bf16.mxu0 0
    %3905 = vmatpush1.bf16.msra.mxu0 %v3886
    %3906 = vmatprep.subr.bf16.mxu0 0
    %3907 = vmatpush1.bf16.msra.mxu0 %v3887
    %3908 = vmatprep.subr.bf16.mxu0 0
    %3909 = vmatpush1.bf16.msra.mxu0 %v3888
    %3910 = vmatprep.subr.bf16.mxu0 0
    %3911 = vmatpush1.bf16.msra.mxu0 %v3889
    %3912 = vmatprep.subr.bf16.mxu0 0
    %3913 = vmatpush1.bf16.msra.mxu0 %v3890
    %3914 = vmatprep.subr.bf16.mxu0 0
    %3915 = vmatpush1.bf16.msra.mxu0 %v3891
    %3916 = vmatprep.subr.bf16.mxu0 0
    %3917 = vmatpush1.bf16.msra.mxu0 0
    %3918 = vmatprep.subr.bf16.mxu0 0
    %3919 = vmatpush1.bf16.msra.mxu0 0
    %3920 = vmatprep.subr.bf16.mxu0 0
    %3921 = vmatpush1.bf16.msra.mxu0 0
    %3922 = vmatprep.subr.bf16.mxu0 0
    %3923 = vmatpush1.bf16.msra.mxu0 0
    %3924 = vmatprep.subr.bf16.mxu0 0
    %3925 = vmatpush1.bf16.msra.mxu0 0
    %3926 = vmatprep.subr.bf16.mxu0 0
    %3927 = vmatpush1.bf16.msra.mxu0 0
    %3928 = vmatprep.subr.bf16.mxu0 0
    %3929 = vmatpush1.bf16.msra.mxu0 0
    %3930 = vmatprep.subr.bf16.mxu0 0
    %3931 = vmatpush1.bf16.msra.mxu0 0
    %3932 = vmatprep.mubr.bf16.mxu0 0
    %3933 = vmatmul.mubr.bf16.gmra.mrb[0].mxu0 %v3827
    %v3934 = vpop.f32.mrb[0].mxu0
    %v3935 = vadd.f32 0.0, %v3934
    %v3936 = vpop.f32.mrb[0].mxu0
    %v3937 = vpop.f32.mrb[0].mxu0
    %v3938 = vadd.f32 0.0, %v3937
    %v3939 = vpop.f32.mrb[0].mxu0
    %3940 = vmatprep.mubr.bf16.mxu0 0
    %3941 = vmatmul.mubr.bf16.gmra.mrb[0].mxu0 %v3828
    %v3942 = vpop.f32.mrb[0].mxu0
    %v3943 = vadd.f32 0.0, %v3942
    %v3944 = vpop.f32.mrb[0].mxu0
    %v3945 = vpop.f32.mrb[0].mxu0
    %v3946 = vadd.f32 0.0, %v3945
    %v3947 = vpop.f32.mrb[0].mxu0
    %3948 = vmatprep.mubr.bf16.mxu0 0
    %3949 = vmatmul.mubr.bf16.gmra.mrb[0].mxu0 %v3829
    %v3950 = vpop.f32.mrb[0].mxu0
    %v3951 = vadd.f32 0.0, %v3950
    %v3952 = vpop.f32.mrb[0].mxu0
    %v3953 = vpop.f32.mrb[0].mxu0
    %v3954 = vadd.f32 0.0, %v3953
    %v3955 = vpop.f32.mrb[0].mxu0
    %3956 = vmatprep.mubr.bf16.mxu0 0
    %3957 = vmatmul.mubr.bf16.gmra.mrb[0].mxu0 %v3830
    %v3958 = vpop.f32.mrb[0].mxu0
    %v3959 = vadd.f32 0.0, %v3958
    %v3960 = vpop.f32.mrb[0].mxu0
    %v3961 = vpop.f32.mrb[0].mxu0
    %v3962 = vadd.f32 0.0, %v3961
    %v3963 = vpop.f32.mrb[0].mxu0
    %3964 = vmatprep.mubr.bf16.mxu0 0
    %3965 = vmatmul.mubr.bf16.gmra.mrb[0].mxu0 %v3831
    %v3966 = vpop.f32.mrb[0].mxu0
    %v3967 = vadd.f32 0.0, %v3966
    %v3968 = vpop.f32.mrb[0].mxu0
    %v3969 = vpop.f32.mrb[0].mxu0
    %v3970 = vadd.f32 0.0, %v3969
    %v3971 = vpop.f32.mrb[0].mxu0
    %3972 = vmatprep.mubr.bf16.mxu0 0
    %3973 = vmatmul.mubr.bf16.gmra.mrb[0].mxu0 %v3832
    %v3974 = vpop.f32.mrb[0].mxu0
    %v3975 = vadd.f32 0.0, %v3974
    %v3976 = vpop.f32.mrb[0].mxu0
    %v3977 = vpop.f32.mrb[0].mxu0
    %v3978 = vadd.f32 0.0, %v3977
    %v3979 = vpop.f32.mrb[0].mxu0
    %3980 = vmatprep.mubr.bf16.mxu0 0
    %3981 = vmatmul.mubr.bf16.gmra.mrb[0].mxu0 %v3833
    %v3982 = vpop.f32.mrb[0].mxu0
    %v3983 = vadd.f32 0.0, %v3982
    %v3984 = vpop.f32.mrb[0].mxu0
    %v3985 = vpop.f32.mrb[0].mxu0
    %v3986 = vadd.f32 0.0, %v3985
    %v3987 = vpop.f32.mrb[0].mxu0
    %3988 = vmatprep.mubr.bf16.mxu0 0
    %3989 = vmatmul.mubr.bf16.gmra.mrb[0].mxu0 %v3834
    %v3990 = vpop.f32.mrb[0].mxu0
    %v3991 = vadd.f32 0.0, %v3990
    %v3992 = vpop.f32.mrb[0].mxu0
    %v3993 = vpop.f32.mrb[0].mxu0
    %v3994 = vadd.f32 0.0, %v3993
    %v3995 = vpop.f32.mrb[0].mxu0
    %3996 = vdwg.mxu0
    %v3997 = vadd.f32 %v3794, %v3935
    %v3998 = vadd.f32 %v3795, %v3938
    %v3999 = vadd.f32 %v3796, %v3943
    %v4000 = vadd.f32 %v3797, %v3946
    %v4001 = vadd.f32 %v3798, %v3951
    %v4002 = vadd.f32 %v3799, %v3954
    %v4003 = vadd.f32 %v3800, %v3959
    %v4004 = vadd.f32 %v3801, %v3962
    %v4005 = vadd.f32 %v3802, %v3967
    %v4006 = vadd.f32 %v3803, %v3970
    %v4007 = vadd.f32 %v3804, %v3975
    %v4008 = vadd.f32 %v3805, %v3978
    %v4009 = vadd.f32 %v3806, %v3983
    %v4010 = vadd.f32 %v3807, %v3986
    %v4011 = vadd.f32 %v3808, %v3991
    %v4012 = vadd.f32 %v3809, %v3994
    %v4013 = vld [vmem:[%s3810 + $0x1] sm:$0xff]
    %v4014 = vld [vmem:[%s3810 + $0x11] sm:$0xff]
    %v4015 = vld [vmem:[%s3810 + $0x21] sm:$0xff]
    %v4016 = vld [vmem:[%s3810 + $0x31] sm:$0xff]
    %v4017 = vld [vmem:[%s3810 + $0x41] sm:$0xff]
    %v4018 = vld [vmem:[%s3810 + $0x51] sm:$0xff]
    %v4019 = vld [vmem:[%s3810 + $0x61] sm:$0xff]
    %v4020 = vld [vmem:[%s3810 + $0x71] sm:$0xff]
    %v4021 = vld [vmem:[%s3810 + $0xa1] sm:$0xff]
    %v4022 = vld [vmem:[%s3810 + $0xb1] sm:$0xff]
    %v4023 = vld [vmem:[%s3810 + $0xc1] sm:$0xff]
    %v4024 = vld [vmem:[%s3810 + $0xd1] sm:$0xff]
    %v4025 = vld [vmem:[%s3810 + $0xe1] sm:$0xff]
    %v4026 = vld [vmem:[%s3810 + $0xf1] sm:$0xff]
    %v4027 = vld [vmem:[%s3810 + $0x101] sm:$0xff]
    %v4028 = vld [vmem:[%s3810 + $0x111] sm:$0xff]
    %v4029 = vpack.c.bf16 %v4014, %v4013
    %v4030 = vpack.c.bf16 %v4016, %v4015
    %v4031 = vpack.c.bf16 %v4018, %v4017
    %v4032 = vpack.c.bf16 %v4020, %v4019
    %v4033 = vpack.c.bf16 %v4022, %v4021
    %v4034 = vpack.c.bf16 %v4024, %v4023
    %v4035 = vpack.c.bf16 %v4026, %v4025
    %v4036 = vpack.c.bf16 %v4028, %v4027
    %s4037 = scalar_lea.vmem [#allocation9], 448
    %v4038 = vld [vmem:[%s4037] sm:$0xf]
    %v4039 = vld [vmem:[%s4037 + $0x4] sm:$0xf]
    %v4040 = vld [vmem:[%s4037 + $0x8] sm:$0xf]
    %v4041 = vld [vmem:[%s4037 + $0xc] sm:$0xf]
    %v4042 = vld [vmem:[%s4037 + $0x10] sm:$0xf]
    %v4043 = vld [vmem:[%s4037 + $0x14] sm:$0xf]
    %v4044 = vld [vmem:[%s4037 + $0x18] sm:$0xf]
    %v4045 = vld [vmem:[%s4037 + $0x1c] sm:$0xf]
    %v4046 = vld [vmem:[%s4037 + $0x20] sm:$0xf]
    %v4047 = vld [vmem:[%s4037 + $0x24] sm:$0xf]
    %v4048 = vld [vmem:[%s4037 + $0x28] sm:$0xf]
    %v4049 = vld [vmem:[%s4037 + $0x2c] sm:$0xf]
    %v4050 = vld [vmem:[%s4037 + $0x30] sm:$0xf]
    %v4051 = vld [vmem:[%s4037 + $0x34] sm:$0xf]
    %v4052 = vld [vmem:[%s4037 + $0x38] sm:$0xf]
    %v4053 = vld [vmem:[%s4037 + $0x3c] sm:$0xf]
    %v4070 = vunpack.c.l.b16 %v4038
    %v4071 = vunpack.c.l.b16 %v4039
    %v4072 = vunpack.c.l.b16 %v4040
    %v4073 = vunpack.c.l.b16 %v4041
    %v4074 = vunpack.c.l.b16 %v4042
    %v4075 = vunpack.c.l.b16 %v4043
    %v4076 = vunpack.c.l.b16 %v4044
    %v4077 = vunpack.c.l.b16 %v4045
    %v4078 = vunpack.c.l.b16 %v4046
    %v4079 = vunpack.c.l.b16 %v4047
    %v4080 = vunpack.c.l.b16 %v4048
    %v4081 = vunpack.c.l.b16 %v4049
    %v4082 = vunpack.c.l.b16 %v4050
    %v4083 = vunpack.c.l.b16 %v4051
    %v4084 = vunpack.c.l.b16 %v4052
    %v4085 = vunpack.c.l.b16 %v4053
    %v4086 = vpack.c.b16 %v4071, %v4070
    %v4087 = vpack.c.b16 %v4073, %v4072
    %v4088 = vpack.c.b16 %v4075, %v4074
    %v4089 = vpack.c.b16 %v4077, %v4076
    %v4090 = vpack.c.b16 %v4079, %v4078
    %v4091 = vpack.c.b16 %v4081, %v4080
    %v4092 = vpack.c.b16 %v4083, %v4082
    %v4093 = vpack.c.b16 %v4085, %v4084
    %4102 = vmatprep.subr.bf16.mxu0 0
    %4103 = vmatpush1.bf16.msra.mxu0 %v4086
    %4104 = vmatprep.subr.bf16.mxu0 0
    %4105 = vmatpush1.bf16.msra.mxu0 %v4087
    %4106 = vmatprep.subr.bf16.mxu0 0
    %4107 = vmatpush1.bf16.msra.mxu0 %v4088
    %4108 = vmatprep.subr.bf16.mxu0 0
    %4109 = vmatpush1.bf16.msra.mxu0 %v4089
    %4110 = vmatprep.subr.bf16.mxu0 0
    %4111 = vmatpush1.bf16.msra.mxu0 %v4090
    %4112 = vmatprep.subr.bf16.mxu0 0
    %4113 = vmatpush1.bf16.msra.mxu0 %v4091
    %4114 = vmatprep.subr.bf16.mxu0 0
    %4115 = vmatpush1.bf16.msra.mxu0 %v4092
    %4116 = vmatprep.subr.bf16.mxu0 0
    %4117 = vmatpush1.bf16.msra.mxu0 %v4093
    %4118 = vmatprep.subr.bf16.mxu0 0
    %4119 = vmatpush1.bf16.msra.mxu0 0
    %4120 = vmatprep.subr.bf16.mxu0 0
    %4121 = vmatpush1.bf16.msra.mxu0 0
    %4122 = vmatprep.subr.bf16.mxu0 0
    %4123 = vmatpush1.bf16.msra.mxu0 0
    %4124 = vmatprep.subr.bf16.mxu0 0
    %4125 = vmatpush1.bf16.msra.mxu0 0
    %4126 = vmatprep.subr.bf16.mxu0 0
    %4127 = vmatpush1.bf16.msra.mxu0 0
    %4128 = vmatprep.subr.bf16.mxu0 0
    %4129 = vmatpush1.bf16.msra.mxu0 0
    %4130 = vmatprep.subr.bf16.mxu0 0
    %4131 = vmatpush1.bf16.msra.mxu0 0
    %4132 = vmatprep.subr.bf16.mxu0 0
    %4133 = vmatpush1.bf16.msra.mxu0 0
    %4134 = vmatprep.mubr.bf16.mxu0 0
    %4135 = vmatmul.mubr.bf16.gmra.mrb[0].mxu0 %v4029
    %v4136 = vpop.f32.mrb[0].mxu0
    %v4137 = vadd.f32 0.0, %v4136
    %v4138 = vpop.f32.mrb[0].mxu0
    %v4139 = vpop.f32.mrb[0].mxu0
    %v4140 = vadd.f32 0.0, %v4139
    %v4141 = vpop.f32.mrb[0].mxu0
    %4142 = vmatprep.mubr.bf16.mxu0 0
    %4143 = vmatmul.mubr.bf16.gmra.mrb[0].mxu0 %v4030
    %v4144 = vpop.f32.mrb[0].mxu0
    %v4145 = vadd.f32 0.0, %v4144
    %v4146 = vpop.f32.mrb[0].mxu0
    %v4147 = vpop.f32.mrb[0].mxu0
    %v4148 = vadd.f32 0.0, %v4147
    %v4149 = vpop.f32.mrb[0].mxu0
    %4150 = vmatprep.mubr.bf16.mxu0 0
    %4151 = vmatmul.mubr.bf16.gmra.mrb[0].mxu0 %v4031
    %v4152 = vpop.f32.mrb[0].mxu0
    %v4153 = vadd.f32 0.0, %v4152
    %v4154 = vpop.f32.mrb[0].mxu0
    %v4155 = vpop.f32.mrb[0].mxu0
    %v4156 = vadd.f32 0.0, %v4155
    %v4157 = vpop.f32.mrb[0].mxu0
    %4158 = vmatprep.mubr.bf16.mxu0 0
    %4159 = vmatmul.mubr.bf16.gmra.mrb[0].mxu0 %v4032
    %v4160 = vpop.f32.mrb[0].mxu0
    %v4161 = vadd.f32 0.0, %v4160
    %v4162 = vpop.f32.mrb[0].mxu0
    %v4163 = vpop.f32.mrb[0].mxu0
    %v4164 = vadd.f32 0.0, %v4163
    %v4165 = vpop.f32.mrb[0].mxu0
    %4166 = vmatprep.mubr.bf16.mxu0 0
    %4167 = vmatmul.mubr.bf16.gmra.mrb[0].mxu0 %v4033
    %v4168 = vpop.f32.mrb[0].mxu0
    %v4169 = vadd.f32 0.0, %v4168
    %v4170 = vpop.f32.mrb[0].mxu0
    %v4171 = vpop.f32.mrb[0].mxu0
    %v4172 = vadd.f32 0.0, %v4171
    %v4173 = vpop.f32.mrb[0].mxu0
    %4174 = vmatprep.mubr.bf16.mxu0 0
    %4175 = vmatmul.mubr.bf16.gmra.mrb[0].mxu0 %v4034
    %v4176 = vpop.f32.mrb[0].mxu0
    %v4177 = vadd.f32 0.0, %v4176
    %v4178 = vpop.f32.mrb[0].mxu0
    %v4179 = vpop.f32.mrb[0].mxu0
    %v4180 = vadd.f32 0.0, %v4179
    %v4181 = vpop.f32.mrb[0].mxu0
    %4182 = vmatprep.mubr.bf16.mxu0 0
    %4183 = vmatmul.mubr.bf16.gmra.mrb[0].mxu0 %v4035
    %v4184 = vpop.f32.mrb[0].mxu0
    %v4185 = vadd.f32 0.0, %v4184
    %v4186 = vpop.f32.mrb[0].mxu0
    %v4187 = vpop.f32.mrb[0].mxu0
    %v4188 = vadd.f32 0.0, %v4187
    %v4189 = vpop.f32.mrb[0].mxu0
    %4190 = vmatprep.mubr.bf16.mxu0 0
    %4191 = vmatmul.mubr.bf16.gmra.mrb[0].mxu0 %v4036
    %v4192 = vpop.f32.mrb[0].mxu0
    %v4193 = vadd.f32 0.0, %v4192
    %v4194 = vpop.f32.mrb[0].mxu0
    %v4195 = vpop.f32.mrb[0].mxu0
    %v4196 = vadd.f32 0.0, %v4195
    %v4197 = vpop.f32.mrb[0].mxu0
    %4198 = vdwg.mxu0
    %v4199 = vadd.f32 %v3997, %v4137
    %v4200 = vadd.f32 %v3998, %v4140
    %v4201 = vadd.f32 %v3999, %v4145
    %v4202 = vadd.f32 %v4000, %v4148
    %v4203 = vadd.f32 %v4001, %v4153
    %v4204 = vadd.f32 %v4002, %v4156
    %v4205 = vadd.f32 %v4003, %v4161
    %v4206 = vadd.f32 %v4004, %v4164
    %v4207 = vadd.f32 %v4005, %v4169
    %v4208 = vadd.f32 %v4006, %v4172
    %v4209 = vadd.f32 %v4007, %v4177
    %v4210 = vadd.f32 %v4008, %v4180
    %v4211 = vadd.f32 %v4009, %v4185
    %v4212 = vadd.f32 %v4010, %v4188
    %v4213 = vadd.f32 %v4011, %v4193
    %v4214 = vadd.f32 %v4012, %v4196
    %v4215 = vld [vmem:[%s3810 + $0x2] sm:$0xff]
    %v4216 = vld [vmem:[%s3810 + $0x12] sm:$0xff]
    %v4217 = vld [vmem:[%s3810 + $0x22] sm:$0xff]
    %v4218 = vld [vmem:[%s3810 + $0x32] sm:$0xff]
    %v4219 = vld [vmem:[%s3810 + $0x42] sm:$0xff]
    %v4220 = vld [vmem:[%s3810 + $0x52] sm:$0xff]
    %v4221 = vld [vmem:[%s3810 + $0x62] sm:$0xff]
    %v4222 = vld [vmem:[%s3810 + $0x72] sm:$0xff]
    %v4223 = vld [vmem:[%s3810 + $0xa2] sm:$0xff]
    %v4224 = vld [vmem:[%s3810 + $0xb2] sm:$0xff]
    %v4225 = vld [vmem:[%s3810 + $0xc2] sm:$0xff]
    %v4226 = vld [vmem:[%s3810 + $0xd2] sm:$0xff]
    %v4227 = vld [vmem:[%s3810 + $0xe2] sm:$0xff]
    %v4228 = vld [vmem:[%s3810 + $0xf2] sm:$0xff]
    %v4229 = vld [vmem:[%s3810 + $0x102] sm:$0xff]
    %v4230 = vld [vmem:[%s3810 + $0x112] sm:$0xff]
    %v4231 = vpack.c.bf16 %v4216, %v4215
    %v4232 = vpack.c.bf16 %v4218, %v4217
    %v4233 = vpack.c.bf16 %v4220, %v4219
    %v4234 = vpack.c.bf16 %v4222, %v4221
    %v4235 = vpack.c.bf16 %v4224, %v4223
    %v4236 = vpack.c.bf16 %v4226, %v4225
    %v4237 = vpack.c.bf16 %v4228, %v4227
    %v4238 = vpack.c.bf16 %v4230, %v4229
    %s4239 = scalar_lea.vmem [#allocation9], 512
    %v4240 = vld [vmem:[%s4239] sm:$0xf]
    %v4241 = vld [vmem:[%s4239 + $0x4] sm:$0xf]
    %v4242 = vld [vmem:[%s4239 + $0x8] sm:$0xf]
    %v4243 = vld [vmem:[%s4239 + $0xc] sm:$0xf]
    %v4244 = vld [vmem:[%s4239 + $0x10] sm:$0xf]
    %v4245 = vld [vmem:[%s4239 + $0x14] sm:$0xf]
    %v4246 = vld [vmem:[%s4239 + $0x18] sm:$0xf]
    %v4247 = vld [vmem:[%s4239 + $0x1c] sm:$0xf]
    %v4248 = vld [vmem:[%s4239 + $0x20] sm:$0xf]
    %v4249 = vld [vmem:[%s4239 + $0x24] sm:$0xf]
    %v4250 = vld [vmem:[%s4239 + $0x28] sm:$0xf]
    %v4251 = vld [vmem:[%s4239 + $0x2c] sm:$0xf]
    %v4252 = vld [vmem:[%s4239 + $0x30] sm:$0xf]
    %v4253 = vld [vmem:[%s4239 + $0x34] sm:$0xf]
    %v4254 = vld [vmem:[%s4239 + $0x38] sm:$0xf]
    %v4255 = vld [vmem:[%s4239 + $0x3c] sm:$0xf]
    %v4272 = vunpack.c.l.b16 %v4240
    %v4273 = vunpack.c.l.b16 %v4241
    %v4274 = vunpack.c.l.b16 %v4242
    %v4275 = vunpack.c.l.b16 %v4243
    %v4276 = vunpack.c.l.b16 %v4244
    %v4277 = vunpack.c.l.b16 %v4245
    %v4278 = vunpack.c.l.b16 %v4246
    %v4279 = vunpack.c.l.b16 %v4247
    %v4280 = vunpack.c.l.b16 %v4248
    %v4281 = vunpack.c.l.b16 %v4249
    %v4282 = vunpack.c.l.b16 %v4250
    %v4283 = vunpack.c.l.b16 %v4251
    %v4284 = vunpack.c.l.b16 %v4252
    %v4285 = vunpack.c.l.b16 %v4253
    %v4286 = vunpack.c.l.b16 %v4254
    %v4287 = vunpack.c.l.b16 %v4255
    %v4288 = vpack.c.b16 %v4273, %v4272
    %v4289 = vpack.c.b16 %v4275, %v4274
    %v4290 = vpack.c.b16 %v4277, %v4276
    %v4291 = vpack.c.b16 %v4279, %v4278
    %v4292 = vpack.c.b16 %v4281, %v4280
    %v4293 = vpack.c.b16 %v4283, %v4282
    %v4294 = vpack.c.b16 %v4285, %v4284
    %v4295 = vpack.c.b16 %v4287, %v4286
    %4304 = vmatprep.subr.bf16.mxu0 0
    %4305 = vmatpush1.bf16.msra.mxu0 %v4288
    %4306 = vmatprep.subr.bf16.mxu0 0
    %4307 = vmatpush1.bf16.msra.mxu0 %v4289
    %4308 = vmatprep.subr.bf16.mxu0 0
    %4309 = vmatpush1.bf16.msra.mxu0 %v4290
    %4310 = vmatprep.subr.bf16.mxu0 0
    %4311 = vmatpush1.bf16.msra.mxu0 %v4291
    %4312 = vmatprep.subr.bf16.mxu0 0
    %4313 = vmatpush1.bf16.msra.mxu0 %v4292
    %4314 = vmatprep.subr.bf16.mxu0 0
    %4315 = vmatpush1.bf16.msra.mxu0 %v4293
    %4316 = vmatprep.subr.bf16.mxu0 0
    %4317 = vmatpush1.bf16.msra.mxu0 %v4294
    %4318 = vmatprep.subr.bf16.mxu0 0
    %4319 = vmatpush1.bf16.msra.mxu0 %v4295
    %4320 = vmatprep.subr.bf16.mxu0 0
    %4321 = vmatpush1.bf16.msra.mxu0 0
    %4322 = vmatprep.subr.bf16.mxu0 0
    %4323 = vmatpush1.bf16.msra.mxu0 0
    %4324 = vmatprep.subr.bf16.mxu0 0
    %4325 = vmatpush1.bf16.msra.mxu0 0
    %4326 = vmatprep.subr.bf16.mxu0 0
    %4327 = vmatpush1.bf16.msra.mxu0 0
    %4328 = vmatprep.subr.bf16.mxu0 0
    %4329 = vmatpush1.bf16.msra.mxu0 0
    %4330 = vmatprep.subr.bf16.mxu0 0
    %4331 = vmatpush1.bf16.msra.mxu0 0
    %4332 = vmatprep.subr.bf16.mxu0 0
    %4333 = vmatpush1.bf16.msra.mxu0 0
    %4334 = vmatprep.subr.bf16.mxu0 0
    %4335 = vmatpush1.bf16.msra.mxu0 0
    %4336 = vmatprep.mubr.bf16.mxu0 0
    %4337 = vmatmul.mubr.bf16.gmra.mrb[0].mxu0 %v4231
    %v4338 = vpop.f32.mrb[0].mxu0
    %v4339 = vadd.f32 0.0, %v4338
    %v4340 = vpop.f32.mrb[0].mxu0
    %v4341 = vpop.f32.mrb[0].mxu0
    %v4342 = vadd.f32 0.0, %v4341
    %v4343 = vpop.f32.mrb[0].mxu0
    %4344 = vmatprep.mubr.bf16.mxu0 0
    %4345 = vmatmul.mubr.bf16.gmra.mrb[0].mxu0 %v4232
    %v4346 = vpop.f32.mrb[0].mxu0
    %v4347 = vadd.f32 0.0, %v4346
    %v4348 = vpop.f32.mrb[0].mxu0
    %v4349 = vpop.f32.mrb[0].mxu0
    %v4350 = vadd.f32 0.0, %v4349
    %v4351 = vpop.f32.mrb[0].mxu0
    %4352 = vmatprep.mubr.bf16.mxu0 0
    %4353 = vmatmul.mubr.bf16.gmra.mrb[0].mxu0 %v4233
    %v4354 = vpop.f32.mrb[0].mxu0
    %v4355 = vadd.f32 0.0, %v4354
    %v4356 = vpop.f32.mrb[0].mxu0
    %v4357 = vpop.f32.mrb[0].mxu0
    %v4358 = vadd.f32 0.0, %v4357
    %v4359 = vpop.f32.mrb[0].mxu0
    %4360 = vmatprep.mubr.bf16.mxu0 0
    %4361 = vmatmul.mubr.bf16.gmra.mrb[0].mxu0 %v4234
    %v4362 = vpop.f32.mrb[0].mxu0
    %v4363 = vadd.f32 0.0, %v4362
    %v4364 = vpop.f32.mrb[0].mxu0
    %v4365 = vpop.f32.mrb[0].mxu0
    %v4366 = vadd.f32 0.0, %v4365
    %v4367 = vpop.f32.mrb[0].mxu0
    %4368 = vmatprep.mubr.bf16.mxu0 0
    %4369 = vmatmul.mubr.bf16.gmra.mrb[0].mxu0 %v4235
    %v4370 = vpop.f32.mrb[0].mxu0
    %v4371 = vadd.f32 0.0, %v4370
    %v4372 = vpop.f32.mrb[0].mxu0
    %v4373 = vpop.f32.mrb[0].mxu0
    %v4374 = vadd.f32 0.0, %v4373
    %v4375 = vpop.f32.mrb[0].mxu0
    %4376 = vmatprep.mubr.bf16.mxu0 0
    %4377 = vmatmul.mubr.bf16.gmra.mrb[0].mxu0 %v4236
    %v4378 = vpop.f32.mrb[0].mxu0
    %v4379 = vadd.f32 0.0, %v4378
    %v4380 = vpop.f32.mrb[0].mxu0
    %v4381 = vpop.f32.mrb[0].mxu0
    %v4382 = vadd.f32 0.0, %v4381
    %v4383 = vpop.f32.mrb[0].mxu0
    %4384 = vmatprep.mubr.bf16.mxu0 0
    %4385 = vmatmul.mubr.bf16.gmra.mrb[0].mxu0 %v4237
    %v4386 = vpop.f32.mrb[0].mxu0
    %v4387 = vadd.f32 0.0, %v4386
    %v4388 = vpop.f32.mrb[0].mxu0
    %v4389 = vpop.f32.mrb[0].mxu0
    %v4390 = vadd.f32 0.0, %v4389
    %v4391 = vpop.f32.mrb[0].mxu0
    %4392 = vmatprep.mubr.bf16.mxu0 0
    %4393 = vmatmul.mubr.bf16.gmra.mrb[0].mxu0 %v4238
    %v4394 = vpop.f32.mrb[0].mxu0
    %v4395 = vadd.f32 0.0, %v4394
    %v4396 = vpop.f32.mrb[0].mxu0
    %v4397 = vpop.f32.mrb[0].mxu0
    %v4398 = vadd.f32 0.0, %v4397
    %v4399 = vpop.f32.mrb[0].mxu0
    %4400 = vdwg.mxu0
    %v4401 = vadd.f32 %v4199, %v4339
    %v4402 = vadd.f32 %v4200, %v4342
    %v4403 = vadd.f32 %v4201, %v4347
    %v4404 = vadd.f32 %v4202, %v4350
    %v4405 = vadd.f32 %v4203, %v4355
    %v4406 = vadd.f32 %v4204, %v4358
    %v4407 = vadd.f32 %v4205, %v4363
    %v4408 = vadd.f32 %v4206, %v4366
    %v4409 = vadd.f32 %v4207, %v4371
    %v4410 = vadd.f32 %v4208, %v4374
    %v4411 = vadd.f32 %v4209, %v4379
    %v4412 = vadd.f32 %v4210, %v4382
    %v4413 = vadd.f32 %v4211, %v4387
    %v4414 = vadd.f32 %v4212, %v4390
    %v4415 = vadd.f32 %v4213, %v4395
    %v4416 = vadd.f32 %v4214, %v4398
    %4417 = vst [vmem:[#allocation12] sm:$0xff] %v4401
    %4418 = vst [vmem:[#allocation12 + $0x8] sm:$0xff] %v4402
    %4419 = vst [vmem:[#allocation12 + $0x10] sm:$0xff] %v4403
    %4420 = vst [vmem:[#allocation12 + $0x18] sm:$0xff] %v4404
    %4421 = vst [vmem:[#allocation12 + $0x20] sm:$0xff] %v4405
    %4422 = vst [vmem:[#allocation12 + $0x28] sm:$0xff] %v4406
    %4423 = vst [vmem:[#allocation12 + $0x30] sm:$0xff] %v4407
    %4424 = vst [vmem:[#allocation12 + $0x38] sm:$0xff] %v4408
    %4425 = vst [vmem:[#allocation12 + $0x40] sm:$0xff] %v4409
    %4426 = vst [vmem:[#allocation12 + $0x48] sm:$0xff] %v4410
    %4427 = vst [vmem:[#allocation12 + $0x50] sm:$0xff] %v4411
    %4428 = vst [vmem:[#allocation12 + $0x58] sm:$0xff] %v4412
    %4429 = vst [vmem:[#allocation12 + $0x60] sm:$0xff] %v4413
    %4430 = vst [vmem:[#allocation12 + $0x68] sm:$0xff] %v4414
    %4431 = vst [vmem:[#allocation12 + $0x70] sm:$0xff] %v4415
    %4432 = vst [vmem:[#allocation12 + $0x78] sm:$0xff] %v4416
    // Predicated region
    $region50: #{tpu_custom_call.1} parent=1 // pred_check
      _
    $region51: #{tpu_custom_call.1} parent=1 // pred_check_branch
      %4434 = sbr.rel (0) target = $region53
    $region52: #{tpu_custom_call.1} parent=1 // pred_region
      %s4436 = ssub.s32 2048, 2048
      %4437 = vsyncadd [#allocation6], %s4436
      %s4438 = sshll.u32 [#allocation12], 4
      %s4439 = int_to_ptr.vmem [resolvable:$true] %s4438
      %4444 = dma.vmem_to_hbm [thread:$0]  %s4439, 2048, %s8, [#allocation6], 128, 128, 8
    $region53: #{tpu_custom_call.1} parent=1 // pred_fallthru
      _
    // Predicated region
    $region54: #{tpu_custom_call.1} parent=1 // pred_check
      _
    $region55: #{tpu_custom_call.1} parent=1 // pred_check_branch
      %4446 = sbr.rel (0) target = $region57
    $region56: #{tpu_custom_call.1} parent=1 // pred_region
      %4447 = dma.done [#allocation6], 2048
    $region57: #{tpu_custom_call.1} parent=1 // pred_fallthru
      _
    %4448 = vsyncpa [#allocation5], 1
    %4449 = vsyncpa [#allocation8], 1
    %4450 = vsyncpa [#allocation11], 1
    %4451 = vsyncpa [#allocation6], 1

</llo_original>
